<compile_context>
chip_gen: v7x
topology: tpu7x:2x2x1
jax: 0.10.0
libtpu: 0.0.40
codegen_flags: <defaults>
</compile_context>

<pallas_src>
import functools
import math

import jax
import jax.numpy as jnp
from jax import lax
from jax.experimental import pallas as pl
from jax.experimental.pallas import tpu as pltpu


# ----------------------------------------------------------------------------
# Pallas kernel: B batch images per grid step.
# ----------------------------------------------------------------------------
def _deform_conv_kernel(x_ref, crd_ref, w_ref, o_ref, *, H, W, P, K, dg, cgp, B):
    # x_ref  : (B, dg*cgp*H, W)   input, rows ordered (group, channel, h)
    # crd_ref: (B, 2*dg, K*P)     sample coords; rows [h-coords per g, w-coords per g]
    #                             column index r = k*P + p, k = kh*kW + kw, p = ho*Wout + wo
    # w_ref  : (Cout, dg*K*cgp)   weight, column order (g, kh, kw, c_padded)
    # o_ref  : (B, Cout, P)       output (already NCHW-flat)
    KP = K * P

    # Row-index iotas for the two (small) separable gather matrices.
    h_iota = lax.broadcasted_iota(jnp.int32, (H, KP), 0)
    w_iota = lax.broadcasted_iota(jnp.int32, (W, KP), 0)

    w_mat = w_ref[...]                                   # (Cout, dg*K*cgp)

    rhs_blocks = []
    for b in range(B):
        x_b = x_ref[b]                                   # (dg*cgp*H, W)
        crd = crd_ref[b]                                 # (2*dg, KP)

        col_rows = []
        for g in range(dg):
            h_im = crd[g:g + 1, :]                       # (1, KP)
            w_im = crd[dg + g:dg + g + 1, :]             # (1, KP)

            # DCN-v1 zero-padding rule.
            in_range = ((h_im > -1.0) & (w_im > -1.0) &
                        (h_im < float(H)) & (w_im < float(W)))

            h0f = jnp.floor(h_im)
            w0f = jnp.floor(w_im)
            lh = h_im - h0f
            lw = w_im - w0f
            h0 = h0f.astype(jnp.int32)
            w0 = w0f.astype(jnp.int32)

            # Per-corner coefficients on (1, KP) rows, hoisted out of the
            # big-tile expressions.  Fold the in_range mask into the H factor
            # only; per-corner validity is implicit (out-of-image corner
            # indices never match the iota rows).
            ch0 = jnp.where(in_range, 1.0 - lh, 0.0)
            ch1 = jnp.where(in_range, lh, 0.0)
            cw0 = 1.0 - lw
            cw1 = lw

            # Separable gather matrices: 2 nonzeros per column each.
            gh = (jnp.where(h_iota == h0, ch0, 0.0) +
                  jnp.where(h_iota == h0 + 1, ch1, 0.0))         # (H, KP)
            gw = (jnp.where(w_iota == w0, cw0, 0.0) +
                  jnp.where(w_iota == w0 + 1, cw1, 0.0))         # (W, KP)

            # Stage 1: contract over W on the MXU.
            x_g = x_b[g * cgp * H:(g + 1) * cgp * H, :]          # (cgp*H, W)
            t = jnp.dot(x_g, gw, preferred_element_type=jnp.float32)  # (cgp*H, KP)

            # Stage 2: contract over H (2 nonzeros/column) as a broadcast
            # multiply + sublane reduce.  (H multiple of 8 -> trivial reshape.)
            t3 = t.reshape(cgp, H, KP)
            val = jnp.sum(t3 * gh[None, :, :], axis=1)           # (cgp, KP)

            # Per-tap lane slices (aligned when P % 128 == 0).
            for k in range(K):
                col_rows.append(val[:, k * P:(k + 1) * P])       # (cgp, P)

        rhs_blocks.append(jnp.concatenate(col_rows, axis=0))     # (dg*K*cgp, P)

    rhs = rhs_blocks[0] if B == 1 else jnp.concatenate(rhs_blocks, axis=1)

    # The convolution itself: one matmul against the pre-flattened weight.
    out = jnp.dot(w_mat, rhs, preferred_element_type=jnp.float32)  # (Cout, B*P)
    for b in range(B):
        o_ref[b] = out[:, b * P:(b + 1) * P]


# ----------------------------------------------------------------------------
# Wrapper: layout prep (pure reshapes / zero-pads / fused base grid) + pallas_call.
# ----------------------------------------------------------------------------
def deform_conv(x, offset, weight, stride=(1, 1), padding=(0, 0),
                dilation=(1, 1), num_deformable_groups=1, batch_block=1):
    N, Cin, H, W = x.shape
    Cout, _, kH, kW = weight.shape
    sH, sW = stride
    pH, pW = padding
    dH, dW = dilation
    dg = num_deformable_groups
    cg = Cin // dg
    cgp = ((cg + 7) // 8) * 8                 # pad channels/group to sublane tile
    K = kH * kW
    Hout = (H + 2 * pH - dH * (kH - 1) - 1) // sH + 1
    Wout = (W + 2 * pW - dW * (kW - 1) - 1) // sW + 1
    P = Hout * Wout
    KP = K * P

    B = int(batch_block) if batch_block else 1
    if N % B != 0:
        B = 1

    # --- input: (N, dg*cgp*H, W), rows ordered (group, channel, h) -----------
    x_r = x.astype(jnp.float32).reshape(N, dg, cg, H, W)
    if cgp != cg:
        x_r = jnp.pad(x_r, ((0, 0), (0, 0), (0, cgp - cg), (0, 0), (0, 0)))
    x_r = x_r.reshape(N, dg * cgp * H, W)

    # --- sample coordinates: static grid folded into the offsets -------------
    # offset channels are (group, tap, [dy, dx]) like the CUDA op.
    off = offset.astype(jnp.float32).reshape(N, dg, K, 2, Hout, Wout)
    oy = off[:, :, :, 0].reshape(N, dg, K, P)
    ox = off[:, :, :, 1].reshape(N, dg, K, P)

    kh_i = (jnp.arange(K) // kW).astype(jnp.float32)
    kw_i = (jnp.arange(K) % kW).astype(jnp.float32)
    ho_i = (jnp.arange(P) // Wout).astype(jnp.float32)
    wo_i = (jnp.arange(P) % Wout).astype(jnp.float32)
    hb = kh_i[:, None] * dH - pH + ho_i[None, :] * sH            # (K, P)
    wb = kw_i[:, None] * dW - pW + wo_i[None, :] * sW            # (K, P)

    coords = jnp.concatenate(
        [(oy + hb[None, None]).reshape(N, dg, KP),
         (ox + wb[None, None]).reshape(N, dg, KP)], axis=1)      # (N, 2*dg, KP)

    # --- weight: (Cout, dg*K*cgp), column order (g, kh, kw, c_padded) --------
    w5 = weight.astype(jnp.float32).reshape(Cout, dg, cg, kH, kW)
    if cgp != cg:
        w5 = jnp.pad(w5, ((0, 0), (0, 0), (0, cgp - cg), (0, 0), (0, 0)))
    w_mat = w5.transpose(0, 1, 3, 4, 2).reshape(Cout, dg * K * cgp)

    kernel = functools.partial(_deform_conv_kernel, H=H, W=W, P=P, K=K,
                               dg=dg, cgp=cgp, B=B)

    out = pl.pallas_call(
        kernel,
        out_shape=jax.ShapeDtypeStruct((N, Cout, P), jnp.float32),
        grid=(N // B,),
        in_specs=[
            pl.BlockSpec((B, dg * cgp * H, W), lambda n: (n, 0, 0)),
            pl.BlockSpec((B, 2 * dg, KP), lambda n: (n, 0, 0)),
            pl.BlockSpec((Cout, dg * K * cgp), lambda n: (0, 0)),
        ],
        out_specs=pl.BlockSpec((B, Cout, P), lambda n: (n, 0, 0)),
        compiler_params=pltpu.CompilerParams(
            dimension_semantics=("parallel",),
            vmem_limit_bytes=32 * 1024 * 1024),
    )(x_r, coords, w_mat)

    # (N, Cout, Hout*Wout) is already NCHW-flat; just reshape.
    return out.reshape(N, Cout, Hout, Wout)


# ----------------------------------------------------------------------------
# Pure-JAX reference (same DCN-v1 semantics) for the correctness check.
# ----------------------------------------------------------------------------
def _bilinear_gather(x_flat, h_im, w_im, H, W):
    # x_flat: (N, C, H*W);  h_im/w_im: (N, Hout, Wout) float sample coords.
    N, C, _ = x_flat.shape
    in_range = (h_im > -1.0) & (w_im > -1.0) & (h_im < H) & (w_im < W)
    h0f = jnp.floor(h_im)
    w0f = jnp.floor(w_im)
    lh = h_im - h0f
    lw = w_im - w0f
    h0 = h0f.astype(jnp.int32)
    w0 = w0f.astype(jnp.int32)
    h1 = h0 + 1
    w1 = w0 + 1

    def corner(hc, wc, wt):
        valid = in_range & (hc >= 0) & (hc <= H - 1) & (wc >= 0) & (wc <= W - 1)
        idx = jnp.clip(hc, 0, H - 1) * W + jnp.clip(wc, 0, W - 1)
        Ho, Wo = idx.shape[1], idx.shape[2]
        idx_b = jnp.broadcast_to(idx.reshape(N, 1, Ho * Wo), (N, C, Ho * Wo))
        v = jnp.take_along_axis(x_flat, idx_b, axis=2).reshape(N, C, Ho, Wo)
        return v * jnp.where(valid, wt, 0.0)[:, None, :, :]

    return (corner(h0, w0, (1 - lh) * (1 - lw)) + corner(h0, w1, (1 - lh) * lw)
            + corner(h1, w0, lh * (1 - lw)) + corner(h1, w1, lh * lw))


def deform_conv_ref(x, offset, weight, stride, padding, dilation, dg):
    N, Cin, H, W = x.shape
    Cout, _, kH, kW = weight.shape
    sH, sW = stride
    pH, pW = padding
    dH, dW = dilation
    Hout = (H + 2 * pH - dH * (kH - 1) - 1) // sH + 1
    Wout = (W + 2 * pW - dW * (kW - 1) - 1) // sW + 1
    K = kH * kW
    cg = Cin // dg

    x = x.astype(jnp.float32)
    x_flat = x.reshape(N, Cin, H * W)
    off = offset.reshape(N, dg, K, 2, Hout, Wout).astype(jnp.float32)

    h_base = jnp.arange(Hout, dtype=jnp.float32) * sH - pH
    w_base = jnp.arange(Wout, dtype=jnp.float32) * sW - pW

    out = jnp.zeros((N, Cout, Hout, Wout), jnp.float32)
    for g in range(dg):
        xg = x_flat[:, g * cg:(g + 1) * cg]
        for i in range(kH):
            for j in range(kW):
                k = i * kW + j
                h_im = h_base[None, :, None] + i * dH + off[:, g, k, 0]
                w_im = w_base[None, None, :] + j * dW + off[:, g, k, 1]
                val = _bilinear_gather(xg, h_im, w_im, H, W)   # (N, cg, Hout, Wout)
                wk = weight[:, g * cg:(g + 1) * cg, i, j].astype(jnp.float32)
                out = out + jnp.einsum("nchw,oc->nohw", val, wk,
                                       precision=lax.Precision.HIGHEST)
    return out


if __name__ == "__main__":
    key = jax.random.PRNGKey(0)
    k_x, k_o, k_w = jax.random.split(key, 3)

    # DeformConv(in_channels=4, out_channels=8, kernel_size=3, stride=1,
    #            padding=1, dilation=1, num_deformable_groups=1)
    N, Cin, H, W = 2, 4, 16, 16
    Cout, kH, kW = 8, 3, 3
    stride, padding, dilation = (1, 1), (1, 1), (1, 1)
    dg = 1
    K = kH * kW
    Hout = (H + 2 * padding[0] - dilation[0] * (kH - 1) - 1) // stride[0] + 1
    Wout = (W + 2 * padding[1] - dilation[1] * (kW - 1) - 1) // stride[1] + 1

    x = jax.random.normal(k_x, (N, Cin, H, W), jnp.float32)
    offset = 1.5 * jax.random.normal(k_o, (N, 2 * dg * K, Hout, Wout), jnp.float32)
    stdv = 1.0 / math.sqrt(Cin * kH * kW)               # module's reset_parameters
    weight = jax.random.uniform(k_w, (Cout, Cin, kH, kW), jnp.float32,
                                minval=-stdv, maxval=stdv)

    fwd = jax.jit(deform_conv, static_argnames=("stride", "padding", "dilation",
                                                "num_deformable_groups",
                                                "batch_block"))
    out = jax.block_until_ready(fwd(x, offset, weight, stride=stride,
                                    padding=padding, dilation=dilation,
                                    num_deformable_groups=dg))

    out_ref = deform_conv_ref(x, offset, weight, stride, padding, dilation, dg)

    assert out.shape == (N, Cout, Hout, Wout)
    max_err = float(jnp.max(jnp.abs(out - out_ref)))
    assert jnp.allclose(out, out_ref, atol=5e-3, rtol=5e-3), f"max abs err {max_err}"
    print("KERNEL_OK")
</pallas_src>

<mosaic_0001>
module attributes {stable_mosaic.version = 11 : i64} {
  func.func @_deform_conv_kernel(%arg0: i32, %arg1: memref<1x128x16xf32, #tpu.memory_space<vmem>>, %arg2: memref<1x2x2304xf32, #tpu.memory_space<vmem>>, %arg3: memref<8x72xf32, #tpu.memory_space<vmem>>, %arg4: memref<1x8x256xf32, #tpu.memory_space<vmem>>) attributes {dimension_semantics = [#tpu.dimension_semantics<parallel>], iteration_bounds = array<i64: 2>, scalar_prefetch = 0 : i64, scratch_operands = 0 : i64, tpu.core_type = #tpu.core_type<tc>, window_params = [{transform_indices = @transform_0, window_bounds = array<i64: 1, 128, 16>}, {transform_indices = @transform_1, window_bounds = array<i64: 1, 2, 2304>}, {pipeline_mode = #tpu.pipeline_mode<synchronous>, transform_indices = @transform_2, window_bounds = array<i64: 8, 72>}, {transform_indices = @transform_3, window_bounds = array<i64: 1, 8, 256>}]} {
    %0 = tpu.iota {dimensions = array<i32: 0>} : vector<16x2304xi32>
    %1 = tpu.iota {dimensions = array<i32: 0>} : vector<16x2304xi32>
    %c0 = arith.constant 0 : index
    %c0_0 = arith.constant 0 : index
    %2 = vector.load %arg3[%c0, %c0_0] : memref<8x72xf32, #tpu.memory_space<vmem>>, vector<8x72xf32>
    %c0_1 = arith.constant 0 : index
    %c0_2 = arith.constant 0 : index
    %c0_3 = arith.constant 0 : index
    %3 = vector.load %arg1[%c0_1, %c0_2, %c0_3] : memref<1x128x16xf32, #tpu.memory_space<vmem>>, vector<1x128x16xf32>
    %4 = vector.shape_cast %3 : vector<1x128x16xf32> to vector<128x16xf32>
    %c0_4 = arith.constant 0 : index
    %c0_5 = arith.constant 0 : index
    %c0_6 = arith.constant 0 : index
    %5 = vector.load %arg2[%c0_4, %c0_5, %c0_6] : memref<1x2x2304xf32, #tpu.memory_space<vmem>>, vector<1x2x2304xf32>
    %6 = vector.shape_cast %5 : vector<1x2x2304xf32> to vector<2x2304xf32>
    %7 = vector.extract_strided_slice %6 {offsets = [0, 0], sizes = [1, 2304], strides = [1, 1]} : vector<2x2304xf32> to vector<1x2304xf32>
    %8 = vector.extract_strided_slice %6 {offsets = [1, 0], sizes = [1, 2304], strides = [1, 1]} : vector<2x2304xf32> to vector<1x2304xf32>
    %cst = arith.constant -1.000000e+00 : f32
    %9 = vector.broadcast %cst : f32 to vector<1x2304xf32>
    %10 = arith.cmpf ogt, %7, %9 : vector<1x2304xf32>
    %cst_7 = arith.constant -1.000000e+00 : f32
    %11 = vector.broadcast %cst_7 : f32 to vector<1x2304xf32>
    %12 = arith.cmpf ogt, %8, %11 : vector<1x2304xf32>
    %13 = arith.andi %10, %12 : vector<1x2304xi1>
    %cst_8 = arith.constant 1.600000e+01 : f32
    %14 = vector.broadcast %cst_8 : f32 to vector<1x2304xf32>
    %15 = arith.cmpf olt, %7, %14 : vector<1x2304xf32>
    %16 = arith.andi %13, %15 : vector<1x2304xi1>
    %cst_9 = arith.constant 1.600000e+01 : f32
    %17 = vector.broadcast %cst_9 : f32 to vector<1x2304xf32>
    %18 = arith.cmpf olt, %8, %17 : vector<1x2304xf32>
    %19 = arith.andi %16, %18 : vector<1x2304xi1>
    %20 = math.floor %7 : vector<1x2304xf32>
    %21 = math.floor %8 : vector<1x2304xf32>
    %22 = arith.subf %7, %20 : vector<1x2304xf32>
    %23 = arith.subf %8, %21 : vector<1x2304xf32>
    %24 = arith.fptosi %20 : vector<1x2304xf32> to vector<1x2304xi32>
    %25 = arith.fptosi %21 : vector<1x2304xf32> to vector<1x2304xi32>
    %cst_10 = arith.constant 1.000000e+00 : f32
    %26 = vector.broadcast %cst_10 : f32 to vector<1x2304xf32>
    %27 = arith.subf %26, %22 : vector<1x2304xf32>
    %cst_11 = arith.constant 0.000000e+00 : f32
    %28 = vector.broadcast %cst_11 : f32 to vector<1x2304xf32>
    %29 = arith.select %19, %27, %28 : vector<1x2304xi1>, vector<1x2304xf32>
    %cst_12 = arith.constant 0.000000e+00 : f32
    %30 = vector.broadcast %cst_12 : f32 to vector<1x2304xf32>
    %31 = arith.select %19, %22, %30 : vector<1x2304xi1>, vector<1x2304xf32>
    %cst_13 = arith.constant 1.000000e+00 : f32
    %32 = vector.broadcast %cst_13 : f32 to vector<1x2304xf32>
    %33 = arith.subf %32, %23 : vector<1x2304xf32>
    %34 = vector.broadcast %24 : vector<1x2304xi32> to vector<16x2304xi32>
    %35 = arith.cmpi eq, %0, %34 : vector<16x2304xi32>
    %cst_14 = arith.constant 0.000000e+00 : f32
    %36 = vector.shape_cast %29 : vector<1x2304xf32> to vector<1x2304xf32>
    %37 = vector.broadcast %36 : vector<1x2304xf32> to vector<16x2304xf32>
    %38 = vector.broadcast %cst_14 : f32 to vector<16x2304xf32>
    %39 = arith.select %35, %37, %38 : vector<16x2304xi1>, vector<16x2304xf32>
    %c1_i32 = arith.constant 1 : i32
    %40 = vector.broadcast %c1_i32 : i32 to vector<1x2304xi32>
    %41 = arith.addi %24, %40 : vector<1x2304xi32>
    %42 = vector.broadcast %41 : vector<1x2304xi32> to vector<16x2304xi32>
    %43 = arith.cmpi eq, %0, %42 : vector<16x2304xi32>
    %cst_15 = arith.constant 0.000000e+00 : f32
    %44 = vector.shape_cast %31 : vector<1x2304xf32> to vector<1x2304xf32>
    %45 = vector.broadcast %44 : vector<1x2304xf32> to vector<16x2304xf32>
    %46 = vector.broadcast %cst_15 : f32 to vector<16x2304xf32>
    %47 = arith.select %43, %45, %46 : vector<16x2304xi1>, vector<16x2304xf32>
    %48 = arith.addf %39, %47 : vector<16x2304xf32>
    %49 = vector.broadcast %25 : vector<1x2304xi32> to vector<16x2304xi32>
    %50 = arith.cmpi eq, %1, %49 : vector<16x2304xi32>
    %cst_16 = arith.constant 0.000000e+00 : f32
    %51 = vector.shape_cast %33 : vector<1x2304xf32> to vector<1x2304xf32>
    %52 = vector.broadcast %51 : vector<1x2304xf32> to vector<16x2304xf32>
    %53 = vector.broadcast %cst_16 : f32 to vector<16x2304xf32>
    %54 = arith.select %50, %52, %53 : vector<16x2304xi1>, vector<16x2304xf32>
    %c1_i32_17 = arith.constant 1 : i32
    %55 = vector.broadcast %c1_i32_17 : i32 to vector<1x2304xi32>
    %56 = arith.addi %25, %55 : vector<1x2304xi32>
    %57 = vector.broadcast %56 : vector<1x2304xi32> to vector<16x2304xi32>
    %58 = arith.cmpi eq, %1, %57 : vector<16x2304xi32>
    %cst_18 = arith.constant 0.000000e+00 : f32
    %59 = vector.shape_cast %23 : vector<1x2304xf32> to vector<1x2304xf32>
    %60 = vector.broadcast %59 : vector<1x2304xf32> to vector<16x2304xf32>
    %61 = vector.broadcast %cst_18 : f32 to vector<16x2304xf32>
    %62 = arith.select %58, %60, %61 : vector<16x2304xi1>, vector<16x2304xf32>
    %63 = arith.addf %54, %62 : vector<16x2304xf32>
    %cst_19 = arith.constant dense<0.000000e+00> : vector<128x2304xf32>
    %64 = tpu.matmul %4, %63, %cst_19 {dimension_numbers = #tpu.dot_dimension_numbers<[1], [0], [0], [1], [0, 0, 1, 1], [], []>} : vector<128x16xf32>, vector<16x2304xf32>, vector<128x2304xf32> -> vector<128x2304xf32>
    %65 = vector.shape_cast %64 : vector<128x2304xf32> to vector<8x16x2304xf32>
    %66 = vector.shape_cast %48 : vector<16x2304xf32> to vector<1x16x2304xf32>
    %67 = vector.broadcast %66 : vector<1x16x2304xf32> to vector<8x16x2304xf32>
    %68 = arith.mulf %65, %67 : vector<8x16x2304xf32>
    %cst_20 = arith.constant dense<0.000000e+00> : vector<8x2304xf32>
    %69 = vector.multi_reduction <add>, %68, %cst_20 [1] : vector<8x16x2304xf32> to vector<8x2304xf32>
    %70 = vector.extract_strided_slice %69 {offsets = [0, 0], sizes = [8, 256], strides = [1, 1]} : vector<8x2304xf32> to vector<8x256xf32>
    %71 = vector.extract_strided_slice %69 {offsets = [0, 256], sizes = [8, 256], strides = [1, 1]} : vector<8x2304xf32> to vector<8x256xf32>
    %72 = vector.extract_strided_slice %69 {offsets = [0, 512], sizes = [8, 256], strides = [1, 1]} : vector<8x2304xf32> to vector<8x256xf32>
    %73 = vector.extract_strided_slice %69 {offsets = [0, 768], sizes = [8, 256], strides = [1, 1]} : vector<8x2304xf32> to vector<8x256xf32>
    %74 = vector.extract_strided_slice %69 {offsets = [0, 1024], sizes = [8, 256], strides = [1, 1]} : vector<8x2304xf32> to vector<8x256xf32>
    %75 = vector.extract_strided_slice %69 {offsets = [0, 1280], sizes = [8, 256], strides = [1, 1]} : vector<8x2304xf32> to vector<8x256xf32>
    %76 = vector.extract_strided_slice %69 {offsets = [0, 1536], sizes = [8, 256], strides = [1, 1]} : vector<8x2304xf32> to vector<8x256xf32>
    %77 = vector.extract_strided_slice %69 {offsets = [0, 1792], sizes = [8, 256], strides = [1, 1]} : vector<8x2304xf32> to vector<8x256xf32>
    %78 = vector.extract_strided_slice %69 {offsets = [0, 2048], sizes = [8, 256], strides = [1, 1]} : vector<8x2304xf32> to vector<8x256xf32>
    %79 = tpu.concatenate %70, %71, %72, %73, %74, %75, %76, %77, %78 in 0 : vector<8x256xf32>, vector<8x256xf32>, vector<8x256xf32>, vector<8x256xf32>, vector<8x256xf32>, vector<8x256xf32>, vector<8x256xf32>, vector<8x256xf32>, vector<8x256xf32> -> vector<72x256xf32>
    %cst_21 = arith.constant dense<0.000000e+00> : vector<8x256xf32>
    %80 = tpu.matmul %2, %79, %cst_21 {dimension_numbers = #tpu.dot_dimension_numbers<[1], [0], [0], [1], [0, 0, 1, 1], [], []>} : vector<8x72xf32>, vector<72x256xf32>, vector<8x256xf32> -> vector<8x256xf32>
    %c0_22 = arith.constant 0 : index
    %c0_23 = arith.constant 0 : index
    %c0_24 = arith.constant 0 : index
    %81 = vector.load %arg4[%c0_22, %c0_23, %c0_24] : memref<1x8x256xf32, #tpu.memory_space<vmem>>, vector<1x8x256xf32>
    %82 = vector.shape_cast %81 : vector<1x8x256xf32> to vector<8x256xf32>
    %83 = vector.shape_cast %80 : vector<8x256xf32> to vector<1x8x256xf32>
    tpu.vector_store %arg4[%c0_22, %c0_23, %c0_24], %83 {strides = array<i32>} : memref<1x8x256xf32, #tpu.memory_space<vmem>>, vector<1x8x256xf32>,
    return
  }
  func.func @transform_0(%arg0: i32) -> (i32, i32, i32) {
    %c0_i32 = arith.constant 0 : i32
    %c0_i32_0 = arith.constant 0 : i32
    %c0_i32_1 = arith.constant 0 : i32
    return %arg0, %c0_i32, %c0_i32_0 : i32, i32, i32
  }
  func.func @transform_1(%arg0: i32) -> (i32, i32, i32) {
    %c0_i32 = arith.constant 0 : i32
    %c0_i32_0 = arith.constant 0 : i32
    %c0_i32_1 = arith.constant 0 : i32
    return %arg0, %c0_i32, %c0_i32_0 : i32, i32, i32
  }
  func.func @transform_2(%arg0: i32) -> (i32, i32) {
    %c0_i32 = arith.constant 0 : i32
    %c0_i32_0 = arith.constant 0 : i32
    %c0_i32_1 = arith.constant 0 : i32
    return %c0_i32, %c0_i32_0 : i32, i32
  }
  func.func @transform_3(%arg0: i32) -> (i32, i32, i32) {
    %c0_i32 = arith.constant 0 : i32
    %c0_i32_0 = arith.constant 0 : i32
    %c0_i32_1 = arith.constant 0 : i32
    return %arg0, %c0_i32, %c0_i32_0 : i32, i32, i32
  }
}

</mosaic_0001>

<llo_original>
// kernel: deform_conv.1
$region0: #{deform_conv.1}
  #allocation0 [shape = 'u32[]', space=smem, size = 0x4, offset = 0x4, fixed_abs, tag = 'smem constant byte address 0x4 - core index']
  #allocation1 [shape = 'u32[144,128]{1,0:T(1,128)}', space=vmem, size = 0x12000, scoped, tag = 'internal scratch']
  %s0 = inlined_call_operand.vmem [shape: f32[2,128,16], index: 0, kind: input, shape index: {}]
  %s1 = inlined_call_operand.vmem [shape: f32[2,2,2304], index: 1, kind: input, shape index: {}]
  %s2 = inlined_call_operand.vmem [shape: f32[8,72], index: 2, kind: input, shape index: {}]
  %s3 = inlined_call_operand.vmem [shape: f32[2,8,256], index: 3, kind: output, shape index: {}]
  %s4 = sld [smem:[#allocation0]]
  $region45: #{deform_conv.1} parent=0
    _
  %s6 = ssub.s32 1, %s4
  %s7 = scalar_select 0, %s6, %s4
  loop: start=0, step=1, limit=4
  $region2: #{deform_conv.1} parent=0 // loop_pre_header
    _
  $region3: #{deform_conv.1} parent=0 // loop_header
    %s9 = sphi 0, %s13
    %p10 = scmp.ge.s32.totalorder %s9, 4
    %s19 = sphi 0, %s21
    %s22 = sphi 0, %s19
    %s23 = sphi 0, %s22
    %s39 = sphi 0, %s23
    %s45 = sphi 0, %s47
    %s48 = sphi 0, %s45
    %s49 = sphi 0, %s48
    %s65 = sphi 0, %s49
    %s69 = sphi 0, %s69
    %s71 = sphi 0, %s69
    %s72 = sphi 0, %s71
    %s86 = sphi 0, %s72
    %s92 = sphi 0, %s94
    %s95 = sphi 0, %s92
    %s96 = sphi 0, %s95
    %s112 = sphi 0, %s96
  $region4: #{deform_conv.1} parent=0 // loop_header_branch
    %12 = sbr.rel (%p10) target = $region8
  $region5: #{deform_conv.1} parent=0 // loop_body
    %s14 = ssub.s32 %s9, 1
    %s15 = ssub.s32 %s9, 2
    %s16 = sadd.s32 %s9, 1
    %s17 = ssub.s32 %s9, %s16
    %p18 = scmp.eq.s32.totalorder %s17, 0
    %s20 = sadd.s32 %s19, 1
    %s21 = scalar_select %p18, %s19, %s20
    %p24 = pneg %p18
    %p25 = scmp.eq.s32.totalorder %s9, 1
    %p26 = por %p24, %p25
    %p27 = scmp.ne.s32.totalorder %s19, %s22
    %p28 = scmp.eq.s32.totalorder %s9, 0
    %p29 = por %p27, %p28
    %p30 = scmp.ne.s32.totalorder %s19, %s22
    %p31 = scmp.eq.s32.totalorder %s14, 1
    %p32 = por %p30, %p31
    %p33 = scmp.ne.s32.totalorder %s22, %s23
    %p34 = scmp.eq.s32.totalorder %s14, 0
    %p35 = por %p33, %p34
    %p36 = scmp.ne.s32.totalorder %s22, %s23
    %p37 = scmp.eq.s32.totalorder %s15, 1
    %p38 = por %p36, %p37
    %p40 = scmp.ne.s32.totalorder %s23, %s39
    %p41 = scmp.eq.s32.totalorder %s15, 0
    %p42 = por %p40, %p41
    %s43 = ssub.s32 %s9, %s16
    %p44 = scmp.eq.s32.totalorder %s43, 0
    %s46 = sadd.s32 %s45, 1
    %s47 = scalar_select %p44, %s45, %s46
    %p50 = pneg %p44
    %p51 = scmp.eq.s32.totalorder %s9, 1
    %p52 = por %p50, %p51
    %p53 = scmp.ne.s32.totalorder %s45, %s48
    %p54 = scmp.eq.s32.totalorder %s9, 0
    %p55 = por %p53, %p54
    %p56 = scmp.ne.s32.totalorder %s45, %s48
    %p57 = scmp.eq.s32.totalorder %s14, 1
    %p58 = por %p56, %p57
    %p59 = scmp.ne.s32.totalorder %s48, %s49
    %p60 = scmp.eq.s32.totalorder %s14, 0
    %p61 = por %p59, %p60
    %p62 = scmp.ne.s32.totalorder %s48, %s49
    %p63 = scmp.eq.s32.totalorder %s15, 1
    %p64 = por %p62, %p63
    %p66 = scmp.ne.s32.totalorder %s49, %s65
    %p67 = scmp.eq.s32.totalorder %s15, 0
    %p68 = por %p66, %p67
    %s70 = sadd.s32 %s69, 1
    %p73 = scmp.eq.s32.totalorder %s9, 1
    %p74 = scmp.ne.s32.totalorder %s69, %s71
    %p75 = scmp.eq.s32.totalorder %s9, 0
    %p76 = por %p74, %p75
    %p77 = scmp.ne.s32.totalorder %s69, %s71
    %p78 = scmp.eq.s32.totalorder %s14, 1
    %p79 = por %p77, %p78
    %p80 = scmp.ne.s32.totalorder %s71, %s72
    %p81 = scmp.eq.s32.totalorder %s14, 0
    %p82 = por %p80, %p81
    %p83 = scmp.ne.s32.totalorder %s71, %s72
    %p84 = scmp.eq.s32.totalorder %s15, 1
    %p85 = por %p83, %p84
    %p87 = scmp.ne.s32.totalorder %s72, %s86
    %p88 = scmp.eq.s32.totalorder %s15, 0
    %p89 = por %p87, %p88
    %s90 = ssub.s32 %s9, %s16
    %p91 = scmp.eq.s32.totalorder %s90, 0
    %s93 = sadd.s32 %s92, 1
    %s94 = scalar_select %p91, %s92, %s93
    %p97 = pneg %p91
    %p98 = scmp.eq.s32.totalorder %s9, 1
    %p99 = por %p97, %p98
    %p100 = scmp.ne.s32.totalorder %s92, %s95
    %p101 = scmp.eq.s32.totalorder %s9, 0
    %p102 = por %p100, %p101
    %p103 = scmp.ne.s32.totalorder %s92, %s95
    %p104 = scmp.eq.s32.totalorder %s14, 1
    %p105 = por %p103, %p104
    %p106 = scmp.ne.s32.totalorder %s95, %s96
    %p107 = scmp.eq.s32.totalorder %s14, 0
    %p108 = por %p106, %p107
    %p109 = scmp.ne.s32.totalorder %s95, %s96
    %p110 = scmp.eq.s32.totalorder %s15, 1
    %p111 = por %p109, %p110
    %p113 = scmp.ne.s32.totalorder %s96, %s112
    %p114 = scmp.eq.s32.totalorder %s15, 0
    %p115 = por %p113, %p114
    %p116 = scmp.le.s32.totalorder 1, %s9
    %p117 = scmp.lt.s32.totalorder %s9, 3
    %p118 = pnand %p116, %p117
    %p119 = pneg %p118
    // Predicated region
    $region9: #{deform_conv.1} parent=5 // pred_check
      _
    $region10: #{deform_conv.1} parent=5 // pred_check_branch
      %121 = sbr.rel (%p118) target = $region12
    $region11: #{deform_conv.1} parent=5 // pred_region
      %s122 = ssub.s32 %s9, 1
      // Predicated region
      $region13: #{deform_conv.1} parent=11 // pred_check
        %p123 = pneg %p82
      $region14: #{deform_conv.1} parent=11 // pred_check_branch
        %125 = sbr.rel (%p123) target = $region16
      $region15: #{deform_conv.1} parent=11 // pred_region
        _
      $region16: #{deform_conv.1} parent=11 // pred_fallthru
        _
    $region12: #{deform_conv.1} parent=5 // pred_fallthru
      _
    %p126 = scmp.lt.s32.totalorder %s9, 2
    // Predicated region
    $region17: #{deform_conv.1} parent=5 // pred_check
      %p127 = pneg %p126
    $region18: #{deform_conv.1} parent=5 // pred_check_branch
      %129 = sbr.rel (%p127) target = $region20
    $region19: #{deform_conv.1} parent=5 // pred_region
      // Predicated region
      $region21: #{deform_conv.1} parent=19 // pred_check
        %p130 = pneg %p29
      $region22: #{deform_conv.1} parent=19 // pred_check_branch
        %132 = sbr.rel (%p130) target = $region24
      $region23: #{deform_conv.1} parent=19 // pred_region
        %p133 = scmp.lt.s32.totalorder %s9, 1
        %s134 = scalar_select %p133, %s9, 1
        %s135 = smul.addr %s134, 16
        %s136 = smul.addr %s135, 8
        %s137 = scalar_lea.vmem %s0, %s136
      $region24: #{deform_conv.1} parent=19 // pred_fallthru
        _
      // Predicated region
      $region25: #{deform_conv.1} parent=19 // pred_check
        %p138 = pneg %p55
      $region26: #{deform_conv.1} parent=19 // pred_check_branch
        %140 = sbr.rel (%p138) target = $region28
      $region27: #{deform_conv.1} parent=19 // pred_region
        %p141 = scmp.lt.s32.totalorder %s9, 1
        %s142 = scalar_select %p141, %s9, 1
        %s143 = smul.addr %s142, 18
        %s144 = smul.addr %s143, 2
        %s145 = scalar_lea.vmem %s1, %s144
      $region28: #{deform_conv.1} parent=19 // pred_fallthru
        _
    $region20: #{deform_conv.1} parent=5 // pred_fallthru
      _
    %p146 = scmp.le.s32.totalorder 1, %s9
    %p147 = scmp.lt.s32.totalorder %s9, 3
    %p148 = pnand %p146, %p147
    %p149 = pneg %p148
    // Predicated region
    $region29: #{deform_conv.1} parent=5 // pred_check
      _
    $region30: #{deform_conv.1} parent=5 // pred_check_branch
      %151 = sbr.rel (%p148) target = $region32
    $region31: #{deform_conv.1} parent=5 // pred_region
      %s152 = ssub.s32 %s9, 1
      %p153 = scmp.lt.s32.totalorder %s14, 1
      %s154 = scalar_select %p153, %s14, 1
      %s155 = smul.addr %s154, 16
      %s156 = smul.addr %s155, 8
      %s157 = scalar_lea.vmem %s0, %s156
      %p158 = pneg %p35
      %p159 = pneg %p32
      %p160 = scmp.lt.s32.totalorder %s14, 1
      %s161 = scalar_select %p160, %s14, 1
      %s162 = smul.addr %s161, 18
      %s163 = smul.addr %s162, 2
      %s164 = scalar_lea.vmem %s1, %s163
      %p165 = pneg %p61
      %p166 = pneg %p58
      %p167 = pneg %p82
      %p168 = pneg %p79
      %p169 = pneg %p108
      %p170 = pneg %p105
      %p171 = scmp.lt.s32.totalorder %s14, 1
      %s172 = scalar_select %p171, %s14, 1
      %s173 = smul.addr %s172, 2
      %s174 = smul.addr %s173, 8
      %s175 = scalar_lea.vmem %s3, %s174
      %p176 = scmp.lt.s32.totalorder %s14, 1
      %s177 = scalar_select %p176, %s14, 1
      %s178 = smul.addr %s177, 16
      %s179 = smul.addr %s178, 8
      %s180 = scalar_lea.vmem %s0, %s179
      %p181 = scmp.lt.s32.totalorder %s14, 1
      %s182 = scalar_select %p181, %s14, 1
      %s183 = smul.addr %s182, 18
      %s184 = smul.addr %s183, 2
      %s185 = scalar_lea.vmem %s1, %s184
      %p186 = scmp.lt.s32.totalorder %s14, 1
      %s187 = scalar_select %p186, %s14, 1
      %s188 = smul.addr %s187, 2
      %s189 = smul.addr %s188, 8
      %s190 = scalar_lea.vmem %s3, %s189
      %v191 = vlaneseq
      %v192 = vshrl.u32 %v191, 7
      %v193 = vadd.s32 %v192, 8
      %v194 = vld [vmem:[%s2] sm:$0xff]
      %v195 = vld [vmem:[%s180] sm:$0xff]
      %v196 = vld [vmem:[%s180 + $0x8] sm:$0xff]
      %v197 = vld [vmem:[%s180 + $0x10] sm:$0xff]
      %v198 = vld [vmem:[%s180 + $0x18] sm:$0xff]
      %v199 = vld [vmem:[%s180 + $0x20] sm:$0xff]
      %v200 = vld [vmem:[%s180 + $0x28] sm:$0xff]
      %v201 = vld [vmem:[%s180 + $0x30] sm:$0xff]
      %v202 = vld [vmem:[%s180 + $0x38] sm:$0xff]
      %v203 = vld [vmem:[%s180 + $0x40] sm:$0xff]
      %v204 = vld [vmem:[%s180 + $0x48] sm:$0xff]
      %v205 = vld [vmem:[%s180 + $0x50] sm:$0xff]
      %v206 = vld [vmem:[%s180 + $0x58] sm:$0xff]
      %v207 = vld [vmem:[%s180 + $0x60] sm:$0xff]
      %v208 = vld [vmem:[%s180 + $0x68] sm:$0xff]
      %v209 = vld [vmem:[%s180 + $0x70] sm:$0xff]
      %v210 = vld [vmem:[%s180 + $0x78] sm:$0xff]
      %v211 = vld [vmem:[%s185] sm:$0xff]
      %v212 = vld [vmem:[%s185 + $0x8] sm:$0xff]
      %v213 = vld [vmem:[%s185 + $0x10] sm:$0xff]
      %v214 = vld [vmem:[%s185 + $0x18] sm:$0xff]
      %v215 = vld [vmem:[%s185 + $0x20] sm:$0xf]
      %vm216 = vcmp.gt.f32.partialorder %v211, -1.0
      %vm217 = vcmp.gt.f32.partialorder %v212, -1.0
      %vm218 = vcmp.gt.f32.partialorder %v213, -1.0
      %vm219 = vcmp.gt.f32.partialorder %v214, -1.0
      %vm220 = vcmp.gt.f32.partialorder %v215, -1.0
      %v221 = vsel %vm216, 1, 0
      %v222 = vsel %vm217, 1, 0
      %v223 = vsel %vm218, 1, 0
      %v224 = vsel %vm219, 1, 0
      %v225 = vsel %vm220, 1, 0
      %v226 = vrot.slane %v221, 7
      %v227 = vrot.slane %v226, 2
      %v228 = vrot.slane %v222, 7
      %v229 = vrot.slane %v228, 2
      %v230 = vrot.slane %v223, 7
      %v231 = vrot.slane %v230, 2
      %v232 = vrot.slane %v224, 7
      %v233 = vrot.slane %v232, 2
      %v234 = vrot.slane %v225, 7
      %v235 = vrot.slane %v234, 2
      %vm236 = vcmp.ne.s32.totalorder %v227, 0
      %vm237 = vcmp.ne.s32.totalorder %v229, 0
      %vm238 = vcmp.ne.s32.totalorder %v231, 0
      %vm239 = vcmp.ne.s32.totalorder %v233, 0
      %vm240 = vcmp.ne.s32.totalorder %v235, 0
      %vm241 = vmand %vm216, %vm236
      %vm242 = vmand %vm217, %vm237
      %vm243 = vmand %vm218, %vm238
      %vm244 = vmand %vm219, %vm239
      %vm245 = vmand %vm220, %vm240
      %vm246 = vcmp.lt.f32.partialorder %v211, 16.0
      %vm247 = vcmp.lt.f32.partialorder %v212, 16.0
      %vm248 = vcmp.lt.f32.partialorder %v213, 16.0
      %vm249 = vcmp.lt.f32.partialorder %v214, 16.0
      %vm250 = vcmp.lt.f32.partialorder %v215, 16.0
      %vm251 = vmand %vm241, %vm246
      %vm252 = vmand %vm242, %vm247
      %vm253 = vmand %vm243, %vm248
      %vm254 = vmand %vm244, %vm249
      %vm255 = vmand %vm245, %vm250
      %v256 = vsel %vm246, 1, 0
      %v257 = vsel %vm247, 1, 0
      %v258 = vsel %vm248, 1, 0
      %v259 = vsel %vm249, 1, 0
      %v260 = vsel %vm250, 1, 0
      %v261 = vrot.slane %v256, 7
      %v262 = vrot.slane %v261, 2
      %v263 = vrot.slane %v257, 7
      %v264 = vrot.slane %v263, 2
      %v265 = vrot.slane %v258, 7
      %v266 = vrot.slane %v265, 2
      %v267 = vrot.slane %v259, 7
      %v268 = vrot.slane %v267, 2
      %v269 = vrot.slane %v260, 7
      %v270 = vrot.slane %v269, 2
      %vm271 = vcmp.ne.s32.totalorder %v262, 0
      %vm272 = vcmp.ne.s32.totalorder %v264, 0
      %vm273 = vcmp.ne.s32.totalorder %v266, 0
      %vm274 = vcmp.ne.s32.totalorder %v268, 0
      %vm275 = vcmp.ne.s32.totalorder %v270, 0
      %vm276 = vmand %vm251, %vm271
      %vm277 = vmand %vm252, %vm272
      %vm278 = vmand %vm253, %vm273
      %vm279 = vmand %vm254, %vm274
      %vm280 = vmand %vm255, %vm275
      %v281 = vfloor.f32 %v211
      %v282 = vfloor.f32 %v212
      %v283 = vfloor.f32 %v213
      %v284 = vfloor.f32 %v214
      %v285 = vfloor.f32 %v215
      %v286 = vsub.f32 %v211, %v281
      %v287 = vsub.f32 %v212, %v282
      %v288 = vsub.f32 %v213, %v283
      %v289 = vsub.f32 %v214, %v284
      %v290 = vsub.f32 %v215, %v285
      %v291 = vcvt.f32.s32.to.zero.pseudo %v281
      %v292 = vcvt.f32.s32.to.zero.pseudo %v282
      %v293 = vcvt.f32.s32.to.zero.pseudo %v283
      %v294 = vcvt.f32.s32.to.zero.pseudo %v284
      %v295 = vcvt.f32.s32.to.zero.pseudo %v285
      %v296 = vsub.f32 1.0, %v286
      %v297 = vsub.f32 1.0, %v287
      %v298 = vsub.f32 1.0, %v288
      %v299 = vsub.f32 1.0, %v289
      %v300 = vsub.f32 1.0, %v290
      %v301 = vsel %vm276, %v296, 0.0
      %v302 = vsel %vm277, %v297, 0.0
      %v303 = vsel %vm278, %v298, 0.0
      %v304 = vsel %vm279, %v299, 0.0
      %v305 = vsel %vm280, %v300, 0.0
      %v306 = vsel %vm276, %v286, 0.0
      %v307 = vsel %vm277, %v287, 0.0
      %v308 = vsel %vm278, %v288, 0.0
      %v309 = vsel %vm279, %v289, 0.0
      %v310 = vsel %vm280, %v290, 0.0
      %v311 = vlaneseq
      %v312 = vshrl.u32 %v311, 7
      %v313 = vsub.s32 0, %v312
      %v314 = vrot.slane %v291, %v313
      %v315 = vlaneseq
      %v316 = vshrl.u32 %v315, 7
      %v317 = vsub.s32 2, %v316
      %v318 = vrot.slane %v291, %v317
      %v319 = vlaneseq
      %v320 = vshrl.u32 %v319, 7
      %v321 = vsub.s32 4, %v320
      %v322 = vrot.slane %v291, %v321
      %v323 = vlaneseq
      %v324 = vshrl.u32 %v323, 7
      %v325 = vsub.s32 6, %v324
      %v326 = vrot.slane %v291, %v325
      %v327 = vlaneseq
      %v328 = vshrl.u32 %v327, 7
      %v329 = vsub.s32 0, %v328
      %v330 = vrot.slane %v292, %v329
      %v331 = vlaneseq
      %v332 = vshrl.u32 %v331, 7
      %v333 = vsub.s32 2, %v332
      %v334 = vrot.slane %v292, %v333
      %v335 = vlaneseq
      %v336 = vshrl.u32 %v335, 7
      %v337 = vsub.s32 4, %v336
      %v338 = vrot.slane %v292, %v337
      %v339 = vlaneseq
      %v340 = vshrl.u32 %v339, 7
      %v341 = vsub.s32 6, %v340
      %v342 = vrot.slane %v292, %v341
      %v343 = vlaneseq
      %v344 = vshrl.u32 %v343, 7
      %v345 = vsub.s32 0, %v344
      %v346 = vrot.slane %v293, %v345
      %v347 = vlaneseq
      %v348 = vshrl.u32 %v347, 7
      %v349 = vsub.s32 2, %v348
      %v350 = vrot.slane %v293, %v349
      %v351 = vlaneseq
      %v352 = vshrl.u32 %v351, 7
      %v353 = vsub.s32 4, %v352
      %v354 = vrot.slane %v293, %v353
      %v355 = vlaneseq
      %v356 = vshrl.u32 %v355, 7
      %v357 = vsub.s32 6, %v356
      %v358 = vrot.slane %v293, %v357
      %v359 = vlaneseq
      %v360 = vshrl.u32 %v359, 7
      %v361 = vsub.s32 0, %v360
      %v362 = vrot.slane %v294, %v361
      %v363 = vlaneseq
      %v364 = vshrl.u32 %v363, 7
      %v365 = vsub.s32 2, %v364
      %v366 = vrot.slane %v294, %v365
      %v367 = vlaneseq
      %v368 = vshrl.u32 %v367, 7
      %v369 = vsub.s32 4, %v368
      %v370 = vrot.slane %v294, %v369
      %v371 = vlaneseq
      %v372 = vshrl.u32 %v371, 7
      %v373 = vsub.s32 6, %v372
      %v374 = vrot.slane %v294, %v373
      %v375 = vlaneseq
      %v376 = vshrl.u32 %v375, 7
      %v377 = vsub.s32 0, %v376
      %v378 = vrot.slane %v295, %v377
      %v379 = vlaneseq
      %v380 = vshrl.u32 %v379, 7
      %v381 = vsub.s32 2, %v380
      %v382 = vrot.slane %v295, %v381
      %v383 = vlaneseq
      %v384 = vshrl.u32 %v383, 7
      %v385 = vsub.s32 0, %v384
      %v386 = vrot.slane %v314, %v385
      %v387 = vlaneseq
      %v388 = vshrl.u32 %v387, 7
      %v389 = vsub.s32 0, %v388
      %v390 = vrot.slane %v318, %v389
      %v391 = vlaneseq
      %v392 = vshrl.u32 %v391, 7
      %v393 = vsub.s32 0, %v392
      %v394 = vrot.slane %v322, %v393
      %v395 = vlaneseq
      %v396 = vshrl.u32 %v395, 7
      %v397 = vsub.s32 0, %v396
      %v398 = vrot.slane %v326, %v397
      %v399 = vlaneseq
      %v400 = vshrl.u32 %v399, 7
      %v401 = vsub.s32 0, %v400
      %v402 = vrot.slane %v330, %v401
      %v403 = vlaneseq
      %v404 = vshrl.u32 %v403, 7
      %v405 = vsub.s32 0, %v404
      %v406 = vrot.slane %v334, %v405
      %v407 = vlaneseq
      %v408 = vshrl.u32 %v407, 7
      %v409 = vsub.s32 0, %v408
      %v410 = vrot.slane %v338, %v409
      %v411 = vlaneseq
      %v412 = vshrl.u32 %v411, 7
      %v413 = vsub.s32 0, %v412
      %v414 = vrot.slane %v342, %v413
      %v415 = vlaneseq
      %v416 = vshrl.u32 %v415, 7
      %v417 = vsub.s32 0, %v416
      %v418 = vrot.slane %v346, %v417
      %v419 = vlaneseq
      %v420 = vshrl.u32 %v419, 7
      %v421 = vsub.s32 0, %v420
      %v422 = vrot.slane %v350, %v421
      %v423 = vlaneseq
      %v424 = vshrl.u32 %v423, 7
      %v425 = vsub.s32 0, %v424
      %v426 = vrot.slane %v354, %v425
      %v427 = vlaneseq
      %v428 = vshrl.u32 %v427, 7
      %v429 = vsub.s32 0, %v428
      %v430 = vrot.slane %v358, %v429
      %v431 = vlaneseq
      %v432 = vshrl.u32 %v431, 7
      %v433 = vsub.s32 0, %v432
      %v434 = vrot.slane %v362, %v433
      %v435 = vlaneseq
      %v436 = vshrl.u32 %v435, 7
      %v437 = vsub.s32 0, %v436
      %v438 = vrot.slane %v366, %v437
      %v439 = vlaneseq
      %v440 = vshrl.u32 %v439, 7
      %v441 = vsub.s32 0, %v440
      %v442 = vrot.slane %v370, %v441
      %v443 = vlaneseq
      %v444 = vshrl.u32 %v443, 7
      %v445 = vsub.s32 0, %v444
      %v446 = vrot.slane %v374, %v445
      %v447 = vlaneseq
      %v448 = vshrl.u32 %v447, 7
      %v449 = vsub.s32 0, %v448
      %v450 = vrot.slane %v378, %v449
      %v451 = vlaneseq
      %v452 = vshrl.u32 %v451, 7
      %v453 = vsub.s32 0, %v452
      %v454 = vrot.slane %v382, %v453
      %vm455 = vcmp.eq.s32.totalorder %v192, %v386
      %vm456 = vcmp.eq.s32.totalorder %v192, %v390
      %vm457 = vcmp.eq.s32.totalorder %v192, %v394
      %vm458 = vcmp.eq.s32.totalorder %v192, %v398
      %vm459 = vcmp.eq.s32.totalorder %v192, %v402
      %vm460 = vcmp.eq.s32.totalorder %v192, %v406
      %vm461 = vcmp.eq.s32.totalorder %v192, %v410
      %vm462 = vcmp.eq.s32.totalorder %v192, %v414
      %vm463 = vcmp.eq.s32.totalorder %v192, %v418
      %vm464 = vcmp.eq.s32.totalorder %v192, %v422
      %vm465 = vcmp.eq.s32.totalorder %v192, %v426
      %vm466 = vcmp.eq.s32.totalorder %v192, %v430
      %vm467 = vcmp.eq.s32.totalorder %v192, %v434
      %vm468 = vcmp.eq.s32.totalorder %v192, %v438
      %vm469 = vcmp.eq.s32.totalorder %v192, %v442
      %vm470 = vcmp.eq.s32.totalorder %v192, %v446
      %vm471 = vcmp.eq.s32.totalorder %v192, %v450
      %vm472 = vcmp.eq.s32.totalorder %v192, %v454
      %vm473 = vcmp.eq.s32.totalorder %v193, %v386
      %vm474 = vcmp.eq.s32.totalorder %v193, %v390
      %vm475 = vcmp.eq.s32.totalorder %v193, %v394
      %vm476 = vcmp.eq.s32.totalorder %v193, %v398
      %vm477 = vcmp.eq.s32.totalorder %v193, %v402
      %vm478 = vcmp.eq.s32.totalorder %v193, %v406
      %vm479 = vcmp.eq.s32.totalorder %v193, %v410
      %vm480 = vcmp.eq.s32.totalorder %v193, %v414
      %vm481 = vcmp.eq.s32.totalorder %v193, %v418
      %vm482 = vcmp.eq.s32.totalorder %v193, %v422
      %vm483 = vcmp.eq.s32.totalorder %v193, %v426
      %vm484 = vcmp.eq.s32.totalorder %v193, %v430
      %vm485 = vcmp.eq.s32.totalorder %v193, %v434
      %vm486 = vcmp.eq.s32.totalorder %v193, %v438
      %vm487 = vcmp.eq.s32.totalorder %v193, %v442
      %vm488 = vcmp.eq.s32.totalorder %v193, %v446
      %vm489 = vcmp.eq.s32.totalorder %v193, %v450
      %vm490 = vcmp.eq.s32.totalorder %v193, %v454
      %v496 = vlaneseq
      %v497 = vshrl.u32 %v496, 7
      %v498 = vsub.s32 0, %v497
      %v499 = vrot.slane %v301, %v498
      %v500 = vlaneseq
      %v501 = vshrl.u32 %v500, 7
      %v502 = vsub.s32 2, %v501
      %v503 = vrot.slane %v301, %v502
      %v504 = vlaneseq
      %v505 = vshrl.u32 %v504, 7
      %v506 = vsub.s32 4, %v505
      %v507 = vrot.slane %v301, %v506
      %v508 = vlaneseq
      %v509 = vshrl.u32 %v508, 7
      %v510 = vsub.s32 6, %v509
      %v511 = vrot.slane %v301, %v510
      %v512 = vlaneseq
      %v513 = vshrl.u32 %v512, 7
      %v514 = vsub.s32 0, %v513
      %v515 = vrot.slane %v302, %v514
      %v516 = vlaneseq
      %v517 = vshrl.u32 %v516, 7
      %v518 = vsub.s32 2, %v517
      %v519 = vrot.slane %v302, %v518
      %v520 = vlaneseq
      %v521 = vshrl.u32 %v520, 7
      %v522 = vsub.s32 4, %v521
      %v523 = vrot.slane %v302, %v522
      %v524 = vlaneseq
      %v525 = vshrl.u32 %v524, 7
      %v526 = vsub.s32 6, %v525
      %v527 = vrot.slane %v302, %v526
      %v528 = vlaneseq
      %v529 = vshrl.u32 %v528, 7
      %v530 = vsub.s32 0, %v529
      %v531 = vrot.slane %v303, %v530
      %v532 = vlaneseq
      %v533 = vshrl.u32 %v532, 7
      %v534 = vsub.s32 2, %v533
      %v535 = vrot.slane %v303, %v534
      %v536 = vlaneseq
      %v537 = vshrl.u32 %v536, 7
      %v538 = vsub.s32 4, %v537
      %v539 = vrot.slane %v303, %v538
      %v540 = vlaneseq
      %v541 = vshrl.u32 %v540, 7
      %v542 = vsub.s32 6, %v541
      %v543 = vrot.slane %v303, %v542
      %v544 = vlaneseq
      %v545 = vshrl.u32 %v544, 7
      %v546 = vsub.s32 0, %v545
      %v547 = vrot.slane %v304, %v546
      %v548 = vlaneseq
      %v549 = vshrl.u32 %v548, 7
      %v550 = vsub.s32 2, %v549
      %v551 = vrot.slane %v304, %v550
      %v552 = vlaneseq
      %v553 = vshrl.u32 %v552, 7
      %v554 = vsub.s32 4, %v553
      %v555 = vrot.slane %v304, %v554
      %v556 = vlaneseq
      %v557 = vshrl.u32 %v556, 7
      %v558 = vsub.s32 6, %v557
      %v559 = vrot.slane %v304, %v558
      %v560 = vlaneseq
      %v561 = vshrl.u32 %v560, 7
      %v562 = vsub.s32 0, %v561
      %v563 = vrot.slane %v305, %v562
      %v564 = vlaneseq
      %v565 = vshrl.u32 %v564, 7
      %v566 = vsub.s32 2, %v565
      %v567 = vrot.slane %v305, %v566
      %v586 = vlaneseq
      %v587 = vshrl.u32 %v586, 7
      %v588 = vsub.s32 0, %v587
      %v589 = vrot.slane %v499, %v588
      %v590 = vlaneseq
      %v591 = vshrl.u32 %v590, 7
      %v592 = vsub.s32 0, %v591
      %v593 = vrot.slane %v503, %v592
      %v594 = vlaneseq
      %v595 = vshrl.u32 %v594, 7
      %v596 = vsub.s32 0, %v595
      %v597 = vrot.slane %v507, %v596
      %v598 = vlaneseq
      %v599 = vshrl.u32 %v598, 7
      %v600 = vsub.s32 0, %v599
      %v601 = vrot.slane %v511, %v600
      %v602 = vlaneseq
      %v603 = vshrl.u32 %v602, 7
      %v604 = vsub.s32 0, %v603
      %v605 = vrot.slane %v515, %v604
      %v606 = vlaneseq
      %v607 = vshrl.u32 %v606, 7
      %v608 = vsub.s32 0, %v607
      %v609 = vrot.slane %v519, %v608
      %v610 = vlaneseq
      %v611 = vshrl.u32 %v610, 7
      %v612 = vsub.s32 0, %v611
      %v613 = vrot.slane %v523, %v612
      %v614 = vlaneseq
      %v615 = vshrl.u32 %v614, 7
      %v616 = vsub.s32 0, %v615
      %v617 = vrot.slane %v527, %v616
      %v618 = vlaneseq
      %v619 = vshrl.u32 %v618, 7
      %v620 = vsub.s32 0, %v619
      %v621 = vrot.slane %v531, %v620
      %v622 = vlaneseq
      %v623 = vshrl.u32 %v622, 7
      %v624 = vsub.s32 0, %v623
      %v625 = vrot.slane %v535, %v624
      %v626 = vlaneseq
      %v627 = vshrl.u32 %v626, 7
      %v628 = vsub.s32 0, %v627
      %v629 = vrot.slane %v539, %v628
      %v630 = vlaneseq
      %v631 = vshrl.u32 %v630, 7
      %v632 = vsub.s32 0, %v631
      %v633 = vrot.slane %v543, %v632
      %v634 = vlaneseq
      %v635 = vshrl.u32 %v634, 7
      %v636 = vsub.s32 0, %v635
      %v637 = vrot.slane %v547, %v636
      %v638 = vlaneseq
      %v639 = vshrl.u32 %v638, 7
      %v640 = vsub.s32 0, %v639
      %v641 = vrot.slane %v551, %v640
      %v642 = vlaneseq
      %v643 = vshrl.u32 %v642, 7
      %v644 = vsub.s32 0, %v643
      %v645 = vrot.slane %v555, %v644
      %v646 = vlaneseq
      %v647 = vshrl.u32 %v646, 7
      %v648 = vsub.s32 0, %v647
      %v649 = vrot.slane %v559, %v648
      %v650 = vlaneseq
      %v651 = vshrl.u32 %v650, 7
      %v652 = vsub.s32 0, %v651
      %v653 = vrot.slane %v563, %v652
      %v654 = vlaneseq
      %v655 = vshrl.u32 %v654, 7
      %v656 = vsub.s32 0, %v655
      %v657 = vrot.slane %v567, %v656
      %v658 = vsel %vm455, %v589, 0.0
      %v659 = vsel %vm456, %v593, 0.0
      %v660 = vsel %vm457, %v597, 0.0
      %v661 = vsel %vm458, %v601, 0.0
      %v662 = vsel %vm459, %v605, 0.0
      %v663 = vsel %vm460, %v609, 0.0
      %v664 = vsel %vm461, %v613, 0.0
      %v665 = vsel %vm462, %v617, 0.0
      %v666 = vsel %vm463, %v621, 0.0
      %v667 = vsel %vm464, %v625, 0.0
      %v668 = vsel %vm465, %v629, 0.0
      %v669 = vsel %vm466, %v633, 0.0
      %v670 = vsel %vm467, %v637, 0.0
      %v671 = vsel %vm468, %v641, 0.0
      %v672 = vsel %vm469, %v645, 0.0
      %v673 = vsel %vm470, %v649, 0.0
      %v674 = vsel %vm471, %v653, 0.0
      %v675 = vsel %vm472, %v657, 0.0
      %v676 = vsel %vm473, %v589, 0.0
      %v677 = vsel %vm474, %v593, 0.0
      %v678 = vsel %vm475, %v597, 0.0
      %v679 = vsel %vm476, %v601, 0.0
      %v680 = vsel %vm477, %v605, 0.0
      %v681 = vsel %vm478, %v609, 0.0
      %v682 = vsel %vm479, %v613, 0.0
      %v683 = vsel %vm480, %v617, 0.0
      %v684 = vsel %vm481, %v621, 0.0
      %v685 = vsel %vm482, %v625, 0.0
      %v686 = vsel %vm483, %v629, 0.0
      %v687 = vsel %vm484, %v633, 0.0
      %v688 = vsel %vm485, %v637, 0.0
      %v689 = vsel %vm486, %v641, 0.0
      %v690 = vsel %vm487, %v645, 0.0
      %v691 = vsel %vm488, %v649, 0.0
      %v692 = vsel %vm489, %v653, 0.0
      %v693 = vsel %vm490, %v657, 0.0
      %v694 = vadd.s32 %v291, 1
      %v695 = vadd.s32 %v292, 1
      %v696 = vadd.s32 %v293, 1
      %v697 = vadd.s32 %v294, 1
      %v698 = vadd.s32 %v295, 1
      %v699 = vlaneseq
      %v700 = vshrl.u32 %v699, 7
      %v701 = vsub.s32 0, %v700
      %v702 = vrot.slane %v694, %v701
      %v703 = vlaneseq
      %v704 = vshrl.u32 %v703, 7
      %v705 = vsub.s32 2, %v704
      %v706 = vrot.slane %v694, %v705
      %v707 = vlaneseq
      %v708 = vshrl.u32 %v707, 7
      %v709 = vsub.s32 4, %v708
      %v710 = vrot.slane %v694, %v709
      %v711 = vlaneseq
      %v712 = vshrl.u32 %v711, 7
      %v713 = vsub.s32 6, %v712
      %v714 = vrot.slane %v694, %v713
      %v715 = vlaneseq
      %v716 = vshrl.u32 %v715, 7
      %v717 = vsub.s32 0, %v716
      %v718 = vrot.slane %v695, %v717
      %v719 = vlaneseq
      %v720 = vshrl.u32 %v719, 7
      %v721 = vsub.s32 2, %v720
      %v722 = vrot.slane %v695, %v721
      %v723 = vlaneseq
      %v724 = vshrl.u32 %v723, 7
      %v725 = vsub.s32 4, %v724
      %v726 = vrot.slane %v695, %v725
      %v727 = vlaneseq
      %v728 = vshrl.u32 %v727, 7
      %v729 = vsub.s32 6, %v728
      %v730 = vrot.slane %v695, %v729
      %v731 = vlaneseq
      %v732 = vshrl.u32 %v731, 7
      %v733 = vsub.s32 0, %v732
      %v734 = vrot.slane %v696, %v733
      %v735 = vlaneseq
      %v736 = vshrl.u32 %v735, 7
      %v737 = vsub.s32 2, %v736
      %v738 = vrot.slane %v696, %v737
      %v739 = vlaneseq
      %v740 = vshrl.u32 %v739, 7
      %v741 = vsub.s32 4, %v740
      %v742 = vrot.slane %v696, %v741
      %v743 = vlaneseq
      %v744 = vshrl.u32 %v743, 7
      %v745 = vsub.s32 6, %v744
      %v746 = vrot.slane %v696, %v745
      %v747 = vlaneseq
      %v748 = vshrl.u32 %v747, 7
      %v749 = vsub.s32 0, %v748
      %v750 = vrot.slane %v697, %v749
      %v751 = vlaneseq
      %v752 = vshrl.u32 %v751, 7
      %v753 = vsub.s32 2, %v752
      %v754 = vrot.slane %v697, %v753
      %v755 = vlaneseq
      %v756 = vshrl.u32 %v755, 7
      %v757 = vsub.s32 4, %v756
      %v758 = vrot.slane %v697, %v757
      %v759 = vlaneseq
      %v760 = vshrl.u32 %v759, 7
      %v761 = vsub.s32 6, %v760
      %v762 = vrot.slane %v697, %v761
      %v763 = vlaneseq
      %v764 = vshrl.u32 %v763, 7
      %v765 = vsub.s32 0, %v764
      %v766 = vrot.slane %v698, %v765
      %v767 = vlaneseq
      %v768 = vshrl.u32 %v767, 7
      %v769 = vsub.s32 2, %v768
      %v770 = vrot.slane %v698, %v769
      %v771 = vlaneseq
      %v772 = vshrl.u32 %v771, 7
      %v773 = vsub.s32 0, %v772
      %v774 = vrot.slane %v702, %v773
      %v775 = vlaneseq
      %v776 = vshrl.u32 %v775, 7
      %v777 = vsub.s32 0, %v776
      %v778 = vrot.slane %v706, %v777
      %v779 = vlaneseq
      %v780 = vshrl.u32 %v779, 7
      %v781 = vsub.s32 0, %v780
      %v782 = vrot.slane %v710, %v781
      %v783 = vlaneseq
      %v784 = vshrl.u32 %v783, 7
      %v785 = vsub.s32 0, %v784
      %v786 = vrot.slane %v714, %v785
      %v787 = vlaneseq
      %v788 = vshrl.u32 %v787, 7
      %v789 = vsub.s32 0, %v788
      %v790 = vrot.slane %v718, %v789
      %v791 = vlaneseq
      %v792 = vshrl.u32 %v791, 7
      %v793 = vsub.s32 0, %v792
      %v794 = vrot.slane %v722, %v793
      %v795 = vlaneseq
      %v796 = vshrl.u32 %v795, 7
      %v797 = vsub.s32 0, %v796
      %v798 = vrot.slane %v726, %v797
      %v799 = vlaneseq
      %v800 = vshrl.u32 %v799, 7
      %v801 = vsub.s32 0, %v800
      %v802 = vrot.slane %v730, %v801
      %v803 = vlaneseq
      %v804 = vshrl.u32 %v803, 7
      %v805 = vsub.s32 0, %v804
      %v806 = vrot.slane %v734, %v805
      %v807 = vlaneseq
      %v808 = vshrl.u32 %v807, 7
      %v809 = vsub.s32 0, %v808
      %v810 = vrot.slane %v738, %v809
      %v811 = vlaneseq
      %v812 = vshrl.u32 %v811, 7
      %v813 = vsub.s32 0, %v812
      %v814 = vrot.slane %v742, %v813
      %v815 = vlaneseq
      %v816 = vshrl.u32 %v815, 7
      %v817 = vsub.s32 0, %v816
      %v818 = vrot.slane %v746, %v817
      %v819 = vlaneseq
      %v820 = vshrl.u32 %v819, 7
      %v821 = vsub.s32 0, %v820
      %v822 = vrot.slane %v750, %v821
      %v823 = vlaneseq
      %v824 = vshrl.u32 %v823, 7
      %v825 = vsub.s32 0, %v824
      %v826 = vrot.slane %v754, %v825
      %v827 = vlaneseq
      %v828 = vshrl.u32 %v827, 7
      %v829 = vsub.s32 0, %v828
      %v830 = vrot.slane %v758, %v829
      %v831 = vlaneseq
      %v832 = vshrl.u32 %v831, 7
      %v833 = vsub.s32 0, %v832
      %v834 = vrot.slane %v762, %v833
      %v835 = vlaneseq
      %v836 = vshrl.u32 %v835, 7
      %v837 = vsub.s32 0, %v836
      %v838 = vrot.slane %v766, %v837
      %v839 = vlaneseq
      %v840 = vshrl.u32 %v839, 7
      %v841 = vsub.s32 0, %v840
      %v842 = vrot.slane %v770, %v841
      %vm843 = vcmp.eq.s32.totalorder %v192, %v774
      %vm844 = vcmp.eq.s32.totalorder %v192, %v778
      %vm845 = vcmp.eq.s32.totalorder %v192, %v782
      %vm846 = vcmp.eq.s32.totalorder %v192, %v786
      %vm847 = vcmp.eq.s32.totalorder %v192, %v790
      %vm848 = vcmp.eq.s32.totalorder %v192, %v794
      %vm849 = vcmp.eq.s32.totalorder %v192, %v798
      %vm850 = vcmp.eq.s32.totalorder %v192, %v802
      %vm851 = vcmp.eq.s32.totalorder %v192, %v806
      %vm852 = vcmp.eq.s32.totalorder %v192, %v810
      %vm853 = vcmp.eq.s32.totalorder %v192, %v814
      %vm854 = vcmp.eq.s32.totalorder %v192, %v818
      %vm855 = vcmp.eq.s32.totalorder %v192, %v822
      %vm856 = vcmp.eq.s32.totalorder %v192, %v826
      %vm857 = vcmp.eq.s32.totalorder %v192, %v830
      %vm858 = vcmp.eq.s32.totalorder %v192, %v834
      %vm859 = vcmp.eq.s32.totalorder %v192, %v838
      %vm860 = vcmp.eq.s32.totalorder %v192, %v842
      %vm861 = vcmp.eq.s32.totalorder %v193, %v774
      %vm862 = vcmp.eq.s32.totalorder %v193, %v778
      %vm863 = vcmp.eq.s32.totalorder %v193, %v782
      %vm864 = vcmp.eq.s32.totalorder %v193, %v786
      %vm865 = vcmp.eq.s32.totalorder %v193, %v790
      %vm866 = vcmp.eq.s32.totalorder %v193, %v794
      %vm867 = vcmp.eq.s32.totalorder %v193, %v798
      %vm868 = vcmp.eq.s32.totalorder %v193, %v802
      %vm869 = vcmp.eq.s32.totalorder %v193, %v806
      %vm870 = vcmp.eq.s32.totalorder %v193, %v810
      %vm871 = vcmp.eq.s32.totalorder %v193, %v814
      %vm872 = vcmp.eq.s32.totalorder %v193, %v818
      %vm873 = vcmp.eq.s32.totalorder %v193, %v822
      %vm874 = vcmp.eq.s32.totalorder %v193, %v826
      %vm875 = vcmp.eq.s32.totalorder %v193, %v830
      %vm876 = vcmp.eq.s32.totalorder %v193, %v834
      %vm877 = vcmp.eq.s32.totalorder %v193, %v838
      %vm878 = vcmp.eq.s32.totalorder %v193, %v842
      %v884 = vlaneseq
      %v885 = vshrl.u32 %v884, 7
      %v886 = vsub.s32 0, %v885
      %v887 = vrot.slane %v306, %v886
      %v888 = vlaneseq
      %v889 = vshrl.u32 %v888, 7
      %v890 = vsub.s32 2, %v889
      %v891 = vrot.slane %v306, %v890
      %v892 = vlaneseq
      %v893 = vshrl.u32 %v892, 7
      %v894 = vsub.s32 4, %v893
      %v895 = vrot.slane %v306, %v894
      %v896 = vlaneseq
      %v897 = vshrl.u32 %v896, 7
      %v898 = vsub.s32 6, %v897
      %v899 = vrot.slane %v306, %v898
      %v900 = vlaneseq
      %v901 = vshrl.u32 %v900, 7
      %v902 = vsub.s32 0, %v901
      %v903 = vrot.slane %v307, %v902
      %v904 = vlaneseq
      %v905 = vshrl.u32 %v904, 7
      %v906 = vsub.s32 2, %v905
      %v907 = vrot.slane %v307, %v906
      %v908 = vlaneseq
      %v909 = vshrl.u32 %v908, 7
      %v910 = vsub.s32 4, %v909
      %v911 = vrot.slane %v307, %v910
      %v912 = vlaneseq
      %v913 = vshrl.u32 %v912, 7
      %v914 = vsub.s32 6, %v913
      %v915 = vrot.slane %v307, %v914
      %v916 = vlaneseq
      %v917 = vshrl.u32 %v916, 7
      %v918 = vsub.s32 0, %v917
      %v919 = vrot.slane %v308, %v918
      %v920 = vlaneseq
      %v921 = vshrl.u32 %v920, 7
      %v922 = vsub.s32 2, %v921
      %v923 = vrot.slane %v308, %v922
      %v924 = vlaneseq
      %v925 = vshrl.u32 %v924, 7
      %v926 = vsub.s32 4, %v925
      %v927 = vrot.slane %v308, %v926
      %v928 = vlaneseq
      %v929 = vshrl.u32 %v928, 7
      %v930 = vsub.s32 6, %v929
      %v931 = vrot.slane %v308, %v930
      %v932 = vlaneseq
      %v933 = vshrl.u32 %v932, 7
      %v934 = vsub.s32 0, %v933
      %v935 = vrot.slane %v309, %v934
      %v936 = vlaneseq
      %v937 = vshrl.u32 %v936, 7
      %v938 = vsub.s32 2, %v937
      %v939 = vrot.slane %v309, %v938
      %v940 = vlaneseq
      %v941 = vshrl.u32 %v940, 7
      %v942 = vsub.s32 4, %v941
      %v943 = vrot.slane %v309, %v942
      %v944 = vlaneseq
      %v945 = vshrl.u32 %v944, 7
      %v946 = vsub.s32 6, %v945
      %v947 = vrot.slane %v309, %v946
      %v948 = vlaneseq
      %v949 = vshrl.u32 %v948, 7
      %v950 = vsub.s32 0, %v949
      %v951 = vrot.slane %v310, %v950
      %v952 = vlaneseq
      %v953 = vshrl.u32 %v952, 7
      %v954 = vsub.s32 2, %v953
      %v955 = vrot.slane %v310, %v954
      %v974 = vlaneseq
      %v975 = vshrl.u32 %v974, 7
      %v976 = vsub.s32 0, %v975
      %v977 = vrot.slane %v887, %v976
      %v978 = vlaneseq
      %v979 = vshrl.u32 %v978, 7
      %v980 = vsub.s32 0, %v979
      %v981 = vrot.slane %v891, %v980
      %v982 = vlaneseq
      %v983 = vshrl.u32 %v982, 7
      %v984 = vsub.s32 0, %v983
      %v985 = vrot.slane %v895, %v984
      %v986 = vlaneseq
      %v987 = vshrl.u32 %v986, 7
      %v988 = vsub.s32 0, %v987
      %v989 = vrot.slane %v899, %v988
      %v990 = vlaneseq
      %v991 = vshrl.u32 %v990, 7
      %v992 = vsub.s32 0, %v991
      %v993 = vrot.slane %v903, %v992
      %v994 = vlaneseq
      %v995 = vshrl.u32 %v994, 7
      %v996 = vsub.s32 0, %v995
      %v997 = vrot.slane %v907, %v996
      %v998 = vlaneseq
      %v999 = vshrl.u32 %v998, 7
      %v1000 = vsub.s32 0, %v999
      %v1001 = vrot.slane %v911, %v1000
      %v1002 = vlaneseq
      %v1003 = vshrl.u32 %v1002, 7
      %v1004 = vsub.s32 0, %v1003
      %v1005 = vrot.slane %v915, %v1004
      %v1006 = vlaneseq
      %v1007 = vshrl.u32 %v1006, 7
      %v1008 = vsub.s32 0, %v1007
      %v1009 = vrot.slane %v919, %v1008
      %v1010 = vlaneseq
      %v1011 = vshrl.u32 %v1010, 7
      %v1012 = vsub.s32 0, %v1011
      %v1013 = vrot.slane %v923, %v1012
      %v1014 = vlaneseq
      %v1015 = vshrl.u32 %v1014, 7
      %v1016 = vsub.s32 0, %v1015
      %v1017 = vrot.slane %v927, %v1016
      %v1018 = vlaneseq
      %v1019 = vshrl.u32 %v1018, 7
      %v1020 = vsub.s32 0, %v1019
      %v1021 = vrot.slane %v931, %v1020
      %v1022 = vlaneseq
      %v1023 = vshrl.u32 %v1022, 7
      %v1024 = vsub.s32 0, %v1023
      %v1025 = vrot.slane %v935, %v1024
      %v1026 = vlaneseq
      %v1027 = vshrl.u32 %v1026, 7
      %v1028 = vsub.s32 0, %v1027
      %v1029 = vrot.slane %v939, %v1028
      %v1030 = vlaneseq
      %v1031 = vshrl.u32 %v1030, 7
      %v1032 = vsub.s32 0, %v1031
      %v1033 = vrot.slane %v943, %v1032
      %v1034 = vlaneseq
      %v1035 = vshrl.u32 %v1034, 7
      %v1036 = vsub.s32 0, %v1035
      %v1037 = vrot.slane %v947, %v1036
      %v1038 = vlaneseq
      %v1039 = vshrl.u32 %v1038, 7
      %v1040 = vsub.s32 0, %v1039
      %v1041 = vrot.slane %v951, %v1040
      %v1042 = vlaneseq
      %v1043 = vshrl.u32 %v1042, 7
      %v1044 = vsub.s32 0, %v1043
      %v1045 = vrot.slane %v955, %v1044
      %v1046 = vsel %vm843, %v977, 0.0
      %v1047 = vsel %vm844, %v981, 0.0
      %v1048 = vsel %vm845, %v985, 0.0
      %v1049 = vsel %vm846, %v989, 0.0
      %v1050 = vsel %vm847, %v993, 0.0
      %v1051 = vsel %vm848, %v997, 0.0
      %v1052 = vsel %vm849, %v1001, 0.0
      %v1053 = vsel %vm850, %v1005, 0.0
      %v1054 = vsel %vm851, %v1009, 0.0
      %v1055 = vsel %vm852, %v1013, 0.0
      %v1056 = vsel %vm853, %v1017, 0.0
      %v1057 = vsel %vm854, %v1021, 0.0
      %v1058 = vsel %vm855, %v1025, 0.0
      %v1059 = vsel %vm856, %v1029, 0.0
      %v1060 = vsel %vm857, %v1033, 0.0
      %v1061 = vsel %vm858, %v1037, 0.0
      %v1062 = vsel %vm859, %v1041, 0.0
      %v1063 = vsel %vm860, %v1045, 0.0
      %v1064 = vsel %vm861, %v977, 0.0
      %v1065 = vsel %vm862, %v981, 0.0
      %v1066 = vsel %vm863, %v985, 0.0
      %v1067 = vsel %vm864, %v989, 0.0
      %v1068 = vsel %vm865, %v993, 0.0
      %v1069 = vsel %vm866, %v997, 0.0
      %v1070 = vsel %vm867, %v1001, 0.0
      %v1071 = vsel %vm868, %v1005, 0.0
      %v1072 = vsel %vm869, %v1009, 0.0
      %v1073 = vsel %vm870, %v1013, 0.0
      %v1074 = vsel %vm871, %v1017, 0.0
      %v1075 = vsel %vm872, %v1021, 0.0
      %v1076 = vsel %vm873, %v1025, 0.0
      %v1077 = vsel %vm874, %v1029, 0.0
      %v1078 = vsel %vm875, %v1033, 0.0
      %v1079 = vsel %vm876, %v1037, 0.0
      %v1080 = vsel %vm877, %v1041, 0.0
      %v1081 = vsel %vm878, %v1045, 0.0
      %v1082 = vadd.f32 %v658, %v1046
      %v1083 = vadd.f32 %v659, %v1047
      %v1084 = vadd.f32 %v660, %v1048
      %v1085 = vadd.f32 %v661, %v1049
      %v1086 = vadd.f32 %v662, %v1050
      %v1087 = vadd.f32 %v663, %v1051
      %v1088 = vadd.f32 %v664, %v1052
      %v1089 = vadd.f32 %v665, %v1053
      %v1090 = vadd.f32 %v666, %v1054
      %v1091 = vadd.f32 %v667, %v1055
      %v1092 = vadd.f32 %v668, %v1056
      %v1093 = vadd.f32 %v669, %v1057
      %v1094 = vadd.f32 %v670, %v1058
      %v1095 = vadd.f32 %v671, %v1059
      %v1096 = vadd.f32 %v672, %v1060
      %v1097 = vadd.f32 %v673, %v1061
      %v1098 = vadd.f32 %v674, %v1062
      %v1099 = vadd.f32 %v675, %v1063
      %v1100 = vadd.f32 %v676, %v1064
      %v1101 = vadd.f32 %v677, %v1065
      %v1102 = vadd.f32 %v678, %v1066
      %v1103 = vadd.f32 %v679, %v1067
      %v1104 = vadd.f32 %v680, %v1068
      %v1105 = vadd.f32 %v681, %v1069
      %v1106 = vadd.f32 %v682, %v1070
      %v1107 = vadd.f32 %v683, %v1071
      %v1108 = vadd.f32 %v684, %v1072
      %v1109 = vadd.f32 %v685, %v1073
      %v1110 = vadd.f32 %v686, %v1074
      %v1111 = vadd.f32 %v687, %v1075
      %v1112 = vadd.f32 %v688, %v1076
      %v1113 = vadd.f32 %v689, %v1077
      %v1114 = vadd.f32 %v690, %v1078
      %v1115 = vadd.f32 %v691, %v1079
      %v1116 = vadd.f32 %v692, %v1080
      %v1117 = vadd.f32 %v693, %v1081
      %v1118 = vlaneseq
      %v1119 = vshrl.u32 %v1118, 7
      %v1120 = vsub.s32 1, %v1119
      %v1121 = vrot.slane %v291, %v1120
      %v1122 = vlaneseq
      %v1123 = vshrl.u32 %v1122, 7
      %v1124 = vsub.s32 3, %v1123
      %v1125 = vrot.slane %v291, %v1124
      %v1126 = vlaneseq
      %v1127 = vshrl.u32 %v1126, 7
      %v1128 = vsub.s32 5, %v1127
      %v1129 = vrot.slane %v291, %v1128
      %v1130 = vlaneseq
      %v1131 = vshrl.u32 %v1130, 7
      %v1132 = vsub.s32 7, %v1131
      %v1133 = vrot.slane %v291, %v1132
      %v1134 = vlaneseq
      %v1135 = vshrl.u32 %v1134, 7
      %v1136 = vsub.s32 1, %v1135
      %v1137 = vrot.slane %v292, %v1136
      %v1138 = vlaneseq
      %v1139 = vshrl.u32 %v1138, 7
      %v1140 = vsub.s32 3, %v1139
      %v1141 = vrot.slane %v292, %v1140
      %v1142 = vlaneseq
      %v1143 = vshrl.u32 %v1142, 7
      %v1144 = vsub.s32 5, %v1143
      %v1145 = vrot.slane %v292, %v1144
      %v1146 = vlaneseq
      %v1147 = vshrl.u32 %v1146, 7
      %v1148 = vsub.s32 7, %v1147
      %v1149 = vrot.slane %v292, %v1148
      %v1150 = vlaneseq
      %v1151 = vshrl.u32 %v1150, 7
      %v1152 = vsub.s32 1, %v1151
      %v1153 = vrot.slane %v293, %v1152
      %v1154 = vlaneseq
      %v1155 = vshrl.u32 %v1154, 7
      %v1156 = vsub.s32 3, %v1155
      %v1157 = vrot.slane %v293, %v1156
      %v1158 = vlaneseq
      %v1159 = vshrl.u32 %v1158, 7
      %v1160 = vsub.s32 5, %v1159
      %v1161 = vrot.slane %v293, %v1160
      %v1162 = vlaneseq
      %v1163 = vshrl.u32 %v1162, 7
      %v1164 = vsub.s32 7, %v1163
      %v1165 = vrot.slane %v293, %v1164
      %v1166 = vlaneseq
      %v1167 = vshrl.u32 %v1166, 7
      %v1168 = vsub.s32 1, %v1167
      %v1169 = vrot.slane %v294, %v1168
      %v1170 = vlaneseq
      %v1171 = vshrl.u32 %v1170, 7
      %v1172 = vsub.s32 3, %v1171
      %v1173 = vrot.slane %v294, %v1172
      %v1174 = vlaneseq
      %v1175 = vshrl.u32 %v1174, 7
      %v1176 = vsub.s32 5, %v1175
      %v1177 = vrot.slane %v294, %v1176
      %v1178 = vlaneseq
      %v1179 = vshrl.u32 %v1178, 7
      %v1180 = vsub.s32 7, %v1179
      %v1181 = vrot.slane %v294, %v1180
      %v1182 = vlaneseq
      %v1183 = vshrl.u32 %v1182, 7
      %v1184 = vsub.s32 1, %v1183
      %v1185 = vrot.slane %v295, %v1184
      %v1186 = vlaneseq
      %v1187 = vshrl.u32 %v1186, 7
      %v1188 = vsub.s32 3, %v1187
      %v1189 = vrot.slane %v295, %v1188
      %v1190 = vlaneseq
      %v1191 = vshrl.u32 %v1190, 7
      %v1192 = vsub.s32 1, %v1191
      %v1193 = vrot.slane %v1121, %v1192
      %v1194 = vlaneseq
      %v1195 = vshrl.u32 %v1194, 7
      %v1196 = vsub.s32 1, %v1195
      %v1197 = vrot.slane %v1125, %v1196
      %v1198 = vlaneseq
      %v1199 = vshrl.u32 %v1198, 7
      %v1200 = vsub.s32 1, %v1199
      %v1201 = vrot.slane %v1129, %v1200
      %v1202 = vlaneseq
      %v1203 = vshrl.u32 %v1202, 7
      %v1204 = vsub.s32 1, %v1203
      %v1205 = vrot.slane %v1133, %v1204
      %v1206 = vlaneseq
      %v1207 = vshrl.u32 %v1206, 7
      %v1208 = vsub.s32 1, %v1207
      %v1209 = vrot.slane %v1137, %v1208
      %v1210 = vlaneseq
      %v1211 = vshrl.u32 %v1210, 7
      %v1212 = vsub.s32 1, %v1211
      %v1213 = vrot.slane %v1141, %v1212
      %v1214 = vlaneseq
      %v1215 = vshrl.u32 %v1214, 7
      %v1216 = vsub.s32 1, %v1215
      %v1217 = vrot.slane %v1145, %v1216
      %v1218 = vlaneseq
      %v1219 = vshrl.u32 %v1218, 7
      %v1220 = vsub.s32 1, %v1219
      %v1221 = vrot.slane %v1149, %v1220
      %v1222 = vlaneseq
      %v1223 = vshrl.u32 %v1222, 7
      %v1224 = vsub.s32 1, %v1223
      %v1225 = vrot.slane %v1153, %v1224
      %v1226 = vlaneseq
      %v1227 = vshrl.u32 %v1226, 7
      %v1228 = vsub.s32 1, %v1227
      %v1229 = vrot.slane %v1157, %v1228
      %v1230 = vlaneseq
      %v1231 = vshrl.u32 %v1230, 7
      %v1232 = vsub.s32 1, %v1231
      %v1233 = vrot.slane %v1161, %v1232
      %v1234 = vlaneseq
      %v1235 = vshrl.u32 %v1234, 7
      %v1236 = vsub.s32 1, %v1235
      %v1237 = vrot.slane %v1165, %v1236
      %v1238 = vlaneseq
      %v1239 = vshrl.u32 %v1238, 7
      %v1240 = vsub.s32 1, %v1239
      %v1241 = vrot.slane %v1169, %v1240
      %v1242 = vlaneseq
      %v1243 = vshrl.u32 %v1242, 7
      %v1244 = vsub.s32 1, %v1243
      %v1245 = vrot.slane %v1173, %v1244
      %v1246 = vlaneseq
      %v1247 = vshrl.u32 %v1246, 7
      %v1248 = vsub.s32 1, %v1247
      %v1249 = vrot.slane %v1177, %v1248
      %v1250 = vlaneseq
      %v1251 = vshrl.u32 %v1250, 7
      %v1252 = vsub.s32 1, %v1251
      %v1253 = vrot.slane %v1181, %v1252
      %v1254 = vlaneseq
      %v1255 = vshrl.u32 %v1254, 7
      %v1256 = vsub.s32 1, %v1255
      %v1257 = vrot.slane %v1185, %v1256
      %v1258 = vlaneseq
      %v1259 = vshrl.u32 %v1258, 7
      %v1260 = vsub.s32 1, %v1259
      %v1261 = vrot.slane %v1189, %v1260
      %vm1262 = vcmp.eq.s32.totalorder %v192, %v1193
      %vm1263 = vcmp.eq.s32.totalorder %v192, %v1197
      %vm1264 = vcmp.eq.s32.totalorder %v192, %v1201
      %vm1265 = vcmp.eq.s32.totalorder %v192, %v1205
      %vm1266 = vcmp.eq.s32.totalorder %v192, %v1209
      %vm1267 = vcmp.eq.s32.totalorder %v192, %v1213
      %vm1268 = vcmp.eq.s32.totalorder %v192, %v1217
      %vm1269 = vcmp.eq.s32.totalorder %v192, %v1221
      %vm1270 = vcmp.eq.s32.totalorder %v192, %v1225
      %vm1271 = vcmp.eq.s32.totalorder %v192, %v1229
      %vm1272 = vcmp.eq.s32.totalorder %v192, %v1233
      %vm1273 = vcmp.eq.s32.totalorder %v192, %v1237
      %vm1274 = vcmp.eq.s32.totalorder %v192, %v1241
      %vm1275 = vcmp.eq.s32.totalorder %v192, %v1245
      %vm1276 = vcmp.eq.s32.totalorder %v192, %v1249
      %vm1277 = vcmp.eq.s32.totalorder %v192, %v1253
      %vm1278 = vcmp.eq.s32.totalorder %v192, %v1257
      %vm1279 = vcmp.eq.s32.totalorder %v192, %v1261
      %vm1280 = vcmp.eq.s32.totalorder %v193, %v1193
      %vm1281 = vcmp.eq.s32.totalorder %v193, %v1197
      %vm1282 = vcmp.eq.s32.totalorder %v193, %v1201
      %vm1283 = vcmp.eq.s32.totalorder %v193, %v1205
      %vm1284 = vcmp.eq.s32.totalorder %v193, %v1209
      %vm1285 = vcmp.eq.s32.totalorder %v193, %v1213
      %vm1286 = vcmp.eq.s32.totalorder %v193, %v1217
      %vm1287 = vcmp.eq.s32.totalorder %v193, %v1221
      %vm1288 = vcmp.eq.s32.totalorder %v193, %v1225
      %vm1289 = vcmp.eq.s32.totalorder %v193, %v1229
      %vm1290 = vcmp.eq.s32.totalorder %v193, %v1233
      %vm1291 = vcmp.eq.s32.totalorder %v193, %v1237
      %vm1292 = vcmp.eq.s32.totalorder %v193, %v1241
      %vm1293 = vcmp.eq.s32.totalorder %v193, %v1245
      %vm1294 = vcmp.eq.s32.totalorder %v193, %v1249
      %vm1295 = vcmp.eq.s32.totalorder %v193, %v1253
      %vm1296 = vcmp.eq.s32.totalorder %v193, %v1257
      %vm1297 = vcmp.eq.s32.totalorder %v193, %v1261
      %v1303 = vlaneseq
      %v1304 = vshrl.u32 %v1303, 7
      %v1305 = vsub.s32 1, %v1304
      %v1306 = vrot.slane %v296, %v1305
      %v1307 = vlaneseq
      %v1308 = vshrl.u32 %v1307, 7
      %v1309 = vsub.s32 3, %v1308
      %v1310 = vrot.slane %v296, %v1309
      %v1311 = vlaneseq
      %v1312 = vshrl.u32 %v1311, 7
      %v1313 = vsub.s32 5, %v1312
      %v1314 = vrot.slane %v296, %v1313
      %v1315 = vlaneseq
      %v1316 = vshrl.u32 %v1315, 7
      %v1317 = vsub.s32 7, %v1316
      %v1318 = vrot.slane %v296, %v1317
      %v1319 = vlaneseq
      %v1320 = vshrl.u32 %v1319, 7
      %v1321 = vsub.s32 1, %v1320
      %v1322 = vrot.slane %v297, %v1321
      %v1323 = vlaneseq
      %v1324 = vshrl.u32 %v1323, 7
      %v1325 = vsub.s32 3, %v1324
      %v1326 = vrot.slane %v297, %v1325
      %v1327 = vlaneseq
      %v1328 = vshrl.u32 %v1327, 7
      %v1329 = vsub.s32 5, %v1328
      %v1330 = vrot.slane %v297, %v1329
      %v1331 = vlaneseq
      %v1332 = vshrl.u32 %v1331, 7
      %v1333 = vsub.s32 7, %v1332
      %v1334 = vrot.slane %v297, %v1333
      %v1335 = vlaneseq
      %v1336 = vshrl.u32 %v1335, 7
      %v1337 = vsub.s32 1, %v1336
      %v1338 = vrot.slane %v298, %v1337
      %v1339 = vlaneseq
      %v1340 = vshrl.u32 %v1339, 7
      %v1341 = vsub.s32 3, %v1340
      %v1342 = vrot.slane %v298, %v1341
      %v1343 = vlaneseq
      %v1344 = vshrl.u32 %v1343, 7
      %v1345 = vsub.s32 5, %v1344
      %v1346 = vrot.slane %v298, %v1345
      %v1347 = vlaneseq
      %v1348 = vshrl.u32 %v1347, 7
      %v1349 = vsub.s32 7, %v1348
      %v1350 = vrot.slane %v298, %v1349
      %v1351 = vlaneseq
      %v1352 = vshrl.u32 %v1351, 7
      %v1353 = vsub.s32 1, %v1352
      %v1354 = vrot.slane %v299, %v1353
      %v1355 = vlaneseq
      %v1356 = vshrl.u32 %v1355, 7
      %v1357 = vsub.s32 3, %v1356
      %v1358 = vrot.slane %v299, %v1357
      %v1359 = vlaneseq
      %v1360 = vshrl.u32 %v1359, 7
      %v1361 = vsub.s32 5, %v1360
      %v1362 = vrot.slane %v299, %v1361
      %v1363 = vlaneseq
      %v1364 = vshrl.u32 %v1363, 7
      %v1365 = vsub.s32 7, %v1364
      %v1366 = vrot.slane %v299, %v1365
      %v1367 = vlaneseq
      %v1368 = vshrl.u32 %v1367, 7
      %v1369 = vsub.s32 1, %v1368
      %v1370 = vrot.slane %v300, %v1369
      %v1371 = vlaneseq
      %v1372 = vshrl.u32 %v1371, 7
      %v1373 = vsub.s32 3, %v1372
      %v1374 = vrot.slane %v300, %v1373
      %v1393 = vlaneseq
      %v1394 = vshrl.u32 %v1393, 7
      %v1395 = vsub.s32 1, %v1394
      %v1396 = vrot.slane %v1306, %v1395
      %v1397 = vlaneseq
      %v1398 = vshrl.u32 %v1397, 7
      %v1399 = vsub.s32 1, %v1398
      %v1400 = vrot.slane %v1310, %v1399
      %v1401 = vlaneseq
      %v1402 = vshrl.u32 %v1401, 7
      %v1403 = vsub.s32 1, %v1402
      %v1404 = vrot.slane %v1314, %v1403
      %v1405 = vlaneseq
      %v1406 = vshrl.u32 %v1405, 7
      %v1407 = vsub.s32 1, %v1406
      %v1408 = vrot.slane %v1318, %v1407
      %v1409 = vlaneseq
      %v1410 = vshrl.u32 %v1409, 7
      %v1411 = vsub.s32 1, %v1410
      %v1412 = vrot.slane %v1322, %v1411
      %v1413 = vlaneseq
      %v1414 = vshrl.u32 %v1413, 7
      %v1415 = vsub.s32 1, %v1414
      %v1416 = vrot.slane %v1326, %v1415
      %v1417 = vlaneseq
      %v1418 = vshrl.u32 %v1417, 7
      %v1419 = vsub.s32 1, %v1418
      %v1420 = vrot.slane %v1330, %v1419
      %v1421 = vlaneseq
      %v1422 = vshrl.u32 %v1421, 7
      %v1423 = vsub.s32 1, %v1422
      %v1424 = vrot.slane %v1334, %v1423
      %v1425 = vlaneseq
      %v1426 = vshrl.u32 %v1425, 7
      %v1427 = vsub.s32 1, %v1426
      %v1428 = vrot.slane %v1338, %v1427
      %v1429 = vlaneseq
      %v1430 = vshrl.u32 %v1429, 7
      %v1431 = vsub.s32 1, %v1430
      %v1432 = vrot.slane %v1342, %v1431
      %v1433 = vlaneseq
      %v1434 = vshrl.u32 %v1433, 7
      %v1435 = vsub.s32 1, %v1434
      %v1436 = vrot.slane %v1346, %v1435
      %v1437 = vlaneseq
      %v1438 = vshrl.u32 %v1437, 7
      %v1439 = vsub.s32 1, %v1438
      %v1440 = vrot.slane %v1350, %v1439
      %v1441 = vlaneseq
      %v1442 = vshrl.u32 %v1441, 7
      %v1443 = vsub.s32 1, %v1442
      %v1444 = vrot.slane %v1354, %v1443
      %v1445 = vlaneseq
      %v1446 = vshrl.u32 %v1445, 7
      %v1447 = vsub.s32 1, %v1446
      %v1448 = vrot.slane %v1358, %v1447
      %v1449 = vlaneseq
      %v1450 = vshrl.u32 %v1449, 7
      %v1451 = vsub.s32 1, %v1450
      %v1452 = vrot.slane %v1362, %v1451
      %v1453 = vlaneseq
      %v1454 = vshrl.u32 %v1453, 7
      %v1455 = vsub.s32 1, %v1454
      %v1456 = vrot.slane %v1366, %v1455
      %v1457 = vlaneseq
      %v1458 = vshrl.u32 %v1457, 7
      %v1459 = vsub.s32 1, %v1458
      %v1460 = vrot.slane %v1370, %v1459
      %v1461 = vlaneseq
      %v1462 = vshrl.u32 %v1461, 7
      %v1463 = vsub.s32 1, %v1462
      %v1464 = vrot.slane %v1374, %v1463
      %v1465 = vsel %vm1262, %v1396, 0.0
      %v1466 = vsel %vm1263, %v1400, 0.0
      %v1467 = vsel %vm1264, %v1404, 0.0
      %v1468 = vsel %vm1265, %v1408, 0.0
      %v1469 = vsel %vm1266, %v1412, 0.0
      %v1470 = vsel %vm1267, %v1416, 0.0
      %v1471 = vsel %vm1268, %v1420, 0.0
      %v1472 = vsel %vm1269, %v1424, 0.0
      %v1473 = vsel %vm1270, %v1428, 0.0
      %v1474 = vsel %vm1271, %v1432, 0.0
      %v1475 = vsel %vm1272, %v1436, 0.0
      %v1476 = vsel %vm1273, %v1440, 0.0
      %v1477 = vsel %vm1274, %v1444, 0.0
      %v1478 = vsel %vm1275, %v1448, 0.0
      %v1479 = vsel %vm1276, %v1452, 0.0
      %v1480 = vsel %vm1277, %v1456, 0.0
      %v1481 = vsel %vm1278, %v1460, 0.0
      %v1482 = vsel %vm1279, %v1464, 0.0
      %v1483 = vsel %vm1280, %v1396, 0.0
      %v1484 = vsel %vm1281, %v1400, 0.0
      %v1485 = vsel %vm1282, %v1404, 0.0
      %v1486 = vsel %vm1283, %v1408, 0.0
      %v1487 = vsel %vm1284, %v1412, 0.0
      %v1488 = vsel %vm1285, %v1416, 0.0
      %v1489 = vsel %vm1286, %v1420, 0.0
      %v1490 = vsel %vm1287, %v1424, 0.0
      %v1491 = vsel %vm1288, %v1428, 0.0
      %v1492 = vsel %vm1289, %v1432, 0.0
      %v1493 = vsel %vm1290, %v1436, 0.0
      %v1494 = vsel %vm1291, %v1440, 0.0
      %v1495 = vsel %vm1292, %v1444, 0.0
      %v1496 = vsel %vm1293, %v1448, 0.0
      %v1497 = vsel %vm1294, %v1452, 0.0
      %v1498 = vsel %vm1295, %v1456, 0.0
      %v1499 = vsel %vm1296, %v1460, 0.0
      %v1500 = vsel %vm1297, %v1464, 0.0
      %v1501 = vlaneseq
      %v1502 = vshrl.u32 %v1501, 7
      %v1503 = vsub.s32 1, %v1502
      %v1504 = vrot.slane %v694, %v1503
      %v1505 = vlaneseq
      %v1506 = vshrl.u32 %v1505, 7
      %v1507 = vsub.s32 3, %v1506
      %v1508 = vrot.slane %v694, %v1507
      %v1509 = vlaneseq
      %v1510 = vshrl.u32 %v1509, 7
      %v1511 = vsub.s32 5, %v1510
      %v1512 = vrot.slane %v694, %v1511
      %v1513 = vlaneseq
      %v1514 = vshrl.u32 %v1513, 7
      %v1515 = vsub.s32 7, %v1514
      %v1516 = vrot.slane %v694, %v1515
      %v1517 = vlaneseq
      %v1518 = vshrl.u32 %v1517, 7
      %v1519 = vsub.s32 1, %v1518
      %v1520 = vrot.slane %v695, %v1519
      %v1521 = vlaneseq
      %v1522 = vshrl.u32 %v1521, 7
      %v1523 = vsub.s32 3, %v1522
      %v1524 = vrot.slane %v695, %v1523
      %v1525 = vlaneseq
      %v1526 = vshrl.u32 %v1525, 7
      %v1527 = vsub.s32 5, %v1526
      %v1528 = vrot.slane %v695, %v1527
      %v1529 = vlaneseq
      %v1530 = vshrl.u32 %v1529, 7
      %v1531 = vsub.s32 7, %v1530
      %v1532 = vrot.slane %v695, %v1531
      %v1533 = vlaneseq
      %v1534 = vshrl.u32 %v1533, 7
      %v1535 = vsub.s32 1, %v1534
      %v1536 = vrot.slane %v696, %v1535
      %v1537 = vlaneseq
      %v1538 = vshrl.u32 %v1537, 7
      %v1539 = vsub.s32 3, %v1538
      %v1540 = vrot.slane %v696, %v1539
      %v1541 = vlaneseq
      %v1542 = vshrl.u32 %v1541, 7
      %v1543 = vsub.s32 5, %v1542
      %v1544 = vrot.slane %v696, %v1543
      %v1545 = vlaneseq
      %v1546 = vshrl.u32 %v1545, 7
      %v1547 = vsub.s32 7, %v1546
      %v1548 = vrot.slane %v696, %v1547
      %v1549 = vlaneseq
      %v1550 = vshrl.u32 %v1549, 7
      %v1551 = vsub.s32 1, %v1550
      %v1552 = vrot.slane %v697, %v1551
      %v1553 = vlaneseq
      %v1554 = vshrl.u32 %v1553, 7
      %v1555 = vsub.s32 3, %v1554
      %v1556 = vrot.slane %v697, %v1555
      %v1557 = vlaneseq
      %v1558 = vshrl.u32 %v1557, 7
      %v1559 = vsub.s32 5, %v1558
      %v1560 = vrot.slane %v697, %v1559
      %v1561 = vlaneseq
      %v1562 = vshrl.u32 %v1561, 7
      %v1563 = vsub.s32 7, %v1562
      %v1564 = vrot.slane %v697, %v1563
      %v1565 = vlaneseq
      %v1566 = vshrl.u32 %v1565, 7
      %v1567 = vsub.s32 1, %v1566
      %v1568 = vrot.slane %v698, %v1567
      %v1569 = vlaneseq
      %v1570 = vshrl.u32 %v1569, 7
      %v1571 = vsub.s32 3, %v1570
      %v1572 = vrot.slane %v698, %v1571
      %v1573 = vlaneseq
      %v1574 = vshrl.u32 %v1573, 7
      %v1575 = vsub.s32 1, %v1574
      %v1576 = vrot.slane %v1504, %v1575
      %v1577 = vlaneseq
      %v1578 = vshrl.u32 %v1577, 7
      %v1579 = vsub.s32 1, %v1578
      %v1580 = vrot.slane %v1508, %v1579
      %v1581 = vlaneseq
      %v1582 = vshrl.u32 %v1581, 7
      %v1583 = vsub.s32 1, %v1582
      %v1584 = vrot.slane %v1512, %v1583
      %v1585 = vlaneseq
      %v1586 = vshrl.u32 %v1585, 7
      %v1587 = vsub.s32 1, %v1586
      %v1588 = vrot.slane %v1516, %v1587
      %v1589 = vlaneseq
      %v1590 = vshrl.u32 %v1589, 7
      %v1591 = vsub.s32 1, %v1590
      %v1592 = vrot.slane %v1520, %v1591
      %v1593 = vlaneseq
      %v1594 = vshrl.u32 %v1593, 7
      %v1595 = vsub.s32 1, %v1594
      %v1596 = vrot.slane %v1524, %v1595
      %v1597 = vlaneseq
      %v1598 = vshrl.u32 %v1597, 7
      %v1599 = vsub.s32 1, %v1598
      %v1600 = vrot.slane %v1528, %v1599
      %v1601 = vlaneseq
      %v1602 = vshrl.u32 %v1601, 7
      %v1603 = vsub.s32 1, %v1602
      %v1604 = vrot.slane %v1532, %v1603
      %v1605 = vlaneseq
      %v1606 = vshrl.u32 %v1605, 7
      %v1607 = vsub.s32 1, %v1606
      %v1608 = vrot.slane %v1536, %v1607
      %v1609 = vlaneseq
      %v1610 = vshrl.u32 %v1609, 7
      %v1611 = vsub.s32 1, %v1610
      %v1612 = vrot.slane %v1540, %v1611
      %v1613 = vlaneseq
      %v1614 = vshrl.u32 %v1613, 7
      %v1615 = vsub.s32 1, %v1614
      %v1616 = vrot.slane %v1544, %v1615
      %v1617 = vlaneseq
      %v1618 = vshrl.u32 %v1617, 7
      %v1619 = vsub.s32 1, %v1618
      %v1620 = vrot.slane %v1548, %v1619
      %v1621 = vlaneseq
      %v1622 = vshrl.u32 %v1621, 7
      %v1623 = vsub.s32 1, %v1622
      %v1624 = vrot.slane %v1552, %v1623
      %v1625 = vlaneseq
      %v1626 = vshrl.u32 %v1625, 7
      %v1627 = vsub.s32 1, %v1626
      %v1628 = vrot.slane %v1556, %v1627
      %v1629 = vlaneseq
      %v1630 = vshrl.u32 %v1629, 7
      %v1631 = vsub.s32 1, %v1630
      %v1632 = vrot.slane %v1560, %v1631
      %v1633 = vlaneseq
      %v1634 = vshrl.u32 %v1633, 7
      %v1635 = vsub.s32 1, %v1634
      %v1636 = vrot.slane %v1564, %v1635
      %v1637 = vlaneseq
      %v1638 = vshrl.u32 %v1637, 7
      %v1639 = vsub.s32 1, %v1638
      %v1640 = vrot.slane %v1568, %v1639
      %v1641 = vlaneseq
      %v1642 = vshrl.u32 %v1641, 7
      %v1643 = vsub.s32 1, %v1642
      %v1644 = vrot.slane %v1572, %v1643
      %vm1645 = vcmp.eq.s32.totalorder %v192, %v1576
      %vm1646 = vcmp.eq.s32.totalorder %v192, %v1580
      %vm1647 = vcmp.eq.s32.totalorder %v192, %v1584
      %vm1648 = vcmp.eq.s32.totalorder %v192, %v1588
      %vm1649 = vcmp.eq.s32.totalorder %v192, %v1592
      %vm1650 = vcmp.eq.s32.totalorder %v192, %v1596
      %vm1651 = vcmp.eq.s32.totalorder %v192, %v1600
      %vm1652 = vcmp.eq.s32.totalorder %v192, %v1604
      %vm1653 = vcmp.eq.s32.totalorder %v192, %v1608
      %vm1654 = vcmp.eq.s32.totalorder %v192, %v1612
      %vm1655 = vcmp.eq.s32.totalorder %v192, %v1616
      %vm1656 = vcmp.eq.s32.totalorder %v192, %v1620
      %vm1657 = vcmp.eq.s32.totalorder %v192, %v1624
      %vm1658 = vcmp.eq.s32.totalorder %v192, %v1628
      %vm1659 = vcmp.eq.s32.totalorder %v192, %v1632
      %vm1660 = vcmp.eq.s32.totalorder %v192, %v1636
      %vm1661 = vcmp.eq.s32.totalorder %v192, %v1640
      %vm1662 = vcmp.eq.s32.totalorder %v192, %v1644
      %vm1663 = vcmp.eq.s32.totalorder %v193, %v1576
      %vm1664 = vcmp.eq.s32.totalorder %v193, %v1580
      %vm1665 = vcmp.eq.s32.totalorder %v193, %v1584
      %vm1666 = vcmp.eq.s32.totalorder %v193, %v1588
      %vm1667 = vcmp.eq.s32.totalorder %v193, %v1592
      %vm1668 = vcmp.eq.s32.totalorder %v193, %v1596
      %vm1669 = vcmp.eq.s32.totalorder %v193, %v1600
      %vm1670 = vcmp.eq.s32.totalorder %v193, %v1604
      %vm1671 = vcmp.eq.s32.totalorder %v193, %v1608
      %vm1672 = vcmp.eq.s32.totalorder %v193, %v1612
      %vm1673 = vcmp.eq.s32.totalorder %v193, %v1616
      %vm1674 = vcmp.eq.s32.totalorder %v193, %v1620
      %vm1675 = vcmp.eq.s32.totalorder %v193, %v1624
      %vm1676 = vcmp.eq.s32.totalorder %v193, %v1628
      %vm1677 = vcmp.eq.s32.totalorder %v193, %v1632
      %vm1678 = vcmp.eq.s32.totalorder %v193, %v1636
      %vm1679 = vcmp.eq.s32.totalorder %v193, %v1640
      %vm1680 = vcmp.eq.s32.totalorder %v193, %v1644
      %v1686 = vlaneseq
      %v1687 = vshrl.u32 %v1686, 7
      %v1688 = vsub.s32 1, %v1687
      %v1689 = vrot.slane %v286, %v1688
      %v1690 = vlaneseq
      %v1691 = vshrl.u32 %v1690, 7
      %v1692 = vsub.s32 3, %v1691
      %v1693 = vrot.slane %v286, %v1692
      %v1694 = vlaneseq
      %v1695 = vshrl.u32 %v1694, 7
      %v1696 = vsub.s32 5, %v1695
      %v1697 = vrot.slane %v286, %v1696
      %v1698 = vlaneseq
      %v1699 = vshrl.u32 %v1698, 7
      %v1700 = vsub.s32 7, %v1699
      %v1701 = vrot.slane %v286, %v1700
      %v1702 = vlaneseq
      %v1703 = vshrl.u32 %v1702, 7
      %v1704 = vsub.s32 1, %v1703
      %v1705 = vrot.slane %v287, %v1704
      %v1706 = vlaneseq
      %v1707 = vshrl.u32 %v1706, 7
      %v1708 = vsub.s32 3, %v1707
      %v1709 = vrot.slane %v287, %v1708
      %v1710 = vlaneseq
      %v1711 = vshrl.u32 %v1710, 7
      %v1712 = vsub.s32 5, %v1711
      %v1713 = vrot.slane %v287, %v1712
      %v1714 = vlaneseq
      %v1715 = vshrl.u32 %v1714, 7
      %v1716 = vsub.s32 7, %v1715
      %v1717 = vrot.slane %v287, %v1716
      %v1718 = vlaneseq
      %v1719 = vshrl.u32 %v1718, 7
      %v1720 = vsub.s32 1, %v1719
      %v1721 = vrot.slane %v288, %v1720
      %v1722 = vlaneseq
      %v1723 = vshrl.u32 %v1722, 7
      %v1724 = vsub.s32 3, %v1723
      %v1725 = vrot.slane %v288, %v1724
      %v1726 = vlaneseq
      %v1727 = vshrl.u32 %v1726, 7
      %v1728 = vsub.s32 5, %v1727
      %v1729 = vrot.slane %v288, %v1728
      %v1730 = vlaneseq
      %v1731 = vshrl.u32 %v1730, 7
      %v1732 = vsub.s32 7, %v1731
      %v1733 = vrot.slane %v288, %v1732
      %v1734 = vlaneseq
      %v1735 = vshrl.u32 %v1734, 7
      %v1736 = vsub.s32 1, %v1735
      %v1737 = vrot.slane %v289, %v1736
      %v1738 = vlaneseq
      %v1739 = vshrl.u32 %v1738, 7
      %v1740 = vsub.s32 3, %v1739
      %v1741 = vrot.slane %v289, %v1740
      %v1742 = vlaneseq
      %v1743 = vshrl.u32 %v1742, 7
      %v1744 = vsub.s32 5, %v1743
      %v1745 = vrot.slane %v289, %v1744
      %v1746 = vlaneseq
      %v1747 = vshrl.u32 %v1746, 7
      %v1748 = vsub.s32 7, %v1747
      %v1749 = vrot.slane %v289, %v1748
      %v1750 = vlaneseq
      %v1751 = vshrl.u32 %v1750, 7
      %v1752 = vsub.s32 1, %v1751
      %v1753 = vrot.slane %v290, %v1752
      %v1754 = vlaneseq
      %v1755 = vshrl.u32 %v1754, 7
      %v1756 = vsub.s32 3, %v1755
      %v1757 = vrot.slane %v290, %v1756
      %v1776 = vlaneseq
      %v1777 = vshrl.u32 %v1776, 7
      %v1778 = vsub.s32 1, %v1777
      %v1779 = vrot.slane %v1689, %v1778
      %v1780 = vlaneseq
      %v1781 = vshrl.u32 %v1780, 7
      %v1782 = vsub.s32 1, %v1781
      %v1783 = vrot.slane %v1693, %v1782
      %v1784 = vlaneseq
      %v1785 = vshrl.u32 %v1784, 7
      %v1786 = vsub.s32 1, %v1785
      %v1787 = vrot.slane %v1697, %v1786
      %v1788 = vlaneseq
      %v1789 = vshrl.u32 %v1788, 7
      %v1790 = vsub.s32 1, %v1789
      %v1791 = vrot.slane %v1701, %v1790
      %v1792 = vlaneseq
      %v1793 = vshrl.u32 %v1792, 7
      %v1794 = vsub.s32 1, %v1793
      %v1795 = vrot.slane %v1705, %v1794
      %v1796 = vlaneseq
      %v1797 = vshrl.u32 %v1796, 7
      %v1798 = vsub.s32 1, %v1797
      %v1799 = vrot.slane %v1709, %v1798
      %v1800 = vlaneseq
      %v1801 = vshrl.u32 %v1800, 7
      %v1802 = vsub.s32 1, %v1801
      %v1803 = vrot.slane %v1713, %v1802
      %v1804 = vlaneseq
      %v1805 = vshrl.u32 %v1804, 7
      %v1806 = vsub.s32 1, %v1805
      %v1807 = vrot.slane %v1717, %v1806
      %v1808 = vlaneseq
      %v1809 = vshrl.u32 %v1808, 7
      %v1810 = vsub.s32 1, %v1809
      %v1811 = vrot.slane %v1721, %v1810
      %v1812 = vlaneseq
      %v1813 = vshrl.u32 %v1812, 7
      %v1814 = vsub.s32 1, %v1813
      %v1815 = vrot.slane %v1725, %v1814
      %v1816 = vlaneseq
      %v1817 = vshrl.u32 %v1816, 7
      %v1818 = vsub.s32 1, %v1817
      %v1819 = vrot.slane %v1729, %v1818
      %v1820 = vlaneseq
      %v1821 = vshrl.u32 %v1820, 7
      %v1822 = vsub.s32 1, %v1821
      %v1823 = vrot.slane %v1733, %v1822
      %v1824 = vlaneseq
      %v1825 = vshrl.u32 %v1824, 7
      %v1826 = vsub.s32 1, %v1825
      %v1827 = vrot.slane %v1737, %v1826
      %v1828 = vlaneseq
      %v1829 = vshrl.u32 %v1828, 7
      %v1830 = vsub.s32 1, %v1829
      %v1831 = vrot.slane %v1741, %v1830
      %v1832 = vlaneseq
      %v1833 = vshrl.u32 %v1832, 7
      %v1834 = vsub.s32 1, %v1833
      %v1835 = vrot.slane %v1745, %v1834
      %v1836 = vlaneseq
      %v1837 = vshrl.u32 %v1836, 7
      %v1838 = vsub.s32 1, %v1837
      %v1839 = vrot.slane %v1749, %v1838
      %v1840 = vlaneseq
      %v1841 = vshrl.u32 %v1840, 7
      %v1842 = vsub.s32 1, %v1841
      %v1843 = vrot.slane %v1753, %v1842
      %v1844 = vlaneseq
      %v1845 = vshrl.u32 %v1844, 7
      %v1846 = vsub.s32 1, %v1845
      %v1847 = vrot.slane %v1757, %v1846
      %v1848 = vsel %vm1645, %v1779, 0.0
      %v1849 = vsel %vm1646, %v1783, 0.0
      %v1850 = vsel %vm1647, %v1787, 0.0
      %v1851 = vsel %vm1648, %v1791, 0.0
      %v1852 = vsel %vm1649, %v1795, 0.0
      %v1853 = vsel %vm1650, %v1799, 0.0
      %v1854 = vsel %vm1651, %v1803, 0.0
      %v1855 = vsel %vm1652, %v1807, 0.0
      %v1856 = vsel %vm1653, %v1811, 0.0
      %v1857 = vsel %vm1654, %v1815, 0.0
      %v1858 = vsel %vm1655, %v1819, 0.0
      %v1859 = vsel %vm1656, %v1823, 0.0
      %v1860 = vsel %vm1657, %v1827, 0.0
      %v1861 = vsel %vm1658, %v1831, 0.0
      %v1862 = vsel %vm1659, %v1835, 0.0
      %v1863 = vsel %vm1660, %v1839, 0.0
      %v1864 = vsel %vm1661, %v1843, 0.0
      %v1865 = vsel %vm1662, %v1847, 0.0
      %v1866 = vsel %vm1663, %v1779, 0.0
      %v1867 = vsel %vm1664, %v1783, 0.0
      %v1868 = vsel %vm1665, %v1787, 0.0
      %v1869 = vsel %vm1666, %v1791, 0.0
      %v1870 = vsel %vm1667, %v1795, 0.0
      %v1871 = vsel %vm1668, %v1799, 0.0
      %v1872 = vsel %vm1669, %v1803, 0.0
      %v1873 = vsel %vm1670, %v1807, 0.0
      %v1874 = vsel %vm1671, %v1811, 0.0
      %v1875 = vsel %vm1672, %v1815, 0.0
      %v1876 = vsel %vm1673, %v1819, 0.0
      %v1877 = vsel %vm1674, %v1823, 0.0
      %v1878 = vsel %vm1675, %v1827, 0.0
      %v1879 = vsel %vm1676, %v1831, 0.0
      %v1880 = vsel %vm1677, %v1835, 0.0
      %v1881 = vsel %vm1678, %v1839, 0.0
      %v1882 = vsel %vm1679, %v1843, 0.0
      %v1883 = vsel %vm1680, %v1847, 0.0
      %v1884 = vadd.f32 %v1465, %v1848
      %v1885 = vadd.f32 %v1466, %v1849
      %v1886 = vadd.f32 %v1467, %v1850
      %v1887 = vadd.f32 %v1468, %v1851
      %v1888 = vadd.f32 %v1469, %v1852
      %v1889 = vadd.f32 %v1470, %v1853
      %v1890 = vadd.f32 %v1471, %v1854
      %v1891 = vadd.f32 %v1472, %v1855
      %v1892 = vadd.f32 %v1473, %v1856
      %v1893 = vadd.f32 %v1474, %v1857
      %v1894 = vadd.f32 %v1475, %v1858
      %v1895 = vadd.f32 %v1476, %v1859
      %v1896 = vadd.f32 %v1477, %v1860
      %v1897 = vadd.f32 %v1478, %v1861
      %v1898 = vadd.f32 %v1479, %v1862
      %v1899 = vadd.f32 %v1480, %v1863
      %v1900 = vadd.f32 %v1481, %v1864
      %v1901 = vadd.f32 %v1482, %v1865
      %v1902 = vadd.f32 %v1483, %v1866
      %v1903 = vadd.f32 %v1484, %v1867
      %v1904 = vadd.f32 %v1485, %v1868
      %v1905 = vadd.f32 %v1486, %v1869
      %v1906 = vadd.f32 %v1487, %v1870
      %v1907 = vadd.f32 %v1488, %v1871
      %v1908 = vadd.f32 %v1489, %v1872
      %v1909 = vadd.f32 %v1490, %v1873
      %v1910 = vadd.f32 %v1491, %v1874
      %v1911 = vadd.f32 %v1492, %v1875
      %v1912 = vadd.f32 %v1493, %v1876
      %v1913 = vadd.f32 %v1494, %v1877
      %v1914 = vadd.f32 %v1495, %v1878
      %v1915 = vadd.f32 %v1496, %v1879
      %v1916 = vadd.f32 %v1497, %v1880
      %v1917 = vadd.f32 %v1498, %v1881
      %v1918 = vadd.f32 %v1499, %v1882
      %v1919 = vadd.f32 %v1500, %v1883
      %vm1920 = vcmask 130048
      %v1922 = vsel %vm1920, %v195, 0
      %v1925 = vsel %vm1920, %v196, 0
      %v1928 = vsel %vm1920, %v197, 0
      %v1931 = vsel %vm1920, %v198, 0
      %v1934 = vsel %vm1920, %v199, 0
      %v1937 = vsel %vm1920, %v200, 0
      %v1940 = vsel %vm1920, %v201, 0
      %v1943 = vsel %vm1920, %v202, 0
      %v1946 = vsel %vm1920, %v203, 0
      %v1949 = vsel %vm1920, %v204, 0
      %v1952 = vsel %vm1920, %v205, 0
      %v1955 = vsel %vm1920, %v206, 0
      %v1958 = vsel %vm1920, %v207, 0
      %v1961 = vsel %vm1920, %v208, 0
      %v1964 = vsel %vm1920, %v209, 0
      %v1967 = vsel %vm1920, %v210, 0
      %1969 = vmatprep.subr.mxu0 %v1885
      %1970 = vmatpush1.msra.mxu0 %v1884
      %1971 = vmatprep.subr.mxu0 %v1903
      %1972 = vmatpush1.msra.mxu0 %v1902
      %1973 = vmatprep.subr.mxu0 0.0
      %1974 = vmatpush1.msra.mxu0 0.0
      %1975 = vmatprep.subr.mxu0 0.0
      %1976 = vmatpush1.msra.mxu0 0.0
      %1977 = vmatprep.subr.mxu0 0.0
      %1978 = vmatpush1.msra.mxu0 0.0
      %1979 = vmatprep.subr.mxu0 0.0
      %1980 = vmatpush1.msra.mxu0 0.0
      %1981 = vmatprep.subr.mxu0 0.0
      %1982 = vmatpush1.msra.mxu0 0.0
      %1983 = vmatprep.subr.mxu0 0.0
      %1984 = vmatpush1.msra.mxu0 0.0
      %1985 = vmatprep.subr.mxu0 0.0
      %1986 = vmatpush1.msra.mxu0 0.0
      %1987 = vmatprep.subr.mxu0 0.0
      %1988 = vmatpush1.msra.mxu0 0.0
      %1989 = vmatprep.subr.mxu0 0.0
      %1990 = vmatpush1.msra.mxu0 0.0
      %1991 = vmatprep.subr.mxu0 0.0
      %1992 = vmatpush1.msra.mxu0 0.0
      %1993 = vmatprep.subr.mxu0 0.0
      %1994 = vmatpush1.msra.mxu0 0.0
      %1995 = vmatprep.subr.mxu0 0.0
      %1996 = vmatpush1.msra.mxu0 0.0
      %1997 = vmatprep.subr.mxu0 0.0
      %1998 = vmatpush1.msra.mxu0 0.0
      %1999 = vmatprep.subr.mxu0 0.0
      %2000 = vmatpush1.msra.mxu0 0.0
      %2001 = vmatprep.subr.mxu0 0.0
      %2002 = vmatpush1.msra.mxu0 0.0
      %2003 = vmatprep.subr.mxu0 0.0
      %2004 = vmatpush1.msra.mxu0 0.0
      %2005 = vmatprep.subr.mxu0 0.0
      %2006 = vmatpush1.msra.mxu0 0.0
      %2007 = vmatprep.subr.mxu0 0.0
      %2008 = vmatpush1.msra.mxu0 0.0
      %2009 = vmatprep.subr.mxu0 0.0
      %2010 = vmatpush1.msra.mxu0 0.0
      %2011 = vmatprep.subr.mxu0 0.0
      %2012 = vmatpush1.msra.mxu0 0.0
      %2013 = vmatprep.subr.mxu0 0.0
      %2014 = vmatpush1.msra.mxu0 0.0
      %2015 = vmatprep.subr.mxu0 0.0
      %2016 = vmatpush1.msra.mxu0 0.0
      %2017 = vmatprep.subr.mxu0 0.0
      %2018 = vmatpush1.msra.mxu0 0.0
      %2019 = vmatprep.subr.mxu0 0.0
      %2020 = vmatpush1.msra.mxu0 0.0
      %2021 = vmatprep.subr.mxu0 0.0
      %2022 = vmatpush1.msra.mxu0 0.0
      %2023 = vmatprep.subr.mxu0 0.0
      %2024 = vmatpush1.msra.mxu0 0.0
      %2025 = vmatprep.subr.mxu0 0.0
      %2026 = vmatpush1.msra.mxu0 0.0
      %2027 = vmatprep.subr.mxu0 0.0
      %2028 = vmatpush1.msra.mxu0 0.0
      %2029 = vmatprep.subr.mxu0 0.0
      %2030 = vmatpush1.msra.mxu0 0.0
      %2031 = vmatprep.subr.mxu0 0.0
      %2032 = vmatpush1.msra.mxu0 0.0
      %2033 = vmatprep.mubr.f32.mxu0 0.0
      %2034 = vmatmul.mubr.f32.gmra.mrb[0].mxu0 %v1922
      %v2035 = vpop.f32.mrb[0].mxu0
      %v2036 = vadd.f32 0.0, %v2035
      %v2037 = vpop.f32.mrb[0].mxu0
      %v2038 = vadd.f32 0.0, %v2037
      %2039 = vmatprep.mubr.f32.mxu0 0.0
      %2040 = vmatmul.mubr.f32.gmra.mrb[0].mxu0 %v1925
      %v2041 = vpop.f32.mrb[0].mxu0
      %v2042 = vadd.f32 0.0, %v2041
      %v2043 = vpop.f32.mrb[0].mxu0
      %v2044 = vadd.f32 0.0, %v2043
      %2045 = vmatprep.mubr.f32.mxu0 0.0
      %2046 = vmatmul.mubr.f32.gmra.mrb[0].mxu0 %v1928
      %v2047 = vpop.f32.mrb[0].mxu0
      %v2048 = vadd.f32 0.0, %v2047
      %v2049 = vpop.f32.mrb[0].mxu0
      %v2050 = vadd.f32 0.0, %v2049
      %2051 = vmatprep.mubr.f32.mxu0 0.0
      %2052 = vmatmul.mubr.f32.gmra.mrb[0].mxu0 %v1931
      %v2053 = vpop.f32.mrb[0].mxu0
      %v2054 = vadd.f32 0.0, %v2053
      %v2055 = vpop.f32.mrb[0].mxu0
      %v2056 = vadd.f32 0.0, %v2055
      %2057 = vmatprep.mubr.f32.mxu0 0.0
      %2058 = vmatmul.mubr.f32.gmra.mrb[0].mxu0 %v1934
      %v2059 = vpop.f32.mrb[0].mxu0
      %v2060 = vadd.f32 0.0, %v2059
      %v2061 = vpop.f32.mrb[0].mxu0
      %v2062 = vadd.f32 0.0, %v2061
      %2063 = vmatprep.mubr.f32.mxu0 0.0
      %2064 = vmatmul.mubr.f32.gmra.mrb[0].mxu0 %v1937
      %v2065 = vpop.f32.mrb[0].mxu0
      %v2066 = vadd.f32 0.0, %v2065
      %v2067 = vpop.f32.mrb[0].mxu0
      %v2068 = vadd.f32 0.0, %v2067
      %2069 = vmatprep.mubr.f32.mxu0 0.0
      %2070 = vmatmul.mubr.f32.gmra.mrb[0].mxu0 %v1940
      %v2071 = vpop.f32.mrb[0].mxu0
      %v2072 = vadd.f32 0.0, %v2071
      %v2073 = vpop.f32.mrb[0].mxu0
      %v2074 = vadd.f32 0.0, %v2073
      %2075 = vmatprep.mubr.f32.mxu0 0.0
      %2076 = vmatmul.mubr.f32.gmra.mrb[0].mxu0 %v1943
      %v2077 = vpop.f32.mrb[0].mxu0
      %v2078 = vadd.f32 0.0, %v2077
      %v2079 = vpop.f32.mrb[0].mxu0
      %v2080 = vadd.f32 0.0, %v2079
      %2081 = vmatprep.mubr.f32.mxu0 0.0
      %2082 = vmatmul.mubr.f32.gmra.mrb[0].mxu0 %v1946
      %v2083 = vpop.f32.mrb[0].mxu0
      %v2084 = vadd.f32 0.0, %v2083
      %v2085 = vpop.f32.mrb[0].mxu0
      %v2086 = vadd.f32 0.0, %v2085
      %2087 = vmatprep.mubr.f32.mxu0 0.0
      %2088 = vmatmul.mubr.f32.gmra.mrb[0].mxu0 %v1949
      %v2089 = vpop.f32.mrb[0].mxu0
      %v2090 = vadd.f32 0.0, %v2089
      %v2091 = vpop.f32.mrb[0].mxu0
      %v2092 = vadd.f32 0.0, %v2091
      %2093 = vmatprep.mubr.f32.mxu0 0.0
      %2094 = vmatmul.mubr.f32.gmra.mrb[0].mxu0 %v1952
      %v2095 = vpop.f32.mrb[0].mxu0
      %v2096 = vadd.f32 0.0, %v2095
      %v2097 = vpop.f32.mrb[0].mxu0
      %v2098 = vadd.f32 0.0, %v2097
      %2099 = vmatprep.mubr.f32.mxu0 0.0
      %2100 = vmatmul.mubr.f32.gmra.mrb[0].mxu0 %v1955
      %v2101 = vpop.f32.mrb[0].mxu0
      %v2102 = vadd.f32 0.0, %v2101
      %v2103 = vpop.f32.mrb[0].mxu0
      %v2104 = vadd.f32 0.0, %v2103
      %2105 = vmatprep.mubr.f32.mxu0 0.0
      %2106 = vmatmul.mubr.f32.gmra.mrb[0].mxu0 %v1958
      %v2107 = vpop.f32.mrb[0].mxu0
      %v2108 = vadd.f32 0.0, %v2107
      %v2109 = vpop.f32.mrb[0].mxu0
      %v2110 = vadd.f32 0.0, %v2109
      %2111 = vmatprep.mubr.f32.mxu0 0.0
      %2112 = vmatmul.mubr.f32.gmra.mrb[0].mxu0 %v1961
      %v2113 = vpop.f32.mrb[0].mxu0
      %v2114 = vadd.f32 0.0, %v2113
      %v2115 = vpop.f32.mrb[0].mxu0
      %v2116 = vadd.f32 0.0, %v2115
      %2117 = vmatprep.mubr.f32.mxu0 0.0
      %2118 = vmatmul.mubr.f32.gmra.mrb[0].mxu0 %v1964
      %v2119 = vpop.f32.mrb[0].mxu0
      %v2120 = vadd.f32 0.0, %v2119
      %v2121 = vpop.f32.mrb[0].mxu0
      %v2122 = vadd.f32 0.0, %v2121
      %2123 = vmatprep.mubr.f32.mxu0 0.0
      %2124 = vmatmul.mubr.f32.gmra.mrb[0].mxu0 %v1967
      %v2125 = vpop.f32.mrb[0].mxu0
      %v2126 = vadd.f32 0.0, %v2125
      %v2127 = vpop.f32.mrb[0].mxu0
      %v2128 = vadd.f32 0.0, %v2127
      %2129 = vdwg.mxu0
      %2130 = vmatprep.subr.mxu0 %v1887
      %2131 = vmatpush1.msra.mxu0 %v1886
      %2132 = vmatprep.subr.mxu0 %v1905
      %2133 = vmatpush1.msra.mxu0 %v1904
      %2134 = vmatprep.subr.mxu0 0.0
      %2135 = vmatpush1.msra.mxu0 0.0
      %2136 = vmatprep.subr.mxu0 0.0
      %2137 = vmatpush1.msra.mxu0 0.0
      %2138 = vmatprep.subr.mxu0 0.0
      %2139 = vmatpush1.msra.mxu0 0.0
      %2140 = vmatprep.subr.mxu0 0.0
      %2141 = vmatpush1.msra.mxu0 0.0
      %2142 = vmatprep.subr.mxu0 0.0
      %2143 = vmatpush1.msra.mxu0 0.0
      %2144 = vmatprep.subr.mxu0 0.0
      %2145 = vmatpush1.msra.mxu0 0.0
      %2146 = vmatprep.subr.mxu0 0.0
      %2147 = vmatpush1.msra.mxu0 0.0
      %2148 = vmatprep.subr.mxu0 0.0
      %2149 = vmatpush1.msra.mxu0 0.0
      %2150 = vmatprep.subr.mxu0 0.0
      %2151 = vmatpush1.msra.mxu0 0.0
      %2152 = vmatprep.subr.mxu0 0.0
      %2153 = vmatpush1.msra.mxu0 0.0
      %2154 = vmatprep.subr.mxu0 0.0
      %2155 = vmatpush1.msra.mxu0 0.0
      %2156 = vmatprep.subr.mxu0 0.0
      %2157 = vmatpush1.msra.mxu0 0.0
      %2158 = vmatprep.subr.mxu0 0.0
      %2159 = vmatpush1.msra.mxu0 0.0
      %2160 = vmatprep.subr.mxu0 0.0
      %2161 = vmatpush1.msra.mxu0 0.0
      %2162 = vmatprep.subr.mxu0 0.0
      %2163 = vmatpush1.msra.mxu0 0.0
      %2164 = vmatprep.subr.mxu0 0.0
      %2165 = vmatpush1.msra.mxu0 0.0
      %2166 = vmatprep.subr.mxu0 0.0
      %2167 = vmatpush1.msra.mxu0 0.0
      %2168 = vmatprep.subr.mxu0 0.0
      %2169 = vmatpush1.msra.mxu0 0.0
      %2170 = vmatprep.subr.mxu0 0.0
      %2171 = vmatpush1.msra.mxu0 0.0
      %2172 = vmatprep.subr.mxu0 0.0
      %2173 = vmatpush1.msra.mxu0 0.0
      %2174 = vmatprep.subr.mxu0 0.0
      %2175 = vmatpush1.msra.mxu0 0.0
      %2176 = vmatprep.subr.mxu0 0.0
      %2177 = vmatpush1.msra.mxu0 0.0
      %2178 = vmatprep.subr.mxu0 0.0
      %2179 = vmatpush1.msra.mxu0 0.0
      %2180 = vmatprep.subr.mxu0 0.0
      %2181 = vmatpush1.msra.mxu0 0.0
      %2182 = vmatprep.subr.mxu0 0.0
      %2183 = vmatpush1.msra.mxu0 0.0
      %2184 = vmatprep.subr.mxu0 0.0
      %2185 = vmatpush1.msra.mxu0 0.0
      %2186 = vmatprep.subr.mxu0 0.0
      %2187 = vmatpush1.msra.mxu0 0.0
      %2188 = vmatprep.subr.mxu0 0.0
      %2189 = vmatpush1.msra.mxu0 0.0
      %2190 = vmatprep.subr.mxu0 0.0
      %2191 = vmatpush1.msra.mxu0 0.0
      %2192 = vmatprep.subr.mxu0 0.0
      %2193 = vmatpush1.msra.mxu0 0.0
      %2194 = vmatprep.mubr.f32.mxu0 0.0
      %2195 = vmatmul.mubr.f32.gmra.mrb[0].mxu0 %v1922
      %v2196 = vpop.f32.mrb[0].mxu0
      %v2197 = vadd.f32 0.0, %v2196
      %v2198 = vpop.f32.mrb[0].mxu0
      %v2199 = vadd.f32 0.0, %v2198
      %2200 = vmatprep.mubr.f32.mxu0 0.0
      %2201 = vmatmul.mubr.f32.gmra.mrb[0].mxu0 %v1925
      %v2202 = vpop.f32.mrb[0].mxu0
      %v2203 = vadd.f32 0.0, %v2202
      %v2204 = vpop.f32.mrb[0].mxu0
      %v2205 = vadd.f32 0.0, %v2204
      %2206 = vmatprep.mubr.f32.mxu0 0.0
      %2207 = vmatmul.mubr.f32.gmra.mrb[0].mxu0 %v1928
      %v2208 = vpop.f32.mrb[0].mxu0
      %v2209 = vadd.f32 0.0, %v2208
      %v2210 = vpop.f32.mrb[0].mxu0
      %v2211 = vadd.f32 0.0, %v2210
      %2212 = vmatprep.mubr.f32.mxu0 0.0
      %2213 = vmatmul.mubr.f32.gmra.mrb[0].mxu0 %v1931
      %v2214 = vpop.f32.mrb[0].mxu0
      %v2215 = vadd.f32 0.0, %v2214
      %v2216 = vpop.f32.mrb[0].mxu0
      %v2217 = vadd.f32 0.0, %v2216
      %2218 = vmatprep.mubr.f32.mxu0 0.0
      %2219 = vmatmul.mubr.f32.gmra.mrb[0].mxu0 %v1934
      %v2220 = vpop.f32.mrb[0].mxu0
      %v2221 = vadd.f32 0.0, %v2220
      %v2222 = vpop.f32.mrb[0].mxu0
      %v2223 = vadd.f32 0.0, %v2222
      %2224 = vmatprep.mubr.f32.mxu0 0.0
      %2225 = vmatmul.mubr.f32.gmra.mrb[0].mxu0 %v1937
      %v2226 = vpop.f32.mrb[0].mxu0
      %v2227 = vadd.f32 0.0, %v2226
      %v2228 = vpop.f32.mrb[0].mxu0
      %v2229 = vadd.f32 0.0, %v2228
      %2230 = vmatprep.mubr.f32.mxu0 0.0
      %2231 = vmatmul.mubr.f32.gmra.mrb[0].mxu0 %v1940
      %v2232 = vpop.f32.mrb[0].mxu0
      %v2233 = vadd.f32 0.0, %v2232
      %v2234 = vpop.f32.mrb[0].mxu0
      %v2235 = vadd.f32 0.0, %v2234
      %2236 = vmatprep.mubr.f32.mxu0 0.0
      %2237 = vmatmul.mubr.f32.gmra.mrb[0].mxu0 %v1943
      %v2238 = vpop.f32.mrb[0].mxu0
      %v2239 = vadd.f32 0.0, %v2238
      %v2240 = vpop.f32.mrb[0].mxu0
      %v2241 = vadd.f32 0.0, %v2240
      %2242 = vmatprep.mubr.f32.mxu0 0.0
      %2243 = vmatmul.mubr.f32.gmra.mrb[0].mxu0 %v1946
      %v2244 = vpop.f32.mrb[0].mxu0
      %v2245 = vadd.f32 0.0, %v2244
      %v2246 = vpop.f32.mrb[0].mxu0
      %v2247 = vadd.f32 0.0, %v2246
      %2248 = vmatprep.mubr.f32.mxu0 0.0
      %2249 = vmatmul.mubr.f32.gmra.mrb[0].mxu0 %v1949
      %v2250 = vpop.f32.mrb[0].mxu0
      %v2251 = vadd.f32 0.0, %v2250
      %v2252 = vpop.f32.mrb[0].mxu0
      %v2253 = vadd.f32 0.0, %v2252
      %2254 = vmatprep.mubr.f32.mxu0 0.0
      %2255 = vmatmul.mubr.f32.gmra.mrb[0].mxu0 %v1952
      %v2256 = vpop.f32.mrb[0].mxu0
      %v2257 = vadd.f32 0.0, %v2256
      %v2258 = vpop.f32.mrb[0].mxu0
      %v2259 = vadd.f32 0.0, %v2258
      %2260 = vmatprep.mubr.f32.mxu0 0.0
      %2261 = vmatmul.mubr.f32.gmra.mrb[0].mxu0 %v1955
      %v2262 = vpop.f32.mrb[0].mxu0
      %v2263 = vadd.f32 0.0, %v2262
      %v2264 = vpop.f32.mrb[0].mxu0
      %v2265 = vadd.f32 0.0, %v2264
      %2266 = vmatprep.mubr.f32.mxu0 0.0
      %2267 = vmatmul.mubr.f32.gmra.mrb[0].mxu0 %v1958
      %v2268 = vpop.f32.mrb[0].mxu0
      %v2269 = vadd.f32 0.0, %v2268
      %v2270 = vpop.f32.mrb[0].mxu0
      %v2271 = vadd.f32 0.0, %v2270
      %2272 = vmatprep.mubr.f32.mxu0 0.0
      %2273 = vmatmul.mubr.f32.gmra.mrb[0].mxu0 %v1961
      %v2274 = vpop.f32.mrb[0].mxu0
      %v2275 = vadd.f32 0.0, %v2274
      %v2276 = vpop.f32.mrb[0].mxu0
      %v2277 = vadd.f32 0.0, %v2276
      %2278 = vmatprep.mubr.f32.mxu0 0.0
      %2279 = vmatmul.mubr.f32.gmra.mrb[0].mxu0 %v1964
      %v2280 = vpop.f32.mrb[0].mxu0
      %v2281 = vadd.f32 0.0, %v2280
      %v2282 = vpop.f32.mrb[0].mxu0
      %v2283 = vadd.f32 0.0, %v2282
      %2284 = vmatprep.mubr.f32.mxu0 0.0
      %2285 = vmatmul.mubr.f32.gmra.mrb[0].mxu0 %v1967
      %v2286 = vpop.f32.mrb[0].mxu0
      %v2287 = vadd.f32 0.0, %v2286
      %v2288 = vpop.f32.mrb[0].mxu0
      %v2289 = vadd.f32 0.0, %v2288
      %2290 = vdwg.mxu0
      %2291 = vmatprep.subr.mxu0 %v1889
      %2292 = vmatpush1.msra.mxu0 %v1888
      %2293 = vmatprep.subr.mxu0 %v1907
      %2294 = vmatpush1.msra.mxu0 %v1906
      %2295 = vmatprep.subr.mxu0 0.0
      %2296 = vmatpush1.msra.mxu0 0.0
      %2297 = vmatprep.subr.mxu0 0.0
      %2298 = vmatpush1.msra.mxu0 0.0
      %2299 = vmatprep.subr.mxu0 0.0
      %2300 = vmatpush1.msra.mxu0 0.0
      %2301 = vmatprep.subr.mxu0 0.0
      %2302 = vmatpush1.msra.mxu0 0.0
      %2303 = vmatprep.subr.mxu0 0.0
      %2304 = vmatpush1.msra.mxu0 0.0
      %2305 = vmatprep.subr.mxu0 0.0
      %2306 = vmatpush1.msra.mxu0 0.0
      %2307 = vmatprep.subr.mxu0 0.0
      %2308 = vmatpush1.msra.mxu0 0.0
      %2309 = vmatprep.subr.mxu0 0.0
      %2310 = vmatpush1.msra.mxu0 0.0
      %2311 = vmatprep.subr.mxu0 0.0
      %2312 = vmatpush1.msra.mxu0 0.0
      %2313 = vmatprep.subr.mxu0 0.0
      %2314 = vmatpush1.msra.mxu0 0.0
      %2315 = vmatprep.subr.mxu0 0.0
      %2316 = vmatpush1.msra.mxu0 0.0
      %2317 = vmatprep.subr.mxu0 0.0
      %2318 = vmatpush1.msra.mxu0 0.0
      %2319 = vmatprep.subr.mxu0 0.0
      %2320 = vmatpush1.msra.mxu0 0.0
      %2321 = vmatprep.subr.mxu0 0.0
      %2322 = vmatpush1.msra.mxu0 0.0
      %2323 = vmatprep.subr.mxu0 0.0
      %2324 = vmatpush1.msra.mxu0 0.0
      %2325 = vmatprep.subr.mxu0 0.0
      %2326 = vmatpush1.msra.mxu0 0.0
      %2327 = vmatprep.subr.mxu0 0.0
      %2328 = vmatpush1.msra.mxu0 0.0
      %2329 = vmatprep.subr.mxu0 0.0
      %2330 = vmatpush1.msra.mxu0 0.0
      %2331 = vmatprep.subr.mxu0 0.0
      %2332 = vmatpush1.msra.mxu0 0.0
      %2333 = vmatprep.subr.mxu0 0.0
      %2334 = vmatpush1.msra.mxu0 0.0
      %2335 = vmatprep.subr.mxu0 0.0
      %2336 = vmatpush1.msra.mxu0 0.0
      %2337 = vmatprep.subr.mxu0 0.0
      %2338 = vmatpush1.msra.mxu0 0.0
      %2339 = vmatprep.subr.mxu0 0.0
      %2340 = vmatpush1.msra.mxu0 0.0
      %2341 = vmatprep.subr.mxu0 0.0
      %2342 = vmatpush1.msra.mxu0 0.0
      %2343 = vmatprep.subr.mxu0 0.0
      %2344 = vmatpush1.msra.mxu0 0.0
      %2345 = vmatprep.subr.mxu0 0.0
      %2346 = vmatpush1.msra.mxu0 0.0
      %2347 = vmatprep.subr.mxu0 0.0
      %2348 = vmatpush1.msra.mxu0 0.0
      %2349 = vmatprep.subr.mxu0 0.0
      %2350 = vmatpush1.msra.mxu0 0.0
      %2351 = vmatprep.subr.mxu0 0.0
      %2352 = vmatpush1.msra.mxu0 0.0
      %2353 = vmatprep.subr.mxu0 0.0
      %2354 = vmatpush1.msra.mxu0 0.0
      %2355 = vmatprep.mubr.f32.mxu0 0.0
      %2356 = vmatmul.mubr.f32.gmra.mrb[0].mxu0 %v1922
      %v2357 = vpop.f32.mrb[0].mxu0
      %v2358 = vadd.f32 0.0, %v2357
      %v2359 = vpop.f32.mrb[0].mxu0
      %v2360 = vadd.f32 0.0, %v2359
      %2361 = vmatprep.mubr.f32.mxu0 0.0
      %2362 = vmatmul.mubr.f32.gmra.mrb[0].mxu0 %v1925
      %v2363 = vpop.f32.mrb[0].mxu0
      %v2364 = vadd.f32 0.0, %v2363
      %v2365 = vpop.f32.mrb[0].mxu0
      %v2366 = vadd.f32 0.0, %v2365
      %2367 = vmatprep.mubr.f32.mxu0 0.0
      %2368 = vmatmul.mubr.f32.gmra.mrb[0].mxu0 %v1928
      %v2369 = vpop.f32.mrb[0].mxu0
      %v2370 = vadd.f32 0.0, %v2369
      %v2371 = vpop.f32.mrb[0].mxu0
      %v2372 = vadd.f32 0.0, %v2371
      %2373 = vmatprep.mubr.f32.mxu0 0.0
      %2374 = vmatmul.mubr.f32.gmra.mrb[0].mxu0 %v1931
      %v2375 = vpop.f32.mrb[0].mxu0
      %v2376 = vadd.f32 0.0, %v2375
      %v2377 = vpop.f32.mrb[0].mxu0
      %v2378 = vadd.f32 0.0, %v2377
      %2379 = vmatprep.mubr.f32.mxu0 0.0
      %2380 = vmatmul.mubr.f32.gmra.mrb[0].mxu0 %v1934
      %v2381 = vpop.f32.mrb[0].mxu0
      %v2382 = vadd.f32 0.0, %v2381
      %v2383 = vpop.f32.mrb[0].mxu0
      %v2384 = vadd.f32 0.0, %v2383
      %2385 = vmatprep.mubr.f32.mxu0 0.0
      %2386 = vmatmul.mubr.f32.gmra.mrb[0].mxu0 %v1937
      %v2387 = vpop.f32.mrb[0].mxu0
      %v2388 = vadd.f32 0.0, %v2387
      %v2389 = vpop.f32.mrb[0].mxu0
      %v2390 = vadd.f32 0.0, %v2389
      %2391 = vmatprep.mubr.f32.mxu0 0.0
      %2392 = vmatmul.mubr.f32.gmra.mrb[0].mxu0 %v1940
      %v2393 = vpop.f32.mrb[0].mxu0
      %v2394 = vadd.f32 0.0, %v2393
      %v2395 = vpop.f32.mrb[0].mxu0
      %v2396 = vadd.f32 0.0, %v2395
      %2397 = vmatprep.mubr.f32.mxu0 0.0
      %2398 = vmatmul.mubr.f32.gmra.mrb[0].mxu0 %v1943
      %v2399 = vpop.f32.mrb[0].mxu0
      %v2400 = vadd.f32 0.0, %v2399
      %v2401 = vpop.f32.mrb[0].mxu0
      %v2402 = vadd.f32 0.0, %v2401
      %2403 = vmatprep.mubr.f32.mxu0 0.0
      %2404 = vmatmul.mubr.f32.gmra.mrb[0].mxu0 %v1946
      %v2405 = vpop.f32.mrb[0].mxu0
      %v2406 = vadd.f32 0.0, %v2405
      %v2407 = vpop.f32.mrb[0].mxu0
      %v2408 = vadd.f32 0.0, %v2407
      %2409 = vmatprep.mubr.f32.mxu0 0.0
      %2410 = vmatmul.mubr.f32.gmra.mrb[0].mxu0 %v1949
      %v2411 = vpop.f32.mrb[0].mxu0
      %v2412 = vadd.f32 0.0, %v2411
      %v2413 = vpop.f32.mrb[0].mxu0
      %v2414 = vadd.f32 0.0, %v2413
      %2415 = vmatprep.mubr.f32.mxu0 0.0
      %2416 = vmatmul.mubr.f32.gmra.mrb[0].mxu0 %v1952
      %v2417 = vpop.f32.mrb[0].mxu0
      %v2418 = vadd.f32 0.0, %v2417
      %v2419 = vpop.f32.mrb[0].mxu0
      %v2420 = vadd.f32 0.0, %v2419
      %2421 = vmatprep.mubr.f32.mxu0 0.0
      %2422 = vmatmul.mubr.f32.gmra.mrb[0].mxu0 %v1955
      %v2423 = vpop.f32.mrb[0].mxu0
      %v2424 = vadd.f32 0.0, %v2423
      %v2425 = vpop.f32.mrb[0].mxu0
      %v2426 = vadd.f32 0.0, %v2425
      %2427 = vmatprep.mubr.f32.mxu0 0.0
      %2428 = vmatmul.mubr.f32.gmra.mrb[0].mxu0 %v1958
      %v2429 = vpop.f32.mrb[0].mxu0
      %v2430 = vadd.f32 0.0, %v2429
      %v2431 = vpop.f32.mrb[0].mxu0
      %v2432 = vadd.f32 0.0, %v2431
      %2433 = vmatprep.mubr.f32.mxu0 0.0
      %2434 = vmatmul.mubr.f32.gmra.mrb[0].mxu0 %v1961
      %v2435 = vpop.f32.mrb[0].mxu0
      %v2436 = vadd.f32 0.0, %v2435
      %v2437 = vpop.f32.mrb[0].mxu0
      %v2438 = vadd.f32 0.0, %v2437
      %2439 = vmatprep.mubr.f32.mxu0 0.0
      %2440 = vmatmul.mubr.f32.gmra.mrb[0].mxu0 %v1964
      %v2441 = vpop.f32.mrb[0].mxu0
      %v2442 = vadd.f32 0.0, %v2441
      %v2443 = vpop.f32.mrb[0].mxu0
      %v2444 = vadd.f32 0.0, %v2443
      %2445 = vmatprep.mubr.f32.mxu0 0.0
      %2446 = vmatmul.mubr.f32.gmra.mrb[0].mxu0 %v1967
      %v2447 = vpop.f32.mrb[0].mxu0
      %v2448 = vadd.f32 0.0, %v2447
      %v2449 = vpop.f32.mrb[0].mxu0
      %v2450 = vadd.f32 0.0, %v2449
      %2451 = vdwg.mxu0
      %2452 = vmatprep.subr.mxu0 %v1891
      %2453 = vmatpush1.msra.mxu0 %v1890
      %2454 = vmatprep.subr.mxu0 %v1909
      %2455 = vmatpush1.msra.mxu0 %v1908
      %2456 = vmatprep.subr.mxu0 0.0
      %2457 = vmatpush1.msra.mxu0 0.0
      %2458 = vmatprep.subr.mxu0 0.0
      %2459 = vmatpush1.msra.mxu0 0.0
      %2460 = vmatprep.subr.mxu0 0.0
      %2461 = vmatpush1.msra.mxu0 0.0
      %2462 = vmatprep.subr.mxu0 0.0
      %2463 = vmatpush1.msra.mxu0 0.0
      %2464 = vmatprep.subr.mxu0 0.0
      %2465 = vmatpush1.msra.mxu0 0.0
      %2466 = vmatprep.subr.mxu0 0.0
      %2467 = vmatpush1.msra.mxu0 0.0
      %2468 = vmatprep.subr.mxu0 0.0
      %2469 = vmatpush1.msra.mxu0 0.0
      %2470 = vmatprep.subr.mxu0 0.0
      %2471 = vmatpush1.msra.mxu0 0.0
      %2472 = vmatprep.subr.mxu0 0.0
      %2473 = vmatpush1.msra.mxu0 0.0
      %2474 = vmatprep.subr.mxu0 0.0
      %2475 = vmatpush1.msra.mxu0 0.0
      %2476 = vmatprep.subr.mxu0 0.0
      %2477 = vmatpush1.msra.mxu0 0.0
      %2478 = vmatprep.subr.mxu0 0.0
      %2479 = vmatpush1.msra.mxu0 0.0
      %2480 = vmatprep.subr.mxu0 0.0
      %2481 = vmatpush1.msra.mxu0 0.0
      %2482 = vmatprep.subr.mxu0 0.0
      %2483 = vmatpush1.msra.mxu0 0.0
      %2484 = vmatprep.subr.mxu0 0.0
      %2485 = vmatpush1.msra.mxu0 0.0
      %2486 = vmatprep.subr.mxu0 0.0
      %2487 = vmatpush1.msra.mxu0 0.0
      %2488 = vmatprep.subr.mxu0 0.0
      %2489 = vmatpush1.msra.mxu0 0.0
      %2490 = vmatprep.subr.mxu0 0.0
      %2491 = vmatpush1.msra.mxu0 0.0
      %2492 = vmatprep.subr.mxu0 0.0
      %2493 = vmatpush1.msra.mxu0 0.0
      %2494 = vmatprep.subr.mxu0 0.0
      %2495 = vmatpush1.msra.mxu0 0.0
      %2496 = vmatprep.subr.mxu0 0.0
      %2497 = vmatpush1.msra.mxu0 0.0
      %2498 = vmatprep.subr.mxu0 0.0
      %2499 = vmatpush1.msra.mxu0 0.0
      %2500 = vmatprep.subr.mxu0 0.0
      %2501 = vmatpush1.msra.mxu0 0.0
      %2502 = vmatprep.subr.mxu0 0.0
      %2503 = vmatpush1.msra.mxu0 0.0
      %2504 = vmatprep.subr.mxu0 0.0
      %2505 = vmatpush1.msra.mxu0 0.0
      %2506 = vmatprep.subr.mxu0 0.0
      %2507 = vmatpush1.msra.mxu0 0.0
      %2508 = vmatprep.subr.mxu0 0.0
      %2509 = vmatpush1.msra.mxu0 0.0
      %2510 = vmatprep.subr.mxu0 0.0
      %2511 = vmatpush1.msra.mxu0 0.0
      %2512 = vmatprep.subr.mxu0 0.0
      %2513 = vmatpush1.msra.mxu0 0.0
      %2514 = vmatprep.subr.mxu0 0.0
      %2515 = vmatpush1.msra.mxu0 0.0
      %2516 = vmatprep.mubr.f32.mxu0 0.0
      %2517 = vmatmul.mubr.f32.gmra.mrb[0].mxu0 %v1922
      %v2518 = vpop.f32.mrb[0].mxu0
      %v2519 = vadd.f32 0.0, %v2518
      %v2520 = vpop.f32.mrb[0].mxu0
      %v2521 = vadd.f32 0.0, %v2520
      %2522 = vmatprep.mubr.f32.mxu0 0.0
      %2523 = vmatmul.mubr.f32.gmra.mrb[0].mxu0 %v1925
      %v2524 = vpop.f32.mrb[0].mxu0
      %v2525 = vadd.f32 0.0, %v2524
      %v2526 = vpop.f32.mrb[0].mxu0
      %v2527 = vadd.f32 0.0, %v2526
      %2528 = vmatprep.mubr.f32.mxu0 0.0
      %2529 = vmatmul.mubr.f32.gmra.mrb[0].mxu0 %v1928
      %v2530 = vpop.f32.mrb[0].mxu0
      %v2531 = vadd.f32 0.0, %v2530
      %v2532 = vpop.f32.mrb[0].mxu0
      %v2533 = vadd.f32 0.0, %v2532
      %2534 = vmatprep.mubr.f32.mxu0 0.0
      %2535 = vmatmul.mubr.f32.gmra.mrb[0].mxu0 %v1931
      %v2536 = vpop.f32.mrb[0].mxu0
      %v2537 = vadd.f32 0.0, %v2536
      %v2538 = vpop.f32.mrb[0].mxu0
      %v2539 = vadd.f32 0.0, %v2538
      %2540 = vmatprep.mubr.f32.mxu0 0.0
      %2541 = vmatmul.mubr.f32.gmra.mrb[0].mxu0 %v1934
      %v2542 = vpop.f32.mrb[0].mxu0
      %v2543 = vadd.f32 0.0, %v2542
      %v2544 = vpop.f32.mrb[0].mxu0
      %v2545 = vadd.f32 0.0, %v2544
      %2546 = vmatprep.mubr.f32.mxu0 0.0
      %2547 = vmatmul.mubr.f32.gmra.mrb[0].mxu0 %v1937
      %v2548 = vpop.f32.mrb[0].mxu0
      %v2549 = vadd.f32 0.0, %v2548
      %v2550 = vpop.f32.mrb[0].mxu0
      %v2551 = vadd.f32 0.0, %v2550
      %2552 = vmatprep.mubr.f32.mxu0 0.0
      %2553 = vmatmul.mubr.f32.gmra.mrb[0].mxu0 %v1940
      %v2554 = vpop.f32.mrb[0].mxu0
      %v2555 = vadd.f32 0.0, %v2554
      %v2556 = vpop.f32.mrb[0].mxu0
      %v2557 = vadd.f32 0.0, %v2556
      %2558 = vmatprep.mubr.f32.mxu0 0.0
      %2559 = vmatmul.mubr.f32.gmra.mrb[0].mxu0 %v1943
      %v2560 = vpop.f32.mrb[0].mxu0
      %v2561 = vadd.f32 0.0, %v2560
      %v2562 = vpop.f32.mrb[0].mxu0
      %v2563 = vadd.f32 0.0, %v2562
      %2564 = vmatprep.mubr.f32.mxu0 0.0
      %2565 = vmatmul.mubr.f32.gmra.mrb[0].mxu0 %v1946
      %v2566 = vpop.f32.mrb[0].mxu0
      %v2567 = vadd.f32 0.0, %v2566
      %v2568 = vpop.f32.mrb[0].mxu0
      %v2569 = vadd.f32 0.0, %v2568
      %2570 = vmatprep.mubr.f32.mxu0 0.0
      %2571 = vmatmul.mubr.f32.gmra.mrb[0].mxu0 %v1949
      %v2572 = vpop.f32.mrb[0].mxu0
      %v2573 = vadd.f32 0.0, %v2572
      %v2574 = vpop.f32.mrb[0].mxu0
      %v2575 = vadd.f32 0.0, %v2574
      %2576 = vmatprep.mubr.f32.mxu0 0.0
      %2577 = vmatmul.mubr.f32.gmra.mrb[0].mxu0 %v1952
      %v2578 = vpop.f32.mrb[0].mxu0
      %v2579 = vadd.f32 0.0, %v2578
      %v2580 = vpop.f32.mrb[0].mxu0
      %v2581 = vadd.f32 0.0, %v2580
      %2582 = vmatprep.mubr.f32.mxu0 0.0
      %2583 = vmatmul.mubr.f32.gmra.mrb[0].mxu0 %v1955
      %v2584 = vpop.f32.mrb[0].mxu0
      %v2585 = vadd.f32 0.0, %v2584
      %v2586 = vpop.f32.mrb[0].mxu0
      %v2587 = vadd.f32 0.0, %v2586
      %2588 = vmatprep.mubr.f32.mxu0 0.0
      %2589 = vmatmul.mubr.f32.gmra.mrb[0].mxu0 %v1958
      %v2590 = vpop.f32.mrb[0].mxu0
      %v2591 = vadd.f32 0.0, %v2590
      %v2592 = vpop.f32.mrb[0].mxu0
      %v2593 = vadd.f32 0.0, %v2592
      %2594 = vmatprep.mubr.f32.mxu0 0.0
      %2595 = vmatmul.mubr.f32.gmra.mrb[0].mxu0 %v1961
      %v2596 = vpop.f32.mrb[0].mxu0
      %v2597 = vadd.f32 0.0, %v2596
      %v2598 = vpop.f32.mrb[0].mxu0
      %v2599 = vadd.f32 0.0, %v2598
      %2600 = vmatprep.mubr.f32.mxu0 0.0
      %2601 = vmatmul.mubr.f32.gmra.mrb[0].mxu0 %v1964
      %v2602 = vpop.f32.mrb[0].mxu0
      %v2603 = vadd.f32 0.0, %v2602
      %v2604 = vpop.f32.mrb[0].mxu0
      %v2605 = vadd.f32 0.0, %v2604
      %2606 = vmatprep.mubr.f32.mxu0 0.0
      %2607 = vmatmul.mubr.f32.gmra.mrb[0].mxu0 %v1967
      %v2608 = vpop.f32.mrb[0].mxu0
      %v2609 = vadd.f32 0.0, %v2608
      %v2610 = vpop.f32.mrb[0].mxu0
      %v2611 = vadd.f32 0.0, %v2610
      %2612 = vdwg.mxu0
      %2613 = vmatprep.subr.mxu0 %v1893
      %2614 = vmatpush1.msra.mxu0 %v1892
      %2615 = vmatprep.subr.mxu0 %v1911
      %2616 = vmatpush1.msra.mxu0 %v1910
      %2617 = vmatprep.subr.mxu0 0.0
      %2618 = vmatpush1.msra.mxu0 0.0
      %2619 = vmatprep.subr.mxu0 0.0
      %2620 = vmatpush1.msra.mxu0 0.0
      %2621 = vmatprep.subr.mxu0 0.0
      %2622 = vmatpush1.msra.mxu0 0.0
      %2623 = vmatprep.subr.mxu0 0.0
      %2624 = vmatpush1.msra.mxu0 0.0
      %2625 = vmatprep.subr.mxu0 0.0
      %2626 = vmatpush1.msra.mxu0 0.0
      %2627 = vmatprep.subr.mxu0 0.0
      %2628 = vmatpush1.msra.mxu0 0.0
      %2629 = vmatprep.subr.mxu0 0.0
      %2630 = vmatpush1.msra.mxu0 0.0
      %2631 = vmatprep.subr.mxu0 0.0
      %2632 = vmatpush1.msra.mxu0 0.0
      %2633 = vmatprep.subr.mxu0 0.0
      %2634 = vmatpush1.msra.mxu0 0.0
      %2635 = vmatprep.subr.mxu0 0.0
      %2636 = vmatpush1.msra.mxu0 0.0
      %2637 = vmatprep.subr.mxu0 0.0
      %2638 = vmatpush1.msra.mxu0 0.0
      %2639 = vmatprep.subr.mxu0 0.0
      %2640 = vmatpush1.msra.mxu0 0.0
      %2641 = vmatprep.subr.mxu0 0.0
      %2642 = vmatpush1.msra.mxu0 0.0
      %2643 = vmatprep.subr.mxu0 0.0
      %2644 = vmatpush1.msra.mxu0 0.0
      %2645 = vmatprep.subr.mxu0 0.0
      %2646 = vmatpush1.msra.mxu0 0.0
      %2647 = vmatprep.subr.mxu0 0.0
      %2648 = vmatpush1.msra.mxu0 0.0
      %2649 = vmatprep.subr.mxu0 0.0
      %2650 = vmatpush1.msra.mxu0 0.0
      %2651 = vmatprep.subr.mxu0 0.0
      %2652 = vmatpush1.msra.mxu0 0.0
      %2653 = vmatprep.subr.mxu0 0.0
      %2654 = vmatpush1.msra.mxu0 0.0
      %2655 = vmatprep.subr.mxu0 0.0
      %2656 = vmatpush1.msra.mxu0 0.0
      %2657 = vmatprep.subr.mxu0 0.0
      %2658 = vmatpush1.msra.mxu0 0.0
      %2659 = vmatprep.subr.mxu0 0.0
      %2660 = vmatpush1.msra.mxu0 0.0
      %2661 = vmatprep.subr.mxu0 0.0
      %2662 = vmatpush1.msra.mxu0 0.0
      %2663 = vmatprep.subr.mxu0 0.0
      %2664 = vmatpush1.msra.mxu0 0.0
      %2665 = vmatprep.subr.mxu0 0.0
      %2666 = vmatpush1.msra.mxu0 0.0
      %2667 = vmatprep.subr.mxu0 0.0
      %2668 = vmatpush1.msra.mxu0 0.0
      %2669 = vmatprep.subr.mxu0 0.0
      %2670 = vmatpush1.msra.mxu0 0.0
      %2671 = vmatprep.subr.mxu0 0.0
      %2672 = vmatpush1.msra.mxu0 0.0
      %2673 = vmatprep.subr.mxu0 0.0
      %2674 = vmatpush1.msra.mxu0 0.0
      %2675 = vmatprep.subr.mxu0 0.0
      %2676 = vmatpush1.msra.mxu0 0.0
      %2677 = vmatprep.mubr.f32.mxu0 0.0
      %2678 = vmatmul.mubr.f32.gmra.mrb[0].mxu0 %v1922
      %v2679 = vpop.f32.mrb[0].mxu0
      %v2680 = vadd.f32 0.0, %v2679
      %v2681 = vpop.f32.mrb[0].mxu0
      %v2682 = vadd.f32 0.0, %v2681
      %2683 = vmatprep.mubr.f32.mxu0 0.0
      %2684 = vmatmul.mubr.f32.gmra.mrb[0].mxu0 %v1925
      %v2685 = vpop.f32.mrb[0].mxu0
      %v2686 = vadd.f32 0.0, %v2685
      %v2687 = vpop.f32.mrb[0].mxu0
      %v2688 = vadd.f32 0.0, %v2687
      %2689 = vmatprep.mubr.f32.mxu0 0.0
      %2690 = vmatmul.mubr.f32.gmra.mrb[0].mxu0 %v1928
      %v2691 = vpop.f32.mrb[0].mxu0
      %v2692 = vadd.f32 0.0, %v2691
      %v2693 = vpop.f32.mrb[0].mxu0
      %v2694 = vadd.f32 0.0, %v2693
      %2695 = vmatprep.mubr.f32.mxu0 0.0
      %2696 = vmatmul.mubr.f32.gmra.mrb[0].mxu0 %v1931
      %v2697 = vpop.f32.mrb[0].mxu0
      %v2698 = vadd.f32 0.0, %v2697
      %v2699 = vpop.f32.mrb[0].mxu0
      %v2700 = vadd.f32 0.0, %v2699
      %2701 = vmatprep.mubr.f32.mxu0 0.0
      %2702 = vmatmul.mubr.f32.gmra.mrb[0].mxu0 %v1934
      %v2703 = vpop.f32.mrb[0].mxu0
      %v2704 = vadd.f32 0.0, %v2703
      %v2705 = vpop.f32.mrb[0].mxu0
      %v2706 = vadd.f32 0.0, %v2705
      %2707 = vmatprep.mubr.f32.mxu0 0.0
      %2708 = vmatmul.mubr.f32.gmra.mrb[0].mxu0 %v1937
      %v2709 = vpop.f32.mrb[0].mxu0
      %v2710 = vadd.f32 0.0, %v2709
      %v2711 = vpop.f32.mrb[0].mxu0
      %v2712 = vadd.f32 0.0, %v2711
      %2713 = vmatprep.mubr.f32.mxu0 0.0
      %2714 = vmatmul.mubr.f32.gmra.mrb[0].mxu0 %v1940
      %v2715 = vpop.f32.mrb[0].mxu0
      %v2716 = vadd.f32 0.0, %v2715
      %v2717 = vpop.f32.mrb[0].mxu0
      %v2718 = vadd.f32 0.0, %v2717
      %2719 = vmatprep.mubr.f32.mxu0 0.0
      %2720 = vmatmul.mubr.f32.gmra.mrb[0].mxu0 %v1943
      %v2721 = vpop.f32.mrb[0].mxu0
      %v2722 = vadd.f32 0.0, %v2721
      %v2723 = vpop.f32.mrb[0].mxu0
      %v2724 = vadd.f32 0.0, %v2723
      %2725 = vmatprep.mubr.f32.mxu0 0.0
      %2726 = vmatmul.mubr.f32.gmra.mrb[0].mxu0 %v1946
      %v2727 = vpop.f32.mrb[0].mxu0
      %v2728 = vadd.f32 0.0, %v2727
      %v2729 = vpop.f32.mrb[0].mxu0
      %v2730 = vadd.f32 0.0, %v2729
      %2731 = vmatprep.mubr.f32.mxu0 0.0
      %2732 = vmatmul.mubr.f32.gmra.mrb[0].mxu0 %v1949
      %v2733 = vpop.f32.mrb[0].mxu0
      %v2734 = vadd.f32 0.0, %v2733
      %v2735 = vpop.f32.mrb[0].mxu0
      %v2736 = vadd.f32 0.0, %v2735
      %2737 = vmatprep.mubr.f32.mxu0 0.0
      %2738 = vmatmul.mubr.f32.gmra.mrb[0].mxu0 %v1952
      %v2739 = vpop.f32.mrb[0].mxu0
      %v2740 = vadd.f32 0.0, %v2739
      %v2741 = vpop.f32.mrb[0].mxu0
      %v2742 = vadd.f32 0.0, %v2741
      %2743 = vmatprep.mubr.f32.mxu0 0.0
      %2744 = vmatmul.mubr.f32.gmra.mrb[0].mxu0 %v1955
      %v2745 = vpop.f32.mrb[0].mxu0
      %v2746 = vadd.f32 0.0, %v2745
      %v2747 = vpop.f32.mrb[0].mxu0
      %v2748 = vadd.f32 0.0, %v2747
      %2749 = vmatprep.mubr.f32.mxu0 0.0
      %2750 = vmatmul.mubr.f32.gmra.mrb[0].mxu0 %v1958
      %v2751 = vpop.f32.mrb[0].mxu0
      %v2752 = vadd.f32 0.0, %v2751
      %v2753 = vpop.f32.mrb[0].mxu0
      %v2754 = vadd.f32 0.0, %v2753
      %2755 = vmatprep.mubr.f32.mxu0 0.0
      %2756 = vmatmul.mubr.f32.gmra.mrb[0].mxu0 %v1961
      %v2757 = vpop.f32.mrb[0].mxu0
      %v2758 = vadd.f32 0.0, %v2757
      %v2759 = vpop.f32.mrb[0].mxu0
      %v2760 = vadd.f32 0.0, %v2759
      %2761 = vmatprep.mubr.f32.mxu0 0.0
      %2762 = vmatmul.mubr.f32.gmra.mrb[0].mxu0 %v1964
      %v2763 = vpop.f32.mrb[0].mxu0
      %v2764 = vadd.f32 0.0, %v2763
      %v2765 = vpop.f32.mrb[0].mxu0
      %v2766 = vadd.f32 0.0, %v2765
      %2767 = vmatprep.mubr.f32.mxu0 0.0
      %2768 = vmatmul.mubr.f32.gmra.mrb[0].mxu0 %v1967
      %v2769 = vpop.f32.mrb[0].mxu0
      %v2770 = vadd.f32 0.0, %v2769
      %v2771 = vpop.f32.mrb[0].mxu0
      %v2772 = vadd.f32 0.0, %v2771
      %2773 = vdwg.mxu0
      %2774 = vmatprep.subr.mxu0 %v1895
      %2775 = vmatpush1.msra.mxu0 %v1894
      %2776 = vmatprep.subr.mxu0 %v1913
      %2777 = vmatpush1.msra.mxu0 %v1912
      %2778 = vmatprep.subr.mxu0 0.0
      %2779 = vmatpush1.msra.mxu0 0.0
      %2780 = vmatprep.subr.mxu0 0.0
      %2781 = vmatpush1.msra.mxu0 0.0
      %2782 = vmatprep.subr.mxu0 0.0
      %2783 = vmatpush1.msra.mxu0 0.0
      %2784 = vmatprep.subr.mxu0 0.0
      %2785 = vmatpush1.msra.mxu0 0.0
      %2786 = vmatprep.subr.mxu0 0.0
      %2787 = vmatpush1.msra.mxu0 0.0
      %2788 = vmatprep.subr.mxu0 0.0
      %2789 = vmatpush1.msra.mxu0 0.0
      %2790 = vmatprep.subr.mxu0 0.0
      %2791 = vmatpush1.msra.mxu0 0.0
      %2792 = vmatprep.subr.mxu0 0.0
      %2793 = vmatpush1.msra.mxu0 0.0
      %2794 = vmatprep.subr.mxu0 0.0
      %2795 = vmatpush1.msra.mxu0 0.0
      %2796 = vmatprep.subr.mxu0 0.0
      %2797 = vmatpush1.msra.mxu0 0.0
      %2798 = vmatprep.subr.mxu0 0.0
      %2799 = vmatpush1.msra.mxu0 0.0
      %2800 = vmatprep.subr.mxu0 0.0
      %2801 = vmatpush1.msra.mxu0 0.0
      %2802 = vmatprep.subr.mxu0 0.0
      %2803 = vmatpush1.msra.mxu0 0.0
      %2804 = vmatprep.subr.mxu0 0.0
      %2805 = vmatpush1.msra.mxu0 0.0
      %2806 = vmatprep.subr.mxu0 0.0
      %2807 = vmatpush1.msra.mxu0 0.0
      %2808 = vmatprep.subr.mxu0 0.0
      %2809 = vmatpush1.msra.mxu0 0.0
      %2810 = vmatprep.subr.mxu0 0.0
      %2811 = vmatpush1.msra.mxu0 0.0
      %2812 = vmatprep.subr.mxu0 0.0
      %2813 = vmatpush1.msra.mxu0 0.0
      %2814 = vmatprep.subr.mxu0 0.0
      %2815 = vmatpush1.msra.mxu0 0.0
      %2816 = vmatprep.subr.mxu0 0.0
      %2817 = vmatpush1.msra.mxu0 0.0
      %2818 = vmatprep.subr.mxu0 0.0
      %2819 = vmatpush1.msra.mxu0 0.0
      %2820 = vmatprep.subr.mxu0 0.0
      %2821 = vmatpush1.msra.mxu0 0.0
      %2822 = vmatprep.subr.mxu0 0.0
      %2823 = vmatpush1.msra.mxu0 0.0
      %2824 = vmatprep.subr.mxu0 0.0
      %2825 = vmatpush1.msra.mxu0 0.0
      %2826 = vmatprep.subr.mxu0 0.0
      %2827 = vmatpush1.msra.mxu0 0.0
      %2828 = vmatprep.subr.mxu0 0.0
      %2829 = vmatpush1.msra.mxu0 0.0
      %2830 = vmatprep.subr.mxu0 0.0
      %2831 = vmatpush1.msra.mxu0 0.0
      %2832 = vmatprep.subr.mxu0 0.0
      %2833 = vmatpush1.msra.mxu0 0.0
      %2834 = vmatprep.subr.mxu0 0.0
      %2835 = vmatpush1.msra.mxu0 0.0
      %2836 = vmatprep.subr.mxu0 0.0
      %2837 = vmatpush1.msra.mxu0 0.0
      %2838 = vmatprep.mubr.f32.mxu0 0.0
      %2839 = vmatmul.mubr.f32.gmra.mrb[0].mxu0 %v1922
      %v2840 = vpop.f32.mrb[0].mxu0
      %v2841 = vadd.f32 0.0, %v2840
      %v2842 = vpop.f32.mrb[0].mxu0
      %v2843 = vadd.f32 0.0, %v2842
      %2844 = vmatprep.mubr.f32.mxu0 0.0
      %2845 = vmatmul.mubr.f32.gmra.mrb[0].mxu0 %v1925
      %v2846 = vpop.f32.mrb[0].mxu0
      %v2847 = vadd.f32 0.0, %v2846
      %v2848 = vpop.f32.mrb[0].mxu0
      %v2849 = vadd.f32 0.0, %v2848
      %2850 = vmatprep.mubr.f32.mxu0 0.0
      %2851 = vmatmul.mubr.f32.gmra.mrb[0].mxu0 %v1928
      %v2852 = vpop.f32.mrb[0].mxu0
      %v2853 = vadd.f32 0.0, %v2852
      %v2854 = vpop.f32.mrb[0].mxu0
      %v2855 = vadd.f32 0.0, %v2854
      %2856 = vmatprep.mubr.f32.mxu0 0.0
      %2857 = vmatmul.mubr.f32.gmra.mrb[0].mxu0 %v1931
      %v2858 = vpop.f32.mrb[0].mxu0
      %v2859 = vadd.f32 0.0, %v2858
      %v2860 = vpop.f32.mrb[0].mxu0
      %v2861 = vadd.f32 0.0, %v2860
      %2862 = vmatprep.mubr.f32.mxu0 0.0
      %2863 = vmatmul.mubr.f32.gmra.mrb[0].mxu0 %v1934
      %v2864 = vpop.f32.mrb[0].mxu0
      %v2865 = vadd.f32 0.0, %v2864
      %v2866 = vpop.f32.mrb[0].mxu0
      %v2867 = vadd.f32 0.0, %v2866
      %2868 = vmatprep.mubr.f32.mxu0 0.0
      %2869 = vmatmul.mubr.f32.gmra.mrb[0].mxu0 %v1937
      %v2870 = vpop.f32.mrb[0].mxu0
      %v2871 = vadd.f32 0.0, %v2870
      %v2872 = vpop.f32.mrb[0].mxu0
      %v2873 = vadd.f32 0.0, %v2872
      %2874 = vmatprep.mubr.f32.mxu0 0.0
      %2875 = vmatmul.mubr.f32.gmra.mrb[0].mxu0 %v1940
      %v2876 = vpop.f32.mrb[0].mxu0
      %v2877 = vadd.f32 0.0, %v2876
      %v2878 = vpop.f32.mrb[0].mxu0
      %v2879 = vadd.f32 0.0, %v2878
      %2880 = vmatprep.mubr.f32.mxu0 0.0
      %2881 = vmatmul.mubr.f32.gmra.mrb[0].mxu0 %v1943
      %v2882 = vpop.f32.mrb[0].mxu0
      %v2883 = vadd.f32 0.0, %v2882
      %v2884 = vpop.f32.mrb[0].mxu0
      %v2885 = vadd.f32 0.0, %v2884
      %2886 = vmatprep.mubr.f32.mxu0 0.0
      %2887 = vmatmul.mubr.f32.gmra.mrb[0].mxu0 %v1946
      %v2888 = vpop.f32.mrb[0].mxu0
      %v2889 = vadd.f32 0.0, %v2888
      %v2890 = vpop.f32.mrb[0].mxu0
      %v2891 = vadd.f32 0.0, %v2890
      %2892 = vmatprep.mubr.f32.mxu0 0.0
      %2893 = vmatmul.mubr.f32.gmra.mrb[0].mxu0 %v1949
      %v2894 = vpop.f32.mrb[0].mxu0
      %v2895 = vadd.f32 0.0, %v2894
      %v2896 = vpop.f32.mrb[0].mxu0
      %v2897 = vadd.f32 0.0, %v2896
      %2898 = vmatprep.mubr.f32.mxu0 0.0
      %2899 = vmatmul.mubr.f32.gmra.mrb[0].mxu0 %v1952
      %v2900 = vpop.f32.mrb[0].mxu0
      %v2901 = vadd.f32 0.0, %v2900
      %v2902 = vpop.f32.mrb[0].mxu0
      %v2903 = vadd.f32 0.0, %v2902
      %2904 = vmatprep.mubr.f32.mxu0 0.0
      %2905 = vmatmul.mubr.f32.gmra.mrb[0].mxu0 %v1955
      %v2906 = vpop.f32.mrb[0].mxu0
      %v2907 = vadd.f32 0.0, %v2906
      %v2908 = vpop.f32.mrb[0].mxu0
      %v2909 = vadd.f32 0.0, %v2908
      %2910 = vmatprep.mubr.f32.mxu0 0.0
      %2911 = vmatmul.mubr.f32.gmra.mrb[0].mxu0 %v1958
      %v2912 = vpop.f32.mrb[0].mxu0
      %v2913 = vadd.f32 0.0, %v2912
      %v2914 = vpop.f32.mrb[0].mxu0
      %v2915 = vadd.f32 0.0, %v2914
      %2916 = vmatprep.mubr.f32.mxu0 0.0
      %2917 = vmatmul.mubr.f32.gmra.mrb[0].mxu0 %v1961
      %v2918 = vpop.f32.mrb[0].mxu0
      %v2919 = vadd.f32 0.0, %v2918
      %v2920 = vpop.f32.mrb[0].mxu0
      %v2921 = vadd.f32 0.0, %v2920
      %2922 = vmatprep.mubr.f32.mxu0 0.0
      %2923 = vmatmul.mubr.f32.gmra.mrb[0].mxu0 %v1964
      %v2924 = vpop.f32.mrb[0].mxu0
      %v2925 = vadd.f32 0.0, %v2924
      %v2926 = vpop.f32.mrb[0].mxu0
      %v2927 = vadd.f32 0.0, %v2926
      %2928 = vmatprep.mubr.f32.mxu0 0.0
      %2929 = vmatmul.mubr.f32.gmra.mrb[0].mxu0 %v1967
      %v2930 = vpop.f32.mrb[0].mxu0
      %v2931 = vadd.f32 0.0, %v2930
      %v2932 = vpop.f32.mrb[0].mxu0
      %v2933 = vadd.f32 0.0, %v2932
      %2934 = vdwg.mxu0
      %2935 = vmatprep.subr.mxu0 %v1897
      %2936 = vmatpush1.msra.mxu0 %v1896
      %2937 = vmatprep.subr.mxu0 %v1915
      %2938 = vmatpush1.msra.mxu0 %v1914
      %2939 = vmatprep.subr.mxu0 0.0
      %2940 = vmatpush1.msra.mxu0 0.0
      %2941 = vmatprep.subr.mxu0 0.0
      %2942 = vmatpush1.msra.mxu0 0.0
      %2943 = vmatprep.subr.mxu0 0.0
      %2944 = vmatpush1.msra.mxu0 0.0
      %2945 = vmatprep.subr.mxu0 0.0
      %2946 = vmatpush1.msra.mxu0 0.0
      %2947 = vmatprep.subr.mxu0 0.0
      %2948 = vmatpush1.msra.mxu0 0.0
      %2949 = vmatprep.subr.mxu0 0.0
      %2950 = vmatpush1.msra.mxu0 0.0
      %2951 = vmatprep.subr.mxu0 0.0
      %2952 = vmatpush1.msra.mxu0 0.0
      %2953 = vmatprep.subr.mxu0 0.0
      %2954 = vmatpush1.msra.mxu0 0.0
      %2955 = vmatprep.subr.mxu0 0.0
      %2956 = vmatpush1.msra.mxu0 0.0
      %2957 = vmatprep.subr.mxu0 0.0
      %2958 = vmatpush1.msra.mxu0 0.0
      %2959 = vmatprep.subr.mxu0 0.0
      %2960 = vmatpush1.msra.mxu0 0.0
      %2961 = vmatprep.subr.mxu0 0.0
      %2962 = vmatpush1.msra.mxu0 0.0
      %2963 = vmatprep.subr.mxu0 0.0
      %2964 = vmatpush1.msra.mxu0 0.0
      %2965 = vmatprep.subr.mxu0 0.0
      %2966 = vmatpush1.msra.mxu0 0.0
      %2967 = vmatprep.subr.mxu0 0.0
      %2968 = vmatpush1.msra.mxu0 0.0
      %2969 = vmatprep.subr.mxu0 0.0
      %2970 = vmatpush1.msra.mxu0 0.0
      %2971 = vmatprep.subr.mxu0 0.0
      %2972 = vmatpush1.msra.mxu0 0.0
      %2973 = vmatprep.subr.mxu0 0.0
      %2974 = vmatpush1.msra.mxu0 0.0
      %2975 = vmatprep.subr.mxu0 0.0
      %2976 = vmatpush1.msra.mxu0 0.0
      %2977 = vmatprep.subr.mxu0 0.0
      %2978 = vmatpush1.msra.mxu0 0.0
      %2979 = vmatprep.subr.mxu0 0.0
      %2980 = vmatpush1.msra.mxu0 0.0
      %2981 = vmatprep.subr.mxu0 0.0
      %2982 = vmatpush1.msra.mxu0 0.0
      %2983 = vmatprep.subr.mxu0 0.0
      %2984 = vmatpush1.msra.mxu0 0.0
      %2985 = vmatprep.subr.mxu0 0.0
      %2986 = vmatpush1.msra.mxu0 0.0
      %2987 = vmatprep.subr.mxu0 0.0
      %2988 = vmatpush1.msra.mxu0 0.0
      %2989 = vmatprep.subr.mxu0 0.0
      %2990 = vmatpush1.msra.mxu0 0.0
      %2991 = vmatprep.subr.mxu0 0.0
      %2992 = vmatpush1.msra.mxu0 0.0
      %2993 = vmatprep.subr.mxu0 0.0
      %2994 = vmatpush1.msra.mxu0 0.0
      %2995 = vmatprep.subr.mxu0 0.0
      %2996 = vmatpush1.msra.mxu0 0.0
      %2997 = vmatprep.subr.mxu0 0.0
      %2998 = vmatpush1.msra.mxu0 0.0
      %2999 = vmatprep.mubr.f32.mxu0 0.0
      %3000 = vmatmul.mubr.f32.gmra.mrb[0].mxu0 %v1922
      %v3001 = vpop.f32.mrb[0].mxu0
      %v3002 = vadd.f32 0.0, %v3001
      %v3003 = vpop.f32.mrb[0].mxu0
      %v3004 = vadd.f32 0.0, %v3003
      %3005 = vmatprep.mubr.f32.mxu0 0.0
      %3006 = vmatmul.mubr.f32.gmra.mrb[0].mxu0 %v1925
      %v3007 = vpop.f32.mrb[0].mxu0
      %v3008 = vadd.f32 0.0, %v3007
      %v3009 = vpop.f32.mrb[0].mxu0
      %v3010 = vadd.f32 0.0, %v3009
      %3011 = vmatprep.mubr.f32.mxu0 0.0
      %3012 = vmatmul.mubr.f32.gmra.mrb[0].mxu0 %v1928
      %v3013 = vpop.f32.mrb[0].mxu0
      %v3014 = vadd.f32 0.0, %v3013
      %v3015 = vpop.f32.mrb[0].mxu0
      %v3016 = vadd.f32 0.0, %v3015
      %3017 = vmatprep.mubr.f32.mxu0 0.0
      %3018 = vmatmul.mubr.f32.gmra.mrb[0].mxu0 %v1931
      %v3019 = vpop.f32.mrb[0].mxu0
      %v3020 = vadd.f32 0.0, %v3019
      %v3021 = vpop.f32.mrb[0].mxu0
      %v3022 = vadd.f32 0.0, %v3021
      %3023 = vmatprep.mubr.f32.mxu0 0.0
      %3024 = vmatmul.mubr.f32.gmra.mrb[0].mxu0 %v1934
      %v3025 = vpop.f32.mrb[0].mxu0
      %v3026 = vadd.f32 0.0, %v3025
      %v3027 = vpop.f32.mrb[0].mxu0
      %v3028 = vadd.f32 0.0, %v3027
      %3029 = vmatprep.mubr.f32.mxu0 0.0
      %3030 = vmatmul.mubr.f32.gmra.mrb[0].mxu0 %v1937
      %v3031 = vpop.f32.mrb[0].mxu0
      %v3032 = vadd.f32 0.0, %v3031
      %v3033 = vpop.f32.mrb[0].mxu0
      %v3034 = vadd.f32 0.0, %v3033
      %3035 = vmatprep.mubr.f32.mxu0 0.0
      %3036 = vmatmul.mubr.f32.gmra.mrb[0].mxu0 %v1940
      %v3037 = vpop.f32.mrb[0].mxu0
      %v3038 = vadd.f32 0.0, %v3037
      %v3039 = vpop.f32.mrb[0].mxu0
      %v3040 = vadd.f32 0.0, %v3039
      %3041 = vmatprep.mubr.f32.mxu0 0.0
      %3042 = vmatmul.mubr.f32.gmra.mrb[0].mxu0 %v1943
      %v3043 = vpop.f32.mrb[0].mxu0
      %v3044 = vadd.f32 0.0, %v3043
      %v3045 = vpop.f32.mrb[0].mxu0
      %v3046 = vadd.f32 0.0, %v3045
      %3047 = vmatprep.mubr.f32.mxu0 0.0
      %3048 = vmatmul.mubr.f32.gmra.mrb[0].mxu0 %v1946
      %v3049 = vpop.f32.mrb[0].mxu0
      %v3050 = vadd.f32 0.0, %v3049
      %v3051 = vpop.f32.mrb[0].mxu0
      %v3052 = vadd.f32 0.0, %v3051
      %3053 = vmatprep.mubr.f32.mxu0 0.0
      %3054 = vmatmul.mubr.f32.gmra.mrb[0].mxu0 %v1949
      %v3055 = vpop.f32.mrb[0].mxu0
      %v3056 = vadd.f32 0.0, %v3055
      %v3057 = vpop.f32.mrb[0].mxu0
      %v3058 = vadd.f32 0.0, %v3057
      %3059 = vmatprep.mubr.f32.mxu0 0.0
      %3060 = vmatmul.mubr.f32.gmra.mrb[0].mxu0 %v1952
      %v3061 = vpop.f32.mrb[0].mxu0
      %v3062 = vadd.f32 0.0, %v3061
      %v3063 = vpop.f32.mrb[0].mxu0
      %v3064 = vadd.f32 0.0, %v3063
      %3065 = vmatprep.mubr.f32.mxu0 0.0
      %3066 = vmatmul.mubr.f32.gmra.mrb[0].mxu0 %v1955
      %v3067 = vpop.f32.mrb[0].mxu0
      %v3068 = vadd.f32 0.0, %v3067
      %v3069 = vpop.f32.mrb[0].mxu0
      %v3070 = vadd.f32 0.0, %v3069
      %3071 = vmatprep.mubr.f32.mxu0 0.0
      %3072 = vmatmul.mubr.f32.gmra.mrb[0].mxu0 %v1958
      %v3073 = vpop.f32.mrb[0].mxu0
      %v3074 = vadd.f32 0.0, %v3073
      %v3075 = vpop.f32.mrb[0].mxu0
      %v3076 = vadd.f32 0.0, %v3075
      %3077 = vmatprep.mubr.f32.mxu0 0.0
      %3078 = vmatmul.mubr.f32.gmra.mrb[0].mxu0 %v1961
      %v3079 = vpop.f32.mrb[0].mxu0
      %v3080 = vadd.f32 0.0, %v3079
      %v3081 = vpop.f32.mrb[0].mxu0
      %v3082 = vadd.f32 0.0, %v3081
      %3083 = vmatprep.mubr.f32.mxu0 0.0
      %3084 = vmatmul.mubr.f32.gmra.mrb[0].mxu0 %v1964
      %v3085 = vpop.f32.mrb[0].mxu0
      %v3086 = vadd.f32 0.0, %v3085
      %v3087 = vpop.f32.mrb[0].mxu0
      %v3088 = vadd.f32 0.0, %v3087
      %3089 = vmatprep.mubr.f32.mxu0 0.0
      %3090 = vmatmul.mubr.f32.gmra.mrb[0].mxu0 %v1967
      %v3091 = vpop.f32.mrb[0].mxu0
      %v3092 = vadd.f32 0.0, %v3091
      %v3093 = vpop.f32.mrb[0].mxu0
      %v3094 = vadd.f32 0.0, %v3093
      %3095 = vdwg.mxu0
      %3096 = vmatprep.subr.mxu0 %v1899
      %3097 = vmatpush1.msra.mxu0 %v1898
      %3098 = vmatprep.subr.mxu0 %v1917
      %3099 = vmatpush1.msra.mxu0 %v1916
      %3100 = vmatprep.subr.mxu0 0.0
      %3101 = vmatpush1.msra.mxu0 0.0
      %3102 = vmatprep.subr.mxu0 0.0
      %3103 = vmatpush1.msra.mxu0 0.0
      %3104 = vmatprep.subr.mxu0 0.0
      %3105 = vmatpush1.msra.mxu0 0.0
      %3106 = vmatprep.subr.mxu0 0.0
      %3107 = vmatpush1.msra.mxu0 0.0
      %3108 = vmatprep.subr.mxu0 0.0
      %3109 = vmatpush1.msra.mxu0 0.0
      %3110 = vmatprep.subr.mxu0 0.0
      %3111 = vmatpush1.msra.mxu0 0.0
      %3112 = vmatprep.subr.mxu0 0.0
      %3113 = vmatpush1.msra.mxu0 0.0
      %3114 = vmatprep.subr.mxu0 0.0
      %3115 = vmatpush1.msra.mxu0 0.0
      %3116 = vmatprep.subr.mxu0 0.0
      %3117 = vmatpush1.msra.mxu0 0.0
      %3118 = vmatprep.subr.mxu0 0.0
      %3119 = vmatpush1.msra.mxu0 0.0
      %3120 = vmatprep.subr.mxu0 0.0
      %3121 = vmatpush1.msra.mxu0 0.0
      %3122 = vmatprep.subr.mxu0 0.0
      %3123 = vmatpush1.msra.mxu0 0.0
      %3124 = vmatprep.subr.mxu0 0.0
      %3125 = vmatpush1.msra.mxu0 0.0
      %3126 = vmatprep.subr.mxu0 0.0
      %3127 = vmatpush1.msra.mxu0 0.0
      %3128 = vmatprep.subr.mxu0 0.0
      %3129 = vmatpush1.msra.mxu0 0.0
      %3130 = vmatprep.subr.mxu0 0.0
      %3131 = vmatpush1.msra.mxu0 0.0
      %3132 = vmatprep.subr.mxu0 0.0
      %3133 = vmatpush1.msra.mxu0 0.0
      %3134 = vmatprep.subr.mxu0 0.0
      %3135 = vmatpush1.msra.mxu0 0.0
      %3136 = vmatprep.subr.mxu0 0.0
      %3137 = vmatpush1.msra.mxu0 0.0
      %3138 = vmatprep.subr.mxu0 0.0
      %3139 = vmatpush1.msra.mxu0 0.0
      %3140 = vmatprep.subr.mxu0 0.0
      %3141 = vmatpush1.msra.mxu0 0.0
      %3142 = vmatprep.subr.mxu0 0.0
      %3143 = vmatpush1.msra.mxu0 0.0
      %3144 = vmatprep.subr.mxu0 0.0
      %3145 = vmatpush1.msra.mxu0 0.0
      %3146 = vmatprep.subr.mxu0 0.0
      %3147 = vmatpush1.msra.mxu0 0.0
      %3148 = vmatprep.subr.mxu0 0.0
      %3149 = vmatpush1.msra.mxu0 0.0
      %3150 = vmatprep.subr.mxu0 0.0
      %3151 = vmatpush1.msra.mxu0 0.0
      %3152 = vmatprep.subr.mxu0 0.0
      %3153 = vmatpush1.msra.mxu0 0.0
      %3154 = vmatprep.subr.mxu0 0.0
      %3155 = vmatpush1.msra.mxu0 0.0
      %3156 = vmatprep.subr.mxu0 0.0
      %3157 = vmatpush1.msra.mxu0 0.0
      %3158 = vmatprep.subr.mxu0 0.0
      %3159 = vmatpush1.msra.mxu0 0.0
      %3160 = vmatprep.mubr.f32.mxu0 0.0
      %3161 = vmatmul.mubr.f32.gmra.mrb[0].mxu0 %v1922
      %v3162 = vpop.f32.mrb[0].mxu0
      %v3163 = vadd.f32 0.0, %v3162
      %v3164 = vpop.f32.mrb[0].mxu0
      %v3165 = vadd.f32 0.0, %v3164
      %3166 = vmatprep.mubr.f32.mxu0 0.0
      %3167 = vmatmul.mubr.f32.gmra.mrb[0].mxu0 %v1925
      %v3168 = vpop.f32.mrb[0].mxu0
      %v3169 = vadd.f32 0.0, %v3168
      %v3170 = vpop.f32.mrb[0].mxu0
      %v3171 = vadd.f32 0.0, %v3170
      %3172 = vmatprep.mubr.f32.mxu0 0.0
      %3173 = vmatmul.mubr.f32.gmra.mrb[0].mxu0 %v1928
      %v3174 = vpop.f32.mrb[0].mxu0
      %v3175 = vadd.f32 0.0, %v3174
      %v3176 = vpop.f32.mrb[0].mxu0
      %v3177 = vadd.f32 0.0, %v3176
      %3178 = vmatprep.mubr.f32.mxu0 0.0
      %3179 = vmatmul.mubr.f32.gmra.mrb[0].mxu0 %v1931
      %v3180 = vpop.f32.mrb[0].mxu0
      %v3181 = vadd.f32 0.0, %v3180
      %v3182 = vpop.f32.mrb[0].mxu0
      %v3183 = vadd.f32 0.0, %v3182
      %3184 = vmatprep.mubr.f32.mxu0 0.0
      %3185 = vmatmul.mubr.f32.gmra.mrb[0].mxu0 %v1934
      %v3186 = vpop.f32.mrb[0].mxu0
      %v3187 = vadd.f32 0.0, %v3186
      %v3188 = vpop.f32.mrb[0].mxu0
      %v3189 = vadd.f32 0.0, %v3188
      %3190 = vmatprep.mubr.f32.mxu0 0.0
      %3191 = vmatmul.mubr.f32.gmra.mrb[0].mxu0 %v1937
      %v3192 = vpop.f32.mrb[0].mxu0
      %v3193 = vadd.f32 0.0, %v3192
      %v3194 = vpop.f32.mrb[0].mxu0
      %v3195 = vadd.f32 0.0, %v3194
      %3196 = vmatprep.mubr.f32.mxu0 0.0
      %3197 = vmatmul.mubr.f32.gmra.mrb[0].mxu0 %v1940
      %v3198 = vpop.f32.mrb[0].mxu0
      %v3199 = vadd.f32 0.0, %v3198
      %v3200 = vpop.f32.mrb[0].mxu0
      %v3201 = vadd.f32 0.0, %v3200
      %3202 = vmatprep.mubr.f32.mxu0 0.0
      %3203 = vmatmul.mubr.f32.gmra.mrb[0].mxu0 %v1943
      %v3204 = vpop.f32.mrb[0].mxu0
      %v3205 = vadd.f32 0.0, %v3204
      %v3206 = vpop.f32.mrb[0].mxu0
      %v3207 = vadd.f32 0.0, %v3206
      %3208 = vmatprep.mubr.f32.mxu0 0.0
      %3209 = vmatmul.mubr.f32.gmra.mrb[0].mxu0 %v1946
      %v3210 = vpop.f32.mrb[0].mxu0
      %v3211 = vadd.f32 0.0, %v3210
      %v3212 = vpop.f32.mrb[0].mxu0
      %v3213 = vadd.f32 0.0, %v3212
      %3214 = vmatprep.mubr.f32.mxu0 0.0
      %3215 = vmatmul.mubr.f32.gmra.mrb[0].mxu0 %v1949
      %v3216 = vpop.f32.mrb[0].mxu0
      %v3217 = vadd.f32 0.0, %v3216
      %v3218 = vpop.f32.mrb[0].mxu0
      %v3219 = vadd.f32 0.0, %v3218
      %3220 = vmatprep.mubr.f32.mxu0 0.0
      %3221 = vmatmul.mubr.f32.gmra.mrb[0].mxu0 %v1952
      %v3222 = vpop.f32.mrb[0].mxu0
      %v3223 = vadd.f32 0.0, %v3222
      %v3224 = vpop.f32.mrb[0].mxu0
      %v3225 = vadd.f32 0.0, %v3224
      %3226 = vmatprep.mubr.f32.mxu0 0.0
      %3227 = vmatmul.mubr.f32.gmra.mrb[0].mxu0 %v1955
      %v3228 = vpop.f32.mrb[0].mxu0
      %v3229 = vadd.f32 0.0, %v3228
      %v3230 = vpop.f32.mrb[0].mxu0
      %v3231 = vadd.f32 0.0, %v3230
      %3232 = vmatprep.mubr.f32.mxu0 0.0
      %3233 = vmatmul.mubr.f32.gmra.mrb[0].mxu0 %v1958
      %v3234 = vpop.f32.mrb[0].mxu0
      %v3235 = vadd.f32 0.0, %v3234
      %v3236 = vpop.f32.mrb[0].mxu0
      %v3237 = vadd.f32 0.0, %v3236
      %3238 = vmatprep.mubr.f32.mxu0 0.0
      %3239 = vmatmul.mubr.f32.gmra.mrb[0].mxu0 %v1961
      %v3240 = vpop.f32.mrb[0].mxu0
      %v3241 = vadd.f32 0.0, %v3240
      %v3242 = vpop.f32.mrb[0].mxu0
      %v3243 = vadd.f32 0.0, %v3242
      %3244 = vmatprep.mubr.f32.mxu0 0.0
      %3245 = vmatmul.mubr.f32.gmra.mrb[0].mxu0 %v1964
      %v3246 = vpop.f32.mrb[0].mxu0
      %v3247 = vadd.f32 0.0, %v3246
      %v3248 = vpop.f32.mrb[0].mxu0
      %v3249 = vadd.f32 0.0, %v3248
      %3250 = vmatprep.mubr.f32.mxu0 0.0
      %3251 = vmatmul.mubr.f32.gmra.mrb[0].mxu0 %v1967
      %v3252 = vpop.f32.mrb[0].mxu0
      %v3253 = vadd.f32 0.0, %v3252
      %v3254 = vpop.f32.mrb[0].mxu0
      %v3255 = vadd.f32 0.0, %v3254
      %3256 = vdwg.mxu0
      %3257 = vmatprep.subr.mxu0 %v1901
      %3258 = vmatpush1.msra.mxu0 %v1900
      %3259 = vmatprep.subr.mxu0 %v1919
      %3260 = vmatpush1.msra.mxu0 %v1918
      %3261 = vmatprep.subr.mxu0 0.0
      %3262 = vmatpush1.msra.mxu0 0.0
      %3263 = vmatprep.subr.mxu0 0.0
      %3264 = vmatpush1.msra.mxu0 0.0
      %3265 = vmatprep.subr.mxu0 0.0
      %3266 = vmatpush1.msra.mxu0 0.0
      %3267 = vmatprep.subr.mxu0 0.0
      %3268 = vmatpush1.msra.mxu0 0.0
      %3269 = vmatprep.subr.mxu0 0.0
      %3270 = vmatpush1.msra.mxu0 0.0
      %3271 = vmatprep.subr.mxu0 0.0
      %3272 = vmatpush1.msra.mxu0 0.0
      %3273 = vmatprep.subr.mxu0 0.0
      %3274 = vmatpush1.msra.mxu0 0.0
      %3275 = vmatprep.subr.mxu0 0.0
      %3276 = vmatpush1.msra.mxu0 0.0
      %3277 = vmatprep.subr.mxu0 0.0
      %3278 = vmatpush1.msra.mxu0 0.0
      %3279 = vmatprep.subr.mxu0 0.0
      %3280 = vmatpush1.msra.mxu0 0.0
      %3281 = vmatprep.subr.mxu0 0.0
      %3282 = vmatpush1.msra.mxu0 0.0
      %3283 = vmatprep.subr.mxu0 0.0
      %3284 = vmatpush1.msra.mxu0 0.0
      %3285 = vmatprep.subr.mxu0 0.0
      %3286 = vmatpush1.msra.mxu0 0.0
      %3287 = vmatprep.subr.mxu0 0.0
      %3288 = vmatpush1.msra.mxu0 0.0
      %3289 = vmatprep.subr.mxu0 0.0
      %3290 = vmatpush1.msra.mxu0 0.0
      %3291 = vmatprep.subr.mxu0 0.0
      %3292 = vmatpush1.msra.mxu0 0.0
      %3293 = vmatprep.subr.mxu0 0.0
      %3294 = vmatpush1.msra.mxu0 0.0
      %3295 = vmatprep.subr.mxu0 0.0
      %3296 = vmatpush1.msra.mxu0 0.0
      %3297 = vmatprep.subr.mxu0 0.0
      %3298 = vmatpush1.msra.mxu0 0.0
      %3299 = vmatprep.subr.mxu0 0.0
      %3300 = vmatpush1.msra.mxu0 0.0
      %3301 = vmatprep.subr.mxu0 0.0
      %3302 = vmatpush1.msra.mxu0 0.0
      %3303 = vmatprep.subr.mxu0 0.0
      %3304 = vmatpush1.msra.mxu0 0.0
      %3305 = vmatprep.subr.mxu0 0.0
      %3306 = vmatpush1.msra.mxu0 0.0
      %3307 = vmatprep.subr.mxu0 0.0
      %3308 = vmatpush1.msra.mxu0 0.0
      %3309 = vmatprep.subr.mxu0 0.0
      %3310 = vmatpush1.msra.mxu0 0.0
      %3311 = vmatprep.subr.mxu0 0.0
      %3312 = vmatpush1.msra.mxu0 0.0
      %3313 = vmatprep.subr.mxu0 0.0
      %3314 = vmatpush1.msra.mxu0 0.0
      %3315 = vmatprep.subr.mxu0 0.0
      %3316 = vmatpush1.msra.mxu0 0.0
      %3317 = vmatprep.subr.mxu0 0.0
      %3318 = vmatpush1.msra.mxu0 0.0
      %3319 = vmatprep.subr.mxu0 0.0
      %3320 = vmatpush1.msra.mxu0 0.0
      %3321 = vmatprep.mubr.f32.mxu0 0.0
      %3322 = vmatmul.mubr.f32.gmra.mrb[0].mxu0 %v1922
      %v3323 = vpop.f32.mrb[0].mxu0
      %v3324 = vadd.f32 0.0, %v3323
      %v3325 = vpop.f32.mrb[0].mxu0
      %v3326 = vadd.f32 0.0, %v3325
      %3327 = vmatprep.mubr.f32.mxu0 0.0
      %3328 = vmatmul.mubr.f32.gmra.mrb[0].mxu0 %v1925
      %v3329 = vpop.f32.mrb[0].mxu0
      %v3330 = vadd.f32 0.0, %v3329
      %v3331 = vpop.f32.mrb[0].mxu0
      %v3332 = vadd.f32 0.0, %v3331
      %3333 = vmatprep.mubr.f32.mxu0 0.0
      %3334 = vmatmul.mubr.f32.gmra.mrb[0].mxu0 %v1928
      %v3335 = vpop.f32.mrb[0].mxu0
      %v3336 = vadd.f32 0.0, %v3335
      %v3337 = vpop.f32.mrb[0].mxu0
      %v3338 = vadd.f32 0.0, %v3337
      %3339 = vmatprep.mubr.f32.mxu0 0.0
      %3340 = vmatmul.mubr.f32.gmra.mrb[0].mxu0 %v1931
      %v3341 = vpop.f32.mrb[0].mxu0
      %v3342 = vadd.f32 0.0, %v3341
      %v3343 = vpop.f32.mrb[0].mxu0
      %v3344 = vadd.f32 0.0, %v3343
      %3345 = vmatprep.mubr.f32.mxu0 0.0
      %3346 = vmatmul.mubr.f32.gmra.mrb[0].mxu0 %v1934
      %v3347 = vpop.f32.mrb[0].mxu0
      %v3348 = vadd.f32 0.0, %v3347
      %v3349 = vpop.f32.mrb[0].mxu0
      %v3350 = vadd.f32 0.0, %v3349
      %3351 = vmatprep.mubr.f32.mxu0 0.0
      %3352 = vmatmul.mubr.f32.gmra.mrb[0].mxu0 %v1937
      %v3353 = vpop.f32.mrb[0].mxu0
      %v3354 = vadd.f32 0.0, %v3353
      %v3355 = vpop.f32.mrb[0].mxu0
      %v3356 = vadd.f32 0.0, %v3355
      %3357 = vmatprep.mubr.f32.mxu0 0.0
      %3358 = vmatmul.mubr.f32.gmra.mrb[0].mxu0 %v1940
      %v3359 = vpop.f32.mrb[0].mxu0
      %v3360 = vadd.f32 0.0, %v3359
      %v3361 = vpop.f32.mrb[0].mxu0
      %v3362 = vadd.f32 0.0, %v3361
      %3363 = vmatprep.mubr.f32.mxu0 0.0
      %3364 = vmatmul.mubr.f32.gmra.mrb[0].mxu0 %v1943
      %v3365 = vpop.f32.mrb[0].mxu0
      %v3366 = vadd.f32 0.0, %v3365
      %v3367 = vpop.f32.mrb[0].mxu0
      %v3368 = vadd.f32 0.0, %v3367
      %3369 = vmatprep.mubr.f32.mxu0 0.0
      %3370 = vmatmul.mubr.f32.gmra.mrb[0].mxu0 %v1946
      %v3371 = vpop.f32.mrb[0].mxu0
      %v3372 = vadd.f32 0.0, %v3371
      %v3373 = vpop.f32.mrb[0].mxu0
      %v3374 = vadd.f32 0.0, %v3373
      %3375 = vmatprep.mubr.f32.mxu0 0.0
      %3376 = vmatmul.mubr.f32.gmra.mrb[0].mxu0 %v1949
      %v3377 = vpop.f32.mrb[0].mxu0
      %v3378 = vadd.f32 0.0, %v3377
      %v3379 = vpop.f32.mrb[0].mxu0
      %v3380 = vadd.f32 0.0, %v3379
      %3381 = vmatprep.mubr.f32.mxu0 0.0
      %3382 = vmatmul.mubr.f32.gmra.mrb[0].mxu0 %v1952
      %v3383 = vpop.f32.mrb[0].mxu0
      %v3384 = vadd.f32 0.0, %v3383
      %v3385 = vpop.f32.mrb[0].mxu0
      %v3386 = vadd.f32 0.0, %v3385
      %3387 = vmatprep.mubr.f32.mxu0 0.0
      %3388 = vmatmul.mubr.f32.gmra.mrb[0].mxu0 %v1955
      %v3389 = vpop.f32.mrb[0].mxu0
      %v3390 = vadd.f32 0.0, %v3389
      %v3391 = vpop.f32.mrb[0].mxu0
      %v3392 = vadd.f32 0.0, %v3391
      %3393 = vmatprep.mubr.f32.mxu0 0.0
      %3394 = vmatmul.mubr.f32.gmra.mrb[0].mxu0 %v1958
      %v3395 = vpop.f32.mrb[0].mxu0
      %v3396 = vadd.f32 0.0, %v3395
      %v3397 = vpop.f32.mrb[0].mxu0
      %v3398 = vadd.f32 0.0, %v3397
      %3399 = vmatprep.mubr.f32.mxu0 0.0
      %3400 = vmatmul.mubr.f32.gmra.mrb[0].mxu0 %v1961
      %v3401 = vpop.f32.mrb[0].mxu0
      %v3402 = vadd.f32 0.0, %v3401
      %v3403 = vpop.f32.mrb[0].mxu0
      %v3404 = vadd.f32 0.0, %v3403
      %3405 = vmatprep.mubr.f32.mxu0 0.0
      %3406 = vmatmul.mubr.f32.gmra.mrb[0].mxu0 %v1964
      %v3407 = vpop.f32.mrb[0].mxu0
      %v3408 = vadd.f32 0.0, %v3407
      %v3409 = vpop.f32.mrb[0].mxu0
      %v3410 = vadd.f32 0.0, %v3409
      %3411 = vmatprep.mubr.f32.mxu0 0.0
      %3412 = vmatmul.mubr.f32.gmra.mrb[0].mxu0 %v1967
      %v3413 = vpop.f32.mrb[0].mxu0
      %v3414 = vadd.f32 0.0, %v3413
      %v3415 = vpop.f32.mrb[0].mxu0
      %v3416 = vadd.f32 0.0, %v3415
      %3417 = vdwg.mxu0
      %v3418 = vmul.f32 %v2036, %v1082
      %v3419 = vmul.f32 %v2038, %v1083
      %v3420 = vmul.f32 %v2197, %v1084
      %v3421 = vmul.f32 %v2199, %v1085
      %v3422 = vmul.f32 %v2358, %v1086
      %v3423 = vmul.f32 %v2360, %v1087
      %v3424 = vmul.f32 %v2519, %v1088
      %v3425 = vmul.f32 %v2521, %v1089
      %v3426 = vmul.f32 %v2680, %v1090
      %v3427 = vmul.f32 %v2682, %v1091
      %v3428 = vmul.f32 %v2841, %v1092
      %v3429 = vmul.f32 %v2843, %v1093
      %v3430 = vmul.f32 %v3002, %v1094
      %v3431 = vmul.f32 %v3004, %v1095
      %v3432 = vmul.f32 %v3163, %v1096
      %v3433 = vmul.f32 %v3165, %v1097
      %v3434 = vmul.f32 %v3324, %v1098
      %v3435 = vmul.f32 %v3326, %v1099
      %v3436 = vmul.f32 %v2042, %v1100
      %v3437 = vmul.f32 %v2044, %v1101
      %v3438 = vmul.f32 %v2203, %v1102
      %v3439 = vmul.f32 %v2205, %v1103
      %v3440 = vmul.f32 %v2364, %v1104
      %v3441 = vmul.f32 %v2366, %v1105
      %v3442 = vmul.f32 %v2525, %v1106
      %v3443 = vmul.f32 %v2527, %v1107
      %v3444 = vmul.f32 %v2686, %v1108
      %v3445 = vmul.f32 %v2688, %v1109
      %v3446 = vmul.f32 %v2847, %v1110
      %v3447 = vmul.f32 %v2849, %v1111
      %v3448 = vmul.f32 %v3008, %v1112
      %v3449 = vmul.f32 %v3010, %v1113
      %v3450 = vmul.f32 %v3169, %v1114
      %v3451 = vmul.f32 %v3171, %v1115
      %v3452 = vmul.f32 %v3330, %v1116
      %v3453 = vmul.f32 %v3332, %v1117
      %v3454 = vmul.f32 %v2048, %v1082
      %v3455 = vmul.f32 %v2050, %v1083
      %v3456 = vmul.f32 %v2209, %v1084
      %v3457 = vmul.f32 %v2211, %v1085
      %v3458 = vmul.f32 %v2370, %v1086
      %v3459 = vmul.f32 %v2372, %v1087
      %v3460 = vmul.f32 %v2531, %v1088
      %v3461 = vmul.f32 %v2533, %v1089
      %v3462 = vmul.f32 %v2692, %v1090
      %v3463 = vmul.f32 %v2694, %v1091
      %v3464 = vmul.f32 %v2853, %v1092
      %v3465 = vmul.f32 %v2855, %v1093
      %v3466 = vmul.f32 %v3014, %v1094
      %v3467 = vmul.f32 %v3016, %v1095
      %v3468 = vmul.f32 %v3175, %v1096
      %v3469 = vmul.f32 %v3177, %v1097
      %v3470 = vmul.f32 %v3336, %v1098
      %v3471 = vmul.f32 %v3338, %v1099
      %v3472 = vmul.f32 %v2054, %v1100
      %v3473 = vmul.f32 %v2056, %v1101
      %v3474 = vmul.f32 %v2215, %v1102
      %v3475 = vmul.f32 %v2217, %v1103
      %v3476 = vmul.f32 %v2376, %v1104
      %v3477 = vmul.f32 %v2378, %v1105
      %v3478 = vmul.f32 %v2537, %v1106
      %v3479 = vmul.f32 %v2539, %v1107
      %v3480 = vmul.f32 %v2698, %v1108
      %v3481 = vmul.f32 %v2700, %v1109
      %v3482 = vmul.f32 %v2859, %v1110
      %v3483 = vmul.f32 %v2861, %v1111
      %v3484 = vmul.f32 %v3020, %v1112
      %v3485 = vmul.f32 %v3022, %v1113
      %v3486 = vmul.f32 %v3181, %v1114
      %v3487 = vmul.f32 %v3183, %v1115
      %v3488 = vmul.f32 %v3342, %v1116
      %v3489 = vmul.f32 %v3344, %v1117
      %v3490 = vmul.f32 %v2060, %v1082
      %v3491 = vmul.f32 %v2062, %v1083
      %v3492 = vmul.f32 %v2221, %v1084
      %v3493 = vmul.f32 %v2223, %v1085
      %v3494 = vmul.f32 %v2382, %v1086
      %v3495 = vmul.f32 %v2384, %v1087
      %v3496 = vmul.f32 %v2543, %v1088
      %v3497 = vmul.f32 %v2545, %v1089
      %v3498 = vmul.f32 %v2704, %v1090
      %v3499 = vmul.f32 %v2706, %v1091
      %v3500 = vmul.f32 %v2865, %v1092
      %v3501 = vmul.f32 %v2867, %v1093
      %v3502 = vmul.f32 %v3026, %v1094
      %v3503 = vmul.f32 %v3028, %v1095
      %v3504 = vmul.f32 %v3187, %v1096
      %v3505 = vmul.f32 %v3189, %v1097
      %v3506 = vmul.f32 %v3348, %v1098
      %v3507 = vmul.f32 %v3350, %v1099
      %v3508 = vmul.f32 %v2066, %v1100
      %v3509 = vmul.f32 %v2068, %v1101
      %v3510 = vmul.f32 %v2227, %v1102
      %v3511 = vmul.f32 %v2229, %v1103
      %v3512 = vmul.f32 %v2388, %v1104
      %v3513 = vmul.f32 %v2390, %v1105
      %v3514 = vmul.f32 %v2549, %v1106
      %v3515 = vmul.f32 %v2551, %v1107
      %v3516 = vmul.f32 %v2710, %v1108
      %v3517 = vmul.f32 %v2712, %v1109
      %v3518 = vmul.f32 %v2871, %v1110
      %v3519 = vmul.f32 %v2873, %v1111
      %v3520 = vmul.f32 %v3032, %v1112
      %v3521 = vmul.f32 %v3034, %v1113
      %v3522 = vmul.f32 %v3193, %v1114
      %v3523 = vmul.f32 %v3195, %v1115
      %v3524 = vmul.f32 %v3354, %v1116
      %v3525 = vmul.f32 %v3356, %v1117
      %v3526 = vmul.f32 %v2072, %v1082
      %v3527 = vmul.f32 %v2074, %v1083
      %v3528 = vmul.f32 %v2233, %v1084
      %v3529 = vmul.f32 %v2235, %v1085
      %v3530 = vmul.f32 %v2394, %v1086
      %v3531 = vmul.f32 %v2396, %v1087
      %v3532 = vmul.f32 %v2555, %v1088
      %v3533 = vmul.f32 %v2557, %v1089
      %v3534 = vmul.f32 %v2716, %v1090
      %v3535 = vmul.f32 %v2718, %v1091
      %v3536 = vmul.f32 %v2877, %v1092
      %v3537 = vmul.f32 %v2879, %v1093
      %v3538 = vmul.f32 %v3038, %v1094
      %v3539 = vmul.f32 %v3040, %v1095
      %v3540 = vmul.f32 %v3199, %v1096
      %v3541 = vmul.f32 %v3201, %v1097
      %v3542 = vmul.f32 %v3360, %v1098
      %v3543 = vmul.f32 %v3362, %v1099
      %v3544 = vmul.f32 %v2078, %v1100
      %v3545 = vmul.f32 %v2080, %v1101
      %v3546 = vmul.f32 %v2239, %v1102
      %v3547 = vmul.f32 %v2241, %v1103
      %v3548 = vmul.f32 %v2400, %v1104
      %v3549 = vmul.f32 %v2402, %v1105
      %v3550 = vmul.f32 %v2561, %v1106
      %v3551 = vmul.f32 %v2563, %v1107
      %v3552 = vmul.f32 %v2722, %v1108
      %v3553 = vmul.f32 %v2724, %v1109
      %v3554 = vmul.f32 %v2883, %v1110
      %v3555 = vmul.f32 %v2885, %v1111
      %v3556 = vmul.f32 %v3044, %v1112
      %v3557 = vmul.f32 %v3046, %v1113
      %v3558 = vmul.f32 %v3205, %v1114
      %v3559 = vmul.f32 %v3207, %v1115
      %v3560 = vmul.f32 %v3366, %v1116
      %v3561 = vmul.f32 %v3368, %v1117
      %v3562 = vmul.f32 %v2084, %v1082
      %v3563 = vmul.f32 %v2086, %v1083
      %v3564 = vmul.f32 %v2245, %v1084
      %v3565 = vmul.f32 %v2247, %v1085
      %v3566 = vmul.f32 %v2406, %v1086
      %v3567 = vmul.f32 %v2408, %v1087
      %v3568 = vmul.f32 %v2567, %v1088
      %v3569 = vmul.f32 %v2569, %v1089
      %v3570 = vmul.f32 %v2728, %v1090
      %v3571 = vmul.f32 %v2730, %v1091
      %v3572 = vmul.f32 %v2889, %v1092
      %v3573 = vmul.f32 %v2891, %v1093
      %v3574 = vmul.f32 %v3050, %v1094
      %v3575 = vmul.f32 %v3052, %v1095
      %v3576 = vmul.f32 %v3211, %v1096
      %v3577 = vmul.f32 %v3213, %v1097
      %v3578 = vmul.f32 %v3372, %v1098
      %v3579 = vmul.f32 %v3374, %v1099
      %v3580 = vmul.f32 %v2090, %v1100
      %v3581 = vmul.f32 %v2092, %v1101
      %v3582 = vmul.f32 %v2251, %v1102
      %v3583 = vmul.f32 %v2253, %v1103
      %v3584 = vmul.f32 %v2412, %v1104
      %v3585 = vmul.f32 %v2414, %v1105
      %v3586 = vmul.f32 %v2573, %v1106
      %v3587 = vmul.f32 %v2575, %v1107
      %v3588 = vmul.f32 %v2734, %v1108
      %v3589 = vmul.f32 %v2736, %v1109
      %v3590 = vmul.f32 %v2895, %v1110
      %v3591 = vmul.f32 %v2897, %v1111
      %v3592 = vmul.f32 %v3056, %v1112
      %v3593 = vmul.f32 %v3058, %v1113
      %v3594 = vmul.f32 %v3217, %v1114
      %v3595 = vmul.f32 %v3219, %v1115
      %v3596 = vmul.f32 %v3378, %v1116
      %v3597 = vmul.f32 %v3380, %v1117
      %v3598 = vmul.f32 %v2096, %v1082
      %v3599 = vmul.f32 %v2098, %v1083
      %v3600 = vmul.f32 %v2257, %v1084
      %v3601 = vmul.f32 %v2259, %v1085
      %v3602 = vmul.f32 %v2418, %v1086
      %v3603 = vmul.f32 %v2420, %v1087
      %v3604 = vmul.f32 %v2579, %v1088
      %v3605 = vmul.f32 %v2581, %v1089
      %v3606 = vmul.f32 %v2740, %v1090
      %v3607 = vmul.f32 %v2742, %v1091
      %v3608 = vmul.f32 %v2901, %v1092
      %v3609 = vmul.f32 %v2903, %v1093
      %v3610 = vmul.f32 %v3062, %v1094
      %v3611 = vmul.f32 %v3064, %v1095
      %v3612 = vmul.f32 %v3223, %v1096
      %v3613 = vmul.f32 %v3225, %v1097
      %v3614 = vmul.f32 %v3384, %v1098
      %v3615 = vmul.f32 %v3386, %v1099
      %v3616 = vmul.f32 %v2102, %v1100
      %v3617 = vmul.f32 %v2104, %v1101
      %v3618 = vmul.f32 %v2263, %v1102
      %v3619 = vmul.f32 %v2265, %v1103
      %v3620 = vmul.f32 %v2424, %v1104
      %v3621 = vmul.f32 %v2426, %v1105
      %v3622 = vmul.f32 %v2585, %v1106
      %v3623 = vmul.f32 %v2587, %v1107
      %v3624 = vmul.f32 %v2746, %v1108
      %v3625 = vmul.f32 %v2748, %v1109
      %v3626 = vmul.f32 %v2907, %v1110
      %v3627 = vmul.f32 %v2909, %v1111
      %v3628 = vmul.f32 %v3068, %v1112
      %v3629 = vmul.f32 %v3070, %v1113
      %v3630 = vmul.f32 %v3229, %v1114
      %v3631 = vmul.f32 %v3231, %v1115
      %v3632 = vmul.f32 %v3390, %v1116
      %v3633 = vmul.f32 %v3392, %v1117
      %v3634 = vmul.f32 %v2108, %v1082
      %v3635 = vmul.f32 %v2110, %v1083
      %v3636 = vmul.f32 %v2269, %v1084
      %v3637 = vmul.f32 %v2271, %v1085
      %v3638 = vmul.f32 %v2430, %v1086
      %v3639 = vmul.f32 %v2432, %v1087
      %v3640 = vmul.f32 %v2591, %v1088
      %v3641 = vmul.f32 %v2593, %v1089
      %v3642 = vmul.f32 %v2752, %v1090
      %v3643 = vmul.f32 %v2754, %v1091
      %v3644 = vmul.f32 %v2913, %v1092
      %v3645 = vmul.f32 %v2915, %v1093
      %v3646 = vmul.f32 %v3074, %v1094
      %v3647 = vmul.f32 %v3076, %v1095
      %v3648 = vmul.f32 %v3235, %v1096
      %v3649 = vmul.f32 %v3237, %v1097
      %v3650 = vmul.f32 %v3396, %v1098
      %v3651 = vmul.f32 %v3398, %v1099
      %v3652 = vmul.f32 %v2114, %v1100
      %v3653 = vmul.f32 %v2116, %v1101
      %v3654 = vmul.f32 %v2275, %v1102
      %v3655 = vmul.f32 %v2277, %v1103
      %v3656 = vmul.f32 %v2436, %v1104
      %v3657 = vmul.f32 %v2438, %v1105
      %v3658 = vmul.f32 %v2597, %v1106
      %v3659 = vmul.f32 %v2599, %v1107
      %v3660 = vmul.f32 %v2758, %v1108
      %v3661 = vmul.f32 %v2760, %v1109
      %v3662 = vmul.f32 %v2919, %v1110
      %v3663 = vmul.f32 %v2921, %v1111
      %v3664 = vmul.f32 %v3080, %v1112
      %v3665 = vmul.f32 %v3082, %v1113
      %v3666 = vmul.f32 %v3241, %v1114
      %v3667 = vmul.f32 %v3243, %v1115
      %v3668 = vmul.f32 %v3402, %v1116
      %v3669 = vmul.f32 %v3404, %v1117
      %v3670 = vmul.f32 %v2120, %v1082
      %v3671 = vmul.f32 %v2122, %v1083
      %v3672 = vmul.f32 %v2281, %v1084
      %v3673 = vmul.f32 %v2283, %v1085
      %v3674 = vmul.f32 %v2442, %v1086
      %v3675 = vmul.f32 %v2444, %v1087
      %v3676 = vmul.f32 %v2603, %v1088
      %v3677 = vmul.f32 %v2605, %v1089
      %v3678 = vmul.f32 %v2764, %v1090
      %v3679 = vmul.f32 %v2766, %v1091
      %v3680 = vmul.f32 %v2925, %v1092
      %v3681 = vmul.f32 %v2927, %v1093
      %v3682 = vmul.f32 %v3086, %v1094
      %v3683 = vmul.f32 %v3088, %v1095
      %v3684 = vmul.f32 %v3247, %v1096
      %v3685 = vmul.f32 %v3249, %v1097
      %v3686 = vmul.f32 %v3408, %v1098
      %v3687 = vmul.f32 %v3410, %v1099
      %v3688 = vmul.f32 %v2126, %v1100
      %v3689 = vmul.f32 %v2128, %v1101
      %v3690 = vmul.f32 %v2287, %v1102
      %v3691 = vmul.f32 %v2289, %v1103
      %v3692 = vmul.f32 %v2448, %v1104
      %v3693 = vmul.f32 %v2450, %v1105
      %v3694 = vmul.f32 %v2609, %v1106
      %v3695 = vmul.f32 %v2611, %v1107
      %v3696 = vmul.f32 %v2770, %v1108
      %v3697 = vmul.f32 %v2772, %v1109
      %v3698 = vmul.f32 %v2931, %v1110
      %v3699 = vmul.f32 %v2933, %v1111
      %v3700 = vmul.f32 %v3092, %v1112
      %v3701 = vmul.f32 %v3094, %v1113
      %v3702 = vmul.f32 %v3253, %v1114
      %v3703 = vmul.f32 %v3255, %v1115
      %v3704 = vmul.f32 %v3414, %v1116
      %v3705 = vmul.f32 %v3416, %v1117
      %v3706 = vadd.f32 %v3418, %v3436
      %v3707 = vrot.slane %v3706, 4
      %v3708 = vadd.f32 %v3706, %v3707
      %v3709 = vrot.slane %v3708, 2
      %v3710 = vadd.f32 %v3708, %v3709
      %v3711 = vrot.slane %v3710, 1
      %v3712 = vadd.f32 %v3710, %v3711
      %v3713 = vadd.f32 %v3419, %v3437
      %v3714 = vrot.slane %v3713, 4
      %v3715 = vadd.f32 %v3713, %v3714
      %v3716 = vrot.slane %v3715, 2
      %v3717 = vadd.f32 %v3715, %v3716
      %v3718 = vrot.slane %v3717, 1
      %v3719 = vadd.f32 %v3717, %v3718
      %v3720 = vadd.f32 %v3420, %v3438
      %v3721 = vrot.slane %v3720, 4
      %v3722 = vadd.f32 %v3720, %v3721
      %v3723 = vrot.slane %v3722, 2
      %v3724 = vadd.f32 %v3722, %v3723
      %v3725 = vrot.slane %v3724, 1
      %v3726 = vadd.f32 %v3724, %v3725
      %v3727 = vadd.f32 %v3421, %v3439
      %v3728 = vrot.slane %v3727, 4
      %v3729 = vadd.f32 %v3727, %v3728
      %v3730 = vrot.slane %v3729, 2
      %v3731 = vadd.f32 %v3729, %v3730
      %v3732 = vrot.slane %v3731, 1
      %v3733 = vadd.f32 %v3731, %v3732
      %v3734 = vadd.f32 %v3422, %v3440
      %v3735 = vrot.slane %v3734, 4
      %v3736 = vadd.f32 %v3734, %v3735
      %v3737 = vrot.slane %v3736, 2
      %v3738 = vadd.f32 %v3736, %v3737
      %v3739 = vrot.slane %v3738, 1
      %v3740 = vadd.f32 %v3738, %v3739
      %v3741 = vadd.f32 %v3423, %v3441
      %v3742 = vrot.slane %v3741, 4
      %v3743 = vadd.f32 %v3741, %v3742
      %v3744 = vrot.slane %v3743, 2
      %v3745 = vadd.f32 %v3743, %v3744
      %v3746 = vrot.slane %v3745, 1
      %v3747 = vadd.f32 %v3745, %v3746
      %v3748 = vadd.f32 %v3424, %v3442
      %v3749 = vrot.slane %v3748, 4
      %v3750 = vadd.f32 %v3748, %v3749
      %v3751 = vrot.slane %v3750, 2
      %v3752 = vadd.f32 %v3750, %v3751
      %v3753 = vrot.slane %v3752, 1
      %v3754 = vadd.f32 %v3752, %v3753
      %v3755 = vadd.f32 %v3425, %v3443
      %v3756 = vrot.slane %v3755, 4
      %v3757 = vadd.f32 %v3755, %v3756
      %v3758 = vrot.slane %v3757, 2
      %v3759 = vadd.f32 %v3757, %v3758
      %v3760 = vrot.slane %v3759, 1
      %v3761 = vadd.f32 %v3759, %v3760
      %v3762 = vadd.f32 %v3426, %v3444
      %v3763 = vrot.slane %v3762, 4
      %v3764 = vadd.f32 %v3762, %v3763
      %v3765 = vrot.slane %v3764, 2
      %v3766 = vadd.f32 %v3764, %v3765
      %v3767 = vrot.slane %v3766, 1
      %v3768 = vadd.f32 %v3766, %v3767
      %v3769 = vadd.f32 %v3427, %v3445
      %v3770 = vrot.slane %v3769, 4
      %v3771 = vadd.f32 %v3769, %v3770
      %v3772 = vrot.slane %v3771, 2
      %v3773 = vadd.f32 %v3771, %v3772
      %v3774 = vrot.slane %v3773, 1
      %v3775 = vadd.f32 %v3773, %v3774
      %v3776 = vadd.f32 %v3428, %v3446
      %v3777 = vrot.slane %v3776, 4
      %v3778 = vadd.f32 %v3776, %v3777
      %v3779 = vrot.slane %v3778, 2
      %v3780 = vadd.f32 %v3778, %v3779
      %v3781 = vrot.slane %v3780, 1
      %v3782 = vadd.f32 %v3780, %v3781
      %v3783 = vadd.f32 %v3429, %v3447
      %v3784 = vrot.slane %v3783, 4
      %v3785 = vadd.f32 %v3783, %v3784
      %v3786 = vrot.slane %v3785, 2
      %v3787 = vadd.f32 %v3785, %v3786
      %v3788 = vrot.slane %v3787, 1
      %v3789 = vadd.f32 %v3787, %v3788
      %v3790 = vadd.f32 %v3430, %v3448
      %v3791 = vrot.slane %v3790, 4
      %v3792 = vadd.f32 %v3790, %v3791
      %v3793 = vrot.slane %v3792, 2
      %v3794 = vadd.f32 %v3792, %v3793
      %v3795 = vrot.slane %v3794, 1
      %v3796 = vadd.f32 %v3794, %v3795
      %v3797 = vadd.f32 %v3431, %v3449
      %v3798 = vrot.slane %v3797, 4
      %v3799 = vadd.f32 %v3797, %v3798
      %v3800 = vrot.slane %v3799, 2
      %v3801 = vadd.f32 %v3799, %v3800
      %v3802 = vrot.slane %v3801, 1
      %v3803 = vadd.f32 %v3801, %v3802
      %v3804 = vadd.f32 %v3432, %v3450
      %v3805 = vrot.slane %v3804, 4
      %v3806 = vadd.f32 %v3804, %v3805
      %v3807 = vrot.slane %v3806, 2
      %v3808 = vadd.f32 %v3806, %v3807
      %v3809 = vrot.slane %v3808, 1
      %v3810 = vadd.f32 %v3808, %v3809
      %v3811 = vadd.f32 %v3433, %v3451
      %v3812 = vrot.slane %v3811, 4
      %v3813 = vadd.f32 %v3811, %v3812
      %v3814 = vrot.slane %v3813, 2
      %v3815 = vadd.f32 %v3813, %v3814
      %v3816 = vrot.slane %v3815, 1
      %v3817 = vadd.f32 %v3815, %v3816
      %v3818 = vadd.f32 %v3434, %v3452
      %v3819 = vrot.slane %v3818, 4
      %v3820 = vadd.f32 %v3818, %v3819
      %v3821 = vrot.slane %v3820, 2
      %v3822 = vadd.f32 %v3820, %v3821
      %v3823 = vrot.slane %v3822, 1
      %v3824 = vadd.f32 %v3822, %v3823
      %v3825 = vadd.f32 %v3435, %v3453
      %v3826 = vrot.slane %v3825, 4
      %v3827 = vadd.f32 %v3825, %v3826
      %v3828 = vrot.slane %v3827, 2
      %v3829 = vadd.f32 %v3827, %v3828
      %v3830 = vrot.slane %v3829, 1
      %v3831 = vadd.f32 %v3829, %v3830
      %v3832 = vadd.f32 %v3454, %v3472
      %v3833 = vrot.slane %v3832, 4
      %v3834 = vadd.f32 %v3832, %v3833
      %v3835 = vrot.slane %v3834, 2
      %v3836 = vadd.f32 %v3834, %v3835
      %v3837 = vrot.slane %v3836, 1
      %v3838 = vadd.f32 %v3836, %v3837
      %v3839 = vadd.f32 %v3455, %v3473
      %v3840 = vrot.slane %v3839, 4
      %v3841 = vadd.f32 %v3839, %v3840
      %v3842 = vrot.slane %v3841, 2
      %v3843 = vadd.f32 %v3841, %v3842
      %v3844 = vrot.slane %v3843, 1
      %v3845 = vadd.f32 %v3843, %v3844
      %v3846 = vadd.f32 %v3456, %v3474
      %v3847 = vrot.slane %v3846, 4
      %v3848 = vadd.f32 %v3846, %v3847
      %v3849 = vrot.slane %v3848, 2
      %v3850 = vadd.f32 %v3848, %v3849
      %v3851 = vrot.slane %v3850, 1
      %v3852 = vadd.f32 %v3850, %v3851
      %v3853 = vadd.f32 %v3457, %v3475
      %v3854 = vrot.slane %v3853, 4
      %v3855 = vadd.f32 %v3853, %v3854
      %v3856 = vrot.slane %v3855, 2
      %v3857 = vadd.f32 %v3855, %v3856
      %v3858 = vrot.slane %v3857, 1
      %v3859 = vadd.f32 %v3857, %v3858
      %v3860 = vadd.f32 %v3458, %v3476
      %v3861 = vrot.slane %v3860, 4
      %v3862 = vadd.f32 %v3860, %v3861
      %v3863 = vrot.slane %v3862, 2
      %v3864 = vadd.f32 %v3862, %v3863
      %v3865 = vrot.slane %v3864, 1
      %v3866 = vadd.f32 %v3864, %v3865
      %v3867 = vadd.f32 %v3459, %v3477
      %v3868 = vrot.slane %v3867, 4
      %v3869 = vadd.f32 %v3867, %v3868
      %v3870 = vrot.slane %v3869, 2
      %v3871 = vadd.f32 %v3869, %v3870
      %v3872 = vrot.slane %v3871, 1
      %v3873 = vadd.f32 %v3871, %v3872
      %v3874 = vadd.f32 %v3460, %v3478
      %v3875 = vrot.slane %v3874, 4
      %v3876 = vadd.f32 %v3874, %v3875
      %v3877 = vrot.slane %v3876, 2
      %v3878 = vadd.f32 %v3876, %v3877
      %v3879 = vrot.slane %v3878, 1
      %v3880 = vadd.f32 %v3878, %v3879
      %v3881 = vadd.f32 %v3461, %v3479
      %v3882 = vrot.slane %v3881, 4
      %v3883 = vadd.f32 %v3881, %v3882
      %v3884 = vrot.slane %v3883, 2
      %v3885 = vadd.f32 %v3883, %v3884
      %v3886 = vrot.slane %v3885, 1
      %v3887 = vadd.f32 %v3885, %v3886
      %v3888 = vadd.f32 %v3462, %v3480
      %v3889 = vrot.slane %v3888, 4
      %v3890 = vadd.f32 %v3888, %v3889
      %v3891 = vrot.slane %v3890, 2
      %v3892 = vadd.f32 %v3890, %v3891
      %v3893 = vrot.slane %v3892, 1
      %v3894 = vadd.f32 %v3892, %v3893
      %v3895 = vadd.f32 %v3463, %v3481
      %v3896 = vrot.slane %v3895, 4
      %v3897 = vadd.f32 %v3895, %v3896
      %v3898 = vrot.slane %v3897, 2
      %v3899 = vadd.f32 %v3897, %v3898
      %v3900 = vrot.slane %v3899, 1
      %v3901 = vadd.f32 %v3899, %v3900
      %v3902 = vadd.f32 %v3464, %v3482
      %v3903 = vrot.slane %v3902, 4
      %v3904 = vadd.f32 %v3902, %v3903
      %v3905 = vrot.slane %v3904, 2
      %v3906 = vadd.f32 %v3904, %v3905
      %v3907 = vrot.slane %v3906, 1
      %v3908 = vadd.f32 %v3906, %v3907
      %v3909 = vadd.f32 %v3465, %v3483
      %v3910 = vrot.slane %v3909, 4
      %v3911 = vadd.f32 %v3909, %v3910
      %v3912 = vrot.slane %v3911, 2
      %v3913 = vadd.f32 %v3911, %v3912
      %v3914 = vrot.slane %v3913, 1
      %v3915 = vadd.f32 %v3913, %v3914
      %v3916 = vadd.f32 %v3466, %v3484
      %v3917 = vrot.slane %v3916, 4
      %v3918 = vadd.f32 %v3916, %v3917
      %v3919 = vrot.slane %v3918, 2
      %v3920 = vadd.f32 %v3918, %v3919
      %v3921 = vrot.slane %v3920, 1
      %v3922 = vadd.f32 %v3920, %v3921
      %v3923 = vadd.f32 %v3467, %v3485
      %v3924 = vrot.slane %v3923, 4
      %v3925 = vadd.f32 %v3923, %v3924
      %v3926 = vrot.slane %v3925, 2
      %v3927 = vadd.f32 %v3925, %v3926
      %v3928 = vrot.slane %v3927, 1
      %v3929 = vadd.f32 %v3927, %v3928
      %v3930 = vadd.f32 %v3468, %v3486
      %v3931 = vrot.slane %v3930, 4
      %v3932 = vadd.f32 %v3930, %v3931
      %v3933 = vrot.slane %v3932, 2
      %v3934 = vadd.f32 %v3932, %v3933
      %v3935 = vrot.slane %v3934, 1
      %v3936 = vadd.f32 %v3934, %v3935
      %v3937 = vadd.f32 %v3469, %v3487
      %v3938 = vrot.slane %v3937, 4
      %v3939 = vadd.f32 %v3937, %v3938
      %v3940 = vrot.slane %v3939, 2
      %v3941 = vadd.f32 %v3939, %v3940
      %v3942 = vrot.slane %v3941, 1
      %v3943 = vadd.f32 %v3941, %v3942
      %v3944 = vadd.f32 %v3470, %v3488
      %v3945 = vrot.slane %v3944, 4
      %v3946 = vadd.f32 %v3944, %v3945
      %v3947 = vrot.slane %v3946, 2
      %v3948 = vadd.f32 %v3946, %v3947
      %v3949 = vrot.slane %v3948, 1
      %v3950 = vadd.f32 %v3948, %v3949
      %v3951 = vadd.f32 %v3471, %v3489
      %v3952 = vrot.slane %v3951, 4
      %v3953 = vadd.f32 %v3951, %v3952
      %v3954 = vrot.slane %v3953, 2
      %v3955 = vadd.f32 %v3953, %v3954
      %v3956 = vrot.slane %v3955, 1
      %v3957 = vadd.f32 %v3955, %v3956
      %v3958 = vadd.f32 %v3490, %v3508
      %v3959 = vrot.slane %v3958, 4
      %v3960 = vadd.f32 %v3958, %v3959
      %v3961 = vrot.slane %v3960, 2
      %v3962 = vadd.f32 %v3960, %v3961
      %v3963 = vrot.slane %v3962, 1
      %v3964 = vadd.f32 %v3962, %v3963
      %v3965 = vadd.f32 %v3491, %v3509
      %v3966 = vrot.slane %v3965, 4
      %v3967 = vadd.f32 %v3965, %v3966
      %v3968 = vrot.slane %v3967, 2
      %v3969 = vadd.f32 %v3967, %v3968
      %v3970 = vrot.slane %v3969, 1
      %v3971 = vadd.f32 %v3969, %v3970
      %v3972 = vadd.f32 %v3492, %v3510
      %v3973 = vrot.slane %v3972, 4
      %v3974 = vadd.f32 %v3972, %v3973
      %v3975 = vrot.slane %v3974, 2
      %v3976 = vadd.f32 %v3974, %v3975
      %v3977 = vrot.slane %v3976, 1
      %v3978 = vadd.f32 %v3976, %v3977
      %v3979 = vadd.f32 %v3493, %v3511
      %v3980 = vrot.slane %v3979, 4
      %v3981 = vadd.f32 %v3979, %v3980
      %v3982 = vrot.slane %v3981, 2
      %v3983 = vadd.f32 %v3981, %v3982
      %v3984 = vrot.slane %v3983, 1
      %v3985 = vadd.f32 %v3983, %v3984
      %v3986 = vadd.f32 %v3494, %v3512
      %v3987 = vrot.slane %v3986, 4
      %v3988 = vadd.f32 %v3986, %v3987
      %v3989 = vrot.slane %v3988, 2
      %v3990 = vadd.f32 %v3988, %v3989
      %v3991 = vrot.slane %v3990, 1
      %v3992 = vadd.f32 %v3990, %v3991
      %v3993 = vadd.f32 %v3495, %v3513
      %v3994 = vrot.slane %v3993, 4
      %v3995 = vadd.f32 %v3993, %v3994
      %v3996 = vrot.slane %v3995, 2
      %v3997 = vadd.f32 %v3995, %v3996
      %v3998 = vrot.slane %v3997, 1
      %v3999 = vadd.f32 %v3997, %v3998
      %v4000 = vadd.f32 %v3496, %v3514
      %v4001 = vrot.slane %v4000, 4
      %v4002 = vadd.f32 %v4000, %v4001
      %v4003 = vrot.slane %v4002, 2
      %v4004 = vadd.f32 %v4002, %v4003
      %v4005 = vrot.slane %v4004, 1
      %v4006 = vadd.f32 %v4004, %v4005
      %v4007 = vadd.f32 %v3497, %v3515
      %v4008 = vrot.slane %v4007, 4
      %v4009 = vadd.f32 %v4007, %v4008
      %v4010 = vrot.slane %v4009, 2
      %v4011 = vadd.f32 %v4009, %v4010
      %v4012 = vrot.slane %v4011, 1
      %v4013 = vadd.f32 %v4011, %v4012
      %v4014 = vadd.f32 %v3498, %v3516
      %v4015 = vrot.slane %v4014, 4
      %v4016 = vadd.f32 %v4014, %v4015
      %v4017 = vrot.slane %v4016, 2
      %v4018 = vadd.f32 %v4016, %v4017
      %v4019 = vrot.slane %v4018, 1
      %v4020 = vadd.f32 %v4018, %v4019
      %v4021 = vadd.f32 %v3499, %v3517
      %v4022 = vrot.slane %v4021, 4
      %v4023 = vadd.f32 %v4021, %v4022
      %v4024 = vrot.slane %v4023, 2
      %v4025 = vadd.f32 %v4023, %v4024
      %v4026 = vrot.slane %v4025, 1
      %v4027 = vadd.f32 %v4025, %v4026
      %v4028 = vadd.f32 %v3500, %v3518
      %v4029 = vrot.slane %v4028, 4
      %v4030 = vadd.f32 %v4028, %v4029
      %v4031 = vrot.slane %v4030, 2
      %v4032 = vadd.f32 %v4030, %v4031
      %v4033 = vrot.slane %v4032, 1
      %v4034 = vadd.f32 %v4032, %v4033
      %v4035 = vadd.f32 %v3501, %v3519
      %v4036 = vrot.slane %v4035, 4
      %v4037 = vadd.f32 %v4035, %v4036
      %v4038 = vrot.slane %v4037, 2
      %v4039 = vadd.f32 %v4037, %v4038
      %v4040 = vrot.slane %v4039, 1
      %v4041 = vadd.f32 %v4039, %v4040
      %v4042 = vadd.f32 %v3502, %v3520
      %v4043 = vrot.slane %v4042, 4
      %v4044 = vadd.f32 %v4042, %v4043
      %v4045 = vrot.slane %v4044, 2
      %v4046 = vadd.f32 %v4044, %v4045
      %v4047 = vrot.slane %v4046, 1
      %v4048 = vadd.f32 %v4046, %v4047
      %v4049 = vadd.f32 %v3503, %v3521
      %v4050 = vrot.slane %v4049, 4
      %v4051 = vadd.f32 %v4049, %v4050
      %v4052 = vrot.slane %v4051, 2
      %v4053 = vadd.f32 %v4051, %v4052
      %v4054 = vrot.slane %v4053, 1
      %v4055 = vadd.f32 %v4053, %v4054
      %v4056 = vadd.f32 %v3504, %v3522
      %v4057 = vrot.slane %v4056, 4
      %v4058 = vadd.f32 %v4056, %v4057
      %v4059 = vrot.slane %v4058, 2
      %v4060 = vadd.f32 %v4058, %v4059
      %v4061 = vrot.slane %v4060, 1
      %v4062 = vadd.f32 %v4060, %v4061
      %v4063 = vadd.f32 %v3505, %v3523
      %v4064 = vrot.slane %v4063, 4
      %v4065 = vadd.f32 %v4063, %v4064
      %v4066 = vrot.slane %v4065, 2
      %v4067 = vadd.f32 %v4065, %v4066
      %v4068 = vrot.slane %v4067, 1
      %v4069 = vadd.f32 %v4067, %v4068
      %v4070 = vadd.f32 %v3506, %v3524
      %v4071 = vrot.slane %v4070, 4
      %v4072 = vadd.f32 %v4070, %v4071
      %v4073 = vrot.slane %v4072, 2
      %v4074 = vadd.f32 %v4072, %v4073
      %v4075 = vrot.slane %v4074, 1
      %v4076 = vadd.f32 %v4074, %v4075
      %v4077 = vadd.f32 %v3507, %v3525
      %v4078 = vrot.slane %v4077, 4
      %v4079 = vadd.f32 %v4077, %v4078
      %v4080 = vrot.slane %v4079, 2
      %v4081 = vadd.f32 %v4079, %v4080
      %v4082 = vrot.slane %v4081, 1
      %v4083 = vadd.f32 %v4081, %v4082
      %v4084 = vadd.f32 %v3526, %v3544
      %v4085 = vrot.slane %v4084, 4
      %v4086 = vadd.f32 %v4084, %v4085
      %v4087 = vrot.slane %v4086, 2
      %v4088 = vadd.f32 %v4086, %v4087
      %v4089 = vrot.slane %v4088, 1
      %v4090 = vadd.f32 %v4088, %v4089
      %v4091 = vadd.f32 %v3527, %v3545
      %v4092 = vrot.slane %v4091, 4
      %v4093 = vadd.f32 %v4091, %v4092
      %v4094 = vrot.slane %v4093, 2
      %v4095 = vadd.f32 %v4093, %v4094
      %v4096 = vrot.slane %v4095, 1
      %v4097 = vadd.f32 %v4095, %v4096
      %v4098 = vadd.f32 %v3528, %v3546
      %v4099 = vrot.slane %v4098, 4
      %v4100 = vadd.f32 %v4098, %v4099
      %v4101 = vrot.slane %v4100, 2
      %v4102 = vadd.f32 %v4100, %v4101
      %v4103 = vrot.slane %v4102, 1
      %v4104 = vadd.f32 %v4102, %v4103
      %v4105 = vadd.f32 %v3529, %v3547
      %v4106 = vrot.slane %v4105, 4
      %v4107 = vadd.f32 %v4105, %v4106
      %v4108 = vrot.slane %v4107, 2
      %v4109 = vadd.f32 %v4107, %v4108
      %v4110 = vrot.slane %v4109, 1
      %v4111 = vadd.f32 %v4109, %v4110
      %v4112 = vadd.f32 %v3530, %v3548
      %v4113 = vrot.slane %v4112, 4
      %v4114 = vadd.f32 %v4112, %v4113
      %v4115 = vrot.slane %v4114, 2
      %v4116 = vadd.f32 %v4114, %v4115
      %v4117 = vrot.slane %v4116, 1
      %v4118 = vadd.f32 %v4116, %v4117
      %v4119 = vadd.f32 %v3531, %v3549
      %v4120 = vrot.slane %v4119, 4
      %v4121 = vadd.f32 %v4119, %v4120
      %v4122 = vrot.slane %v4121, 2
      %v4123 = vadd.f32 %v4121, %v4122
      %v4124 = vrot.slane %v4123, 1
      %v4125 = vadd.f32 %v4123, %v4124
      %v4126 = vadd.f32 %v3532, %v3550
      %v4127 = vrot.slane %v4126, 4
      %v4128 = vadd.f32 %v4126, %v4127
      %v4129 = vrot.slane %v4128, 2
      %v4130 = vadd.f32 %v4128, %v4129
      %v4131 = vrot.slane %v4130, 1
      %v4132 = vadd.f32 %v4130, %v4131
      %v4133 = vadd.f32 %v3533, %v3551
      %v4134 = vrot.slane %v4133, 4
      %v4135 = vadd.f32 %v4133, %v4134
      %v4136 = vrot.slane %v4135, 2
      %v4137 = vadd.f32 %v4135, %v4136
      %v4138 = vrot.slane %v4137, 1
      %v4139 = vadd.f32 %v4137, %v4138
      %v4140 = vadd.f32 %v3534, %v3552
      %v4141 = vrot.slane %v4140, 4
      %v4142 = vadd.f32 %v4140, %v4141
      %v4143 = vrot.slane %v4142, 2
      %v4144 = vadd.f32 %v4142, %v4143
      %v4145 = vrot.slane %v4144, 1
      %v4146 = vadd.f32 %v4144, %v4145
      %v4147 = vadd.f32 %v3535, %v3553
      %v4148 = vrot.slane %v4147, 4
      %v4149 = vadd.f32 %v4147, %v4148
      %v4150 = vrot.slane %v4149, 2
      %v4151 = vadd.f32 %v4149, %v4150
      %v4152 = vrot.slane %v4151, 1
      %v4153 = vadd.f32 %v4151, %v4152
      %v4154 = vadd.f32 %v3536, %v3554
      %v4155 = vrot.slane %v4154, 4
      %v4156 = vadd.f32 %v4154, %v4155
      %v4157 = vrot.slane %v4156, 2
      %v4158 = vadd.f32 %v4156, %v4157
      %v4159 = vrot.slane %v4158, 1
      %v4160 = vadd.f32 %v4158, %v4159
      %v4161 = vadd.f32 %v3537, %v3555
      %v4162 = vrot.slane %v4161, 4
      %v4163 = vadd.f32 %v4161, %v4162
      %v4164 = vrot.slane %v4163, 2
      %v4165 = vadd.f32 %v4163, %v4164
      %v4166 = vrot.slane %v4165, 1
      %v4167 = vadd.f32 %v4165, %v4166
      %v4168 = vadd.f32 %v3538, %v3556
      %v4169 = vrot.slane %v4168, 4
      %v4170 = vadd.f32 %v4168, %v4169
      %v4171 = vrot.slane %v4170, 2
      %v4172 = vadd.f32 %v4170, %v4171
      %v4173 = vrot.slane %v4172, 1
      %v4174 = vadd.f32 %v4172, %v4173
      %v4175 = vadd.f32 %v3539, %v3557
      %v4176 = vrot.slane %v4175, 4
      %v4177 = vadd.f32 %v4175, %v4176
      %v4178 = vrot.slane %v4177, 2
      %v4179 = vadd.f32 %v4177, %v4178
      %v4180 = vrot.slane %v4179, 1
      %v4181 = vadd.f32 %v4179, %v4180
      %v4182 = vadd.f32 %v3540, %v3558
      %v4183 = vrot.slane %v4182, 4
      %v4184 = vadd.f32 %v4182, %v4183
      %v4185 = vrot.slane %v4184, 2
      %v4186 = vadd.f32 %v4184, %v4185
      %v4187 = vrot.slane %v4186, 1
      %v4188 = vadd.f32 %v4186, %v4187
      %v4189 = vadd.f32 %v3541, %v3559
      %v4190 = vrot.slane %v4189, 4
      %v4191 = vadd.f32 %v4189, %v4190
      %v4192 = vrot.slane %v4191, 2
      %v4193 = vadd.f32 %v4191, %v4192
      %v4194 = vrot.slane %v4193, 1
      %v4195 = vadd.f32 %v4193, %v4194
      %v4196 = vadd.f32 %v3542, %v3560
      %v4197 = vrot.slane %v4196, 4
      %v4198 = vadd.f32 %v4196, %v4197
      %v4199 = vrot.slane %v4198, 2
      %v4200 = vadd.f32 %v4198, %v4199
      %v4201 = vrot.slane %v4200, 1
      %v4202 = vadd.f32 %v4200, %v4201
      %v4203 = vadd.f32 %v3543, %v3561
      %v4204 = vrot.slane %v4203, 4
      %v4205 = vadd.f32 %v4203, %v4204
      %v4206 = vrot.slane %v4205, 2
      %v4207 = vadd.f32 %v4205, %v4206
      %v4208 = vrot.slane %v4207, 1
      %v4209 = vadd.f32 %v4207, %v4208
      %v4210 = vadd.f32 %v3562, %v3580
      %v4211 = vrot.slane %v4210, 4
      %v4212 = vadd.f32 %v4210, %v4211
      %v4213 = vrot.slane %v4212, 2
      %v4214 = vadd.f32 %v4212, %v4213
      %v4215 = vrot.slane %v4214, 1
      %v4216 = vadd.f32 %v4214, %v4215
      %v4217 = vadd.f32 %v3563, %v3581
      %v4218 = vrot.slane %v4217, 4
      %v4219 = vadd.f32 %v4217, %v4218
      %v4220 = vrot.slane %v4219, 2
      %v4221 = vadd.f32 %v4219, %v4220
      %v4222 = vrot.slane %v4221, 1
      %v4223 = vadd.f32 %v4221, %v4222
      %v4224 = vadd.f32 %v3564, %v3582
      %v4225 = vrot.slane %v4224, 4
      %v4226 = vadd.f32 %v4224, %v4225
      %v4227 = vrot.slane %v4226, 2
      %v4228 = vadd.f32 %v4226, %v4227
      %v4229 = vrot.slane %v4228, 1
      %v4230 = vadd.f32 %v4228, %v4229
      %v4231 = vadd.f32 %v3565, %v3583
      %v4232 = vrot.slane %v4231, 4
      %v4233 = vadd.f32 %v4231, %v4232
      %v4234 = vrot.slane %v4233, 2
      %v4235 = vadd.f32 %v4233, %v4234
      %v4236 = vrot.slane %v4235, 1
      %v4237 = vadd.f32 %v4235, %v4236
      %v4238 = vadd.f32 %v3566, %v3584
      %v4239 = vrot.slane %v4238, 4
      %v4240 = vadd.f32 %v4238, %v4239
      %v4241 = vrot.slane %v4240, 2
      %v4242 = vadd.f32 %v4240, %v4241
      %v4243 = vrot.slane %v4242, 1
      %v4244 = vadd.f32 %v4242, %v4243
      %v4245 = vadd.f32 %v3567, %v3585
      %v4246 = vrot.slane %v4245, 4
      %v4247 = vadd.f32 %v4245, %v4246
      %v4248 = vrot.slane %v4247, 2
      %v4249 = vadd.f32 %v4247, %v4248
      %v4250 = vrot.slane %v4249, 1
      %v4251 = vadd.f32 %v4249, %v4250
      %v4252 = vadd.f32 %v3568, %v3586
      %v4253 = vrot.slane %v4252, 4
      %v4254 = vadd.f32 %v4252, %v4253
      %v4255 = vrot.slane %v4254, 2
      %v4256 = vadd.f32 %v4254, %v4255
      %v4257 = vrot.slane %v4256, 1
      %v4258 = vadd.f32 %v4256, %v4257
      %v4259 = vadd.f32 %v3569, %v3587
      %v4260 = vrot.slane %v4259, 4
      %v4261 = vadd.f32 %v4259, %v4260
      %v4262 = vrot.slane %v4261, 2
      %v4263 = vadd.f32 %v4261, %v4262
      %v4264 = vrot.slane %v4263, 1
      %v4265 = vadd.f32 %v4263, %v4264
      %v4266 = vadd.f32 %v3570, %v3588
      %v4267 = vrot.slane %v4266, 4
      %v4268 = vadd.f32 %v4266, %v4267
      %v4269 = vrot.slane %v4268, 2
      %v4270 = vadd.f32 %v4268, %v4269
      %v4271 = vrot.slane %v4270, 1
      %v4272 = vadd.f32 %v4270, %v4271
      %v4273 = vadd.f32 %v3571, %v3589
      %v4274 = vrot.slane %v4273, 4
      %v4275 = vadd.f32 %v4273, %v4274
      %v4276 = vrot.slane %v4275, 2
      %v4277 = vadd.f32 %v4275, %v4276
      %v4278 = vrot.slane %v4277, 1
      %v4279 = vadd.f32 %v4277, %v4278
      %v4280 = vadd.f32 %v3572, %v3590
      %v4281 = vrot.slane %v4280, 4
      %v4282 = vadd.f32 %v4280, %v4281
      %v4283 = vrot.slane %v4282, 2
      %v4284 = vadd.f32 %v4282, %v4283
      %v4285 = vrot.slane %v4284, 1
      %v4286 = vadd.f32 %v4284, %v4285
      %v4287 = vadd.f32 %v3573, %v3591
      %v4288 = vrot.slane %v4287, 4
      %v4289 = vadd.f32 %v4287, %v4288
      %v4290 = vrot.slane %v4289, 2
      %v4291 = vadd.f32 %v4289, %v4290
      %v4292 = vrot.slane %v4291, 1
      %v4293 = vadd.f32 %v4291, %v4292
      %v4294 = vadd.f32 %v3574, %v3592
      %v4295 = vrot.slane %v4294, 4
      %v4296 = vadd.f32 %v4294, %v4295
      %v4297 = vrot.slane %v4296, 2
      %v4298 = vadd.f32 %v4296, %v4297
      %v4299 = vrot.slane %v4298, 1
      %v4300 = vadd.f32 %v4298, %v4299
      %v4301 = vadd.f32 %v3575, %v3593
      %v4302 = vrot.slane %v4301, 4
      %v4303 = vadd.f32 %v4301, %v4302
      %v4304 = vrot.slane %v4303, 2
      %v4305 = vadd.f32 %v4303, %v4304
      %v4306 = vrot.slane %v4305, 1
      %v4307 = vadd.f32 %v4305, %v4306
      %v4308 = vadd.f32 %v3576, %v3594
      %v4309 = vrot.slane %v4308, 4
      %v4310 = vadd.f32 %v4308, %v4309
      %v4311 = vrot.slane %v4310, 2
      %v4312 = vadd.f32 %v4310, %v4311
      %v4313 = vrot.slane %v4312, 1
      %v4314 = vadd.f32 %v4312, %v4313
      %v4315 = vadd.f32 %v3577, %v3595
      %v4316 = vrot.slane %v4315, 4
      %v4317 = vadd.f32 %v4315, %v4316
      %v4318 = vrot.slane %v4317, 2
      %v4319 = vadd.f32 %v4317, %v4318
      %v4320 = vrot.slane %v4319, 1
      %v4321 = vadd.f32 %v4319, %v4320
      %v4322 = vadd.f32 %v3578, %v3596
      %v4323 = vrot.slane %v4322, 4
      %v4324 = vadd.f32 %v4322, %v4323
      %v4325 = vrot.slane %v4324, 2
      %v4326 = vadd.f32 %v4324, %v4325
      %v4327 = vrot.slane %v4326, 1
      %v4328 = vadd.f32 %v4326, %v4327
      %v4329 = vadd.f32 %v3579, %v3597
      %v4330 = vrot.slane %v4329, 4
      %v4331 = vadd.f32 %v4329, %v4330
      %v4332 = vrot.slane %v4331, 2
      %v4333 = vadd.f32 %v4331, %v4332
      %v4334 = vrot.slane %v4333, 1
      %v4335 = vadd.f32 %v4333, %v4334
      %v4336 = vadd.f32 %v3598, %v3616
      %v4337 = vrot.slane %v4336, 4
      %v4338 = vadd.f32 %v4336, %v4337
      %v4339 = vrot.slane %v4338, 2
      %v4340 = vadd.f32 %v4338, %v4339
      %v4341 = vrot.slane %v4340, 1
      %v4342 = vadd.f32 %v4340, %v4341
      %v4343 = vadd.f32 %v3599, %v3617
      %v4344 = vrot.slane %v4343, 4
      %v4345 = vadd.f32 %v4343, %v4344
      %v4346 = vrot.slane %v4345, 2
      %v4347 = vadd.f32 %v4345, %v4346
      %v4348 = vrot.slane %v4347, 1
      %v4349 = vadd.f32 %v4347, %v4348
      %v4350 = vadd.f32 %v3600, %v3618
      %v4351 = vrot.slane %v4350, 4
      %v4352 = vadd.f32 %v4350, %v4351
      %v4353 = vrot.slane %v4352, 2
      %v4354 = vadd.f32 %v4352, %v4353
      %v4355 = vrot.slane %v4354, 1
      %v4356 = vadd.f32 %v4354, %v4355
      %v4357 = vadd.f32 %v3601, %v3619
      %v4358 = vrot.slane %v4357, 4
      %v4359 = vadd.f32 %v4357, %v4358
      %v4360 = vrot.slane %v4359, 2
      %v4361 = vadd.f32 %v4359, %v4360
      %v4362 = vrot.slane %v4361, 1
      %v4363 = vadd.f32 %v4361, %v4362
      %v4364 = vadd.f32 %v3602, %v3620
      %v4365 = vrot.slane %v4364, 4
      %v4366 = vadd.f32 %v4364, %v4365
      %v4367 = vrot.slane %v4366, 2
      %v4368 = vadd.f32 %v4366, %v4367
      %v4369 = vrot.slane %v4368, 1
      %v4370 = vadd.f32 %v4368, %v4369
      %v4371 = vadd.f32 %v3603, %v3621
      %v4372 = vrot.slane %v4371, 4
      %v4373 = vadd.f32 %v4371, %v4372
      %v4374 = vrot.slane %v4373, 2
      %v4375 = vadd.f32 %v4373, %v4374
      %v4376 = vrot.slane %v4375, 1
      %v4377 = vadd.f32 %v4375, %v4376
      %v4378 = vadd.f32 %v3604, %v3622
      %v4379 = vrot.slane %v4378, 4
      %v4380 = vadd.f32 %v4378, %v4379
      %v4381 = vrot.slane %v4380, 2
      %v4382 = vadd.f32 %v4380, %v4381
      %v4383 = vrot.slane %v4382, 1
      %v4384 = vadd.f32 %v4382, %v4383
      %v4385 = vadd.f32 %v3605, %v3623
      %v4386 = vrot.slane %v4385, 4
      %v4387 = vadd.f32 %v4385, %v4386
      %v4388 = vrot.slane %v4387, 2
      %v4389 = vadd.f32 %v4387, %v4388
      %v4390 = vrot.slane %v4389, 1
      %v4391 = vadd.f32 %v4389, %v4390
      %v4392 = vadd.f32 %v3606, %v3624
      %v4393 = vrot.slane %v4392, 4
      %v4394 = vadd.f32 %v4392, %v4393
      %v4395 = vrot.slane %v4394, 2
      %v4396 = vadd.f32 %v4394, %v4395
      %v4397 = vrot.slane %v4396, 1
      %v4398 = vadd.f32 %v4396, %v4397
      %v4399 = vadd.f32 %v3607, %v3625
      %v4400 = vrot.slane %v4399, 4
      %v4401 = vadd.f32 %v4399, %v4400
      %v4402 = vrot.slane %v4401, 2
      %v4403 = vadd.f32 %v4401, %v4402
      %v4404 = vrot.slane %v4403, 1
      %v4405 = vadd.f32 %v4403, %v4404
      %v4406 = vadd.f32 %v3608, %v3626
      %v4407 = vrot.slane %v4406, 4
      %v4408 = vadd.f32 %v4406, %v4407
      %v4409 = vrot.slane %v4408, 2
      %v4410 = vadd.f32 %v4408, %v4409
      %v4411 = vrot.slane %v4410, 1
      %v4412 = vadd.f32 %v4410, %v4411
      %v4413 = vadd.f32 %v3609, %v3627
      %v4414 = vrot.slane %v4413, 4
      %v4415 = vadd.f32 %v4413, %v4414
      %v4416 = vrot.slane %v4415, 2
      %v4417 = vadd.f32 %v4415, %v4416
      %v4418 = vrot.slane %v4417, 1
      %v4419 = vadd.f32 %v4417, %v4418
      %v4420 = vadd.f32 %v3610, %v3628
      %v4421 = vrot.slane %v4420, 4
      %v4422 = vadd.f32 %v4420, %v4421
      %v4423 = vrot.slane %v4422, 2
      %v4424 = vadd.f32 %v4422, %v4423
      %v4425 = vrot.slane %v4424, 1
      %v4426 = vadd.f32 %v4424, %v4425
      %v4427 = vadd.f32 %v3611, %v3629
      %v4428 = vrot.slane %v4427, 4
      %v4429 = vadd.f32 %v4427, %v4428
      %v4430 = vrot.slane %v4429, 2
      %v4431 = vadd.f32 %v4429, %v4430
      %v4432 = vrot.slane %v4431, 1
      %v4433 = vadd.f32 %v4431, %v4432
      %v4434 = vadd.f32 %v3612, %v3630
      %v4435 = vrot.slane %v4434, 4
      %v4436 = vadd.f32 %v4434, %v4435
      %v4437 = vrot.slane %v4436, 2
      %v4438 = vadd.f32 %v4436, %v4437
      %v4439 = vrot.slane %v4438, 1
      %v4440 = vadd.f32 %v4438, %v4439
      %v4441 = vadd.f32 %v3613, %v3631
      %v4442 = vrot.slane %v4441, 4
      %v4443 = vadd.f32 %v4441, %v4442
      %v4444 = vrot.slane %v4443, 2
      %v4445 = vadd.f32 %v4443, %v4444
      %v4446 = vrot.slane %v4445, 1
      %v4447 = vadd.f32 %v4445, %v4446
      %v4448 = vadd.f32 %v3614, %v3632
      %v4449 = vrot.slane %v4448, 4
      %v4450 = vadd.f32 %v4448, %v4449
      %v4451 = vrot.slane %v4450, 2
      %v4452 = vadd.f32 %v4450, %v4451
      %v4453 = vrot.slane %v4452, 1
      %v4454 = vadd.f32 %v4452, %v4453
      %v4455 = vadd.f32 %v3615, %v3633
      %v4456 = vrot.slane %v4455, 4
      %v4457 = vadd.f32 %v4455, %v4456
      %v4458 = vrot.slane %v4457, 2
      %v4459 = vadd.f32 %v4457, %v4458
      %v4460 = vrot.slane %v4459, 1
      %v4461 = vadd.f32 %v4459, %v4460
      %v4462 = vadd.f32 %v3634, %v3652
      %v4463 = vrot.slane %v4462, 4
      %v4464 = vadd.f32 %v4462, %v4463
      %v4465 = vrot.slane %v4464, 2
      %v4466 = vadd.f32 %v4464, %v4465
      %v4467 = vrot.slane %v4466, 1
      %v4468 = vadd.f32 %v4466, %v4467
      %v4469 = vadd.f32 %v3635, %v3653
      %v4470 = vrot.slane %v4469, 4
      %v4471 = vadd.f32 %v4469, %v4470
      %v4472 = vrot.slane %v4471, 2
      %v4473 = vadd.f32 %v4471, %v4472
      %v4474 = vrot.slane %v4473, 1
      %v4475 = vadd.f32 %v4473, %v4474
      %v4476 = vadd.f32 %v3636, %v3654
      %v4477 = vrot.slane %v4476, 4
      %v4478 = vadd.f32 %v4476, %v4477
      %v4479 = vrot.slane %v4478, 2
      %v4480 = vadd.f32 %v4478, %v4479
      %v4481 = vrot.slane %v4480, 1
      %v4482 = vadd.f32 %v4480, %v4481
      %v4483 = vadd.f32 %v3637, %v3655
      %v4484 = vrot.slane %v4483, 4
      %v4485 = vadd.f32 %v4483, %v4484
      %v4486 = vrot.slane %v4485, 2
      %v4487 = vadd.f32 %v4485, %v4486
      %v4488 = vrot.slane %v4487, 1
      %v4489 = vadd.f32 %v4487, %v4488
      %v4490 = vadd.f32 %v3638, %v3656
      %v4491 = vrot.slane %v4490, 4
      %v4492 = vadd.f32 %v4490, %v4491
      %v4493 = vrot.slane %v4492, 2
      %v4494 = vadd.f32 %v4492, %v4493
      %v4495 = vrot.slane %v4494, 1
      %v4496 = vadd.f32 %v4494, %v4495
      %v4497 = vadd.f32 %v3639, %v3657
      %v4498 = vrot.slane %v4497, 4
      %v4499 = vadd.f32 %v4497, %v4498
      %v4500 = vrot.slane %v4499, 2
      %v4501 = vadd.f32 %v4499, %v4500
      %v4502 = vrot.slane %v4501, 1
      %v4503 = vadd.f32 %v4501, %v4502
      %v4504 = vadd.f32 %v3640, %v3658
      %v4505 = vrot.slane %v4504, 4
      %v4506 = vadd.f32 %v4504, %v4505
      %v4507 = vrot.slane %v4506, 2
      %v4508 = vadd.f32 %v4506, %v4507
      %v4509 = vrot.slane %v4508, 1
      %v4510 = vadd.f32 %v4508, %v4509
      %v4511 = vadd.f32 %v3641, %v3659
      %v4512 = vrot.slane %v4511, 4
      %v4513 = vadd.f32 %v4511, %v4512
      %v4514 = vrot.slane %v4513, 2
      %v4515 = vadd.f32 %v4513, %v4514
      %v4516 = vrot.slane %v4515, 1
      %v4517 = vadd.f32 %v4515, %v4516
      %v4518 = vadd.f32 %v3642, %v3660
      %v4519 = vrot.slane %v4518, 4
      %v4520 = vadd.f32 %v4518, %v4519
      %v4521 = vrot.slane %v4520, 2
      %v4522 = vadd.f32 %v4520, %v4521
      %v4523 = vrot.slane %v4522, 1
      %v4524 = vadd.f32 %v4522, %v4523
      %v4525 = vadd.f32 %v3643, %v3661
      %v4526 = vrot.slane %v4525, 4
      %v4527 = vadd.f32 %v4525, %v4526
      %v4528 = vrot.slane %v4527, 2
      %v4529 = vadd.f32 %v4527, %v4528
      %v4530 = vrot.slane %v4529, 1
      %v4531 = vadd.f32 %v4529, %v4530
      %v4532 = vadd.f32 %v3644, %v3662
      %v4533 = vrot.slane %v4532, 4
      %v4534 = vadd.f32 %v4532, %v4533
      %v4535 = vrot.slane %v4534, 2
      %v4536 = vadd.f32 %v4534, %v4535
      %v4537 = vrot.slane %v4536, 1
      %v4538 = vadd.f32 %v4536, %v4537
      %v4539 = vadd.f32 %v3645, %v3663
      %v4540 = vrot.slane %v4539, 4
      %v4541 = vadd.f32 %v4539, %v4540
      %v4542 = vrot.slane %v4541, 2
      %v4543 = vadd.f32 %v4541, %v4542
      %v4544 = vrot.slane %v4543, 1
      %v4545 = vadd.f32 %v4543, %v4544
      %v4546 = vadd.f32 %v3646, %v3664
      %v4547 = vrot.slane %v4546, 4
      %v4548 = vadd.f32 %v4546, %v4547
      %v4549 = vrot.slane %v4548, 2
      %v4550 = vadd.f32 %v4548, %v4549
      %v4551 = vrot.slane %v4550, 1
      %v4552 = vadd.f32 %v4550, %v4551
      %v4553 = vadd.f32 %v3647, %v3665
      %v4554 = vrot.slane %v4553, 4
      %v4555 = vadd.f32 %v4553, %v4554
      %v4556 = vrot.slane %v4555, 2
      %v4557 = vadd.f32 %v4555, %v4556
      %v4558 = vrot.slane %v4557, 1
      %v4559 = vadd.f32 %v4557, %v4558
      %v4560 = vadd.f32 %v3648, %v3666
      %v4561 = vrot.slane %v4560, 4
      %v4562 = vadd.f32 %v4560, %v4561
      %v4563 = vrot.slane %v4562, 2
      %v4564 = vadd.f32 %v4562, %v4563
      %v4565 = vrot.slane %v4564, 1
      %v4566 = vadd.f32 %v4564, %v4565
      %v4567 = vadd.f32 %v3649, %v3667
      %v4568 = vrot.slane %v4567, 4
      %v4569 = vadd.f32 %v4567, %v4568
      %v4570 = vrot.slane %v4569, 2
      %v4571 = vadd.f32 %v4569, %v4570
      %v4572 = vrot.slane %v4571, 1
      %v4573 = vadd.f32 %v4571, %v4572
      %v4574 = vadd.f32 %v3650, %v3668
      %v4575 = vrot.slane %v4574, 4
      %v4576 = vadd.f32 %v4574, %v4575
      %v4577 = vrot.slane %v4576, 2
      %v4578 = vadd.f32 %v4576, %v4577
      %v4579 = vrot.slane %v4578, 1
      %v4580 = vadd.f32 %v4578, %v4579
      %v4581 = vadd.f32 %v3651, %v3669
      %v4582 = vrot.slane %v4581, 4
      %v4583 = vadd.f32 %v4581, %v4582
      %v4584 = vrot.slane %v4583, 2
      %v4585 = vadd.f32 %v4583, %v4584
      %v4586 = vrot.slane %v4585, 1
      %v4587 = vadd.f32 %v4585, %v4586
      %v4588 = vadd.f32 %v3670, %v3688
      %v4589 = vrot.slane %v4588, 4
      %v4590 = vadd.f32 %v4588, %v4589
      %v4591 = vrot.slane %v4590, 2
      %v4592 = vadd.f32 %v4590, %v4591
      %v4593 = vrot.slane %v4592, 1
      %v4594 = vadd.f32 %v4592, %v4593
      %v4595 = vadd.f32 %v3671, %v3689
      %v4596 = vrot.slane %v4595, 4
      %v4597 = vadd.f32 %v4595, %v4596
      %v4598 = vrot.slane %v4597, 2
      %v4599 = vadd.f32 %v4597, %v4598
      %v4600 = vrot.slane %v4599, 1
      %v4601 = vadd.f32 %v4599, %v4600
      %v4602 = vadd.f32 %v3672, %v3690
      %v4603 = vrot.slane %v4602, 4
      %v4604 = vadd.f32 %v4602, %v4603
      %v4605 = vrot.slane %v4604, 2
      %v4606 = vadd.f32 %v4604, %v4605
      %v4607 = vrot.slane %v4606, 1
      %v4608 = vadd.f32 %v4606, %v4607
      %v4609 = vadd.f32 %v3673, %v3691
      %v4610 = vrot.slane %v4609, 4
      %v4611 = vadd.f32 %v4609, %v4610
      %v4612 = vrot.slane %v4611, 2
      %v4613 = vadd.f32 %v4611, %v4612
      %v4614 = vrot.slane %v4613, 1
      %v4615 = vadd.f32 %v4613, %v4614
      %v4616 = vadd.f32 %v3674, %v3692
      %v4617 = vrot.slane %v4616, 4
      %v4618 = vadd.f32 %v4616, %v4617
      %v4619 = vrot.slane %v4618, 2
      %v4620 = vadd.f32 %v4618, %v4619
      %v4621 = vrot.slane %v4620, 1
      %v4622 = vadd.f32 %v4620, %v4621
      %v4623 = vadd.f32 %v3675, %v3693
      %v4624 = vrot.slane %v4623, 4
      %v4625 = vadd.f32 %v4623, %v4624
      %v4626 = vrot.slane %v4625, 2
      %v4627 = vadd.f32 %v4625, %v4626
      %v4628 = vrot.slane %v4627, 1
      %v4629 = vadd.f32 %v4627, %v4628
      %v4630 = vadd.f32 %v3676, %v3694
      %v4631 = vrot.slane %v4630, 4
      %v4632 = vadd.f32 %v4630, %v4631
      %v4633 = vrot.slane %v4632, 2
      %v4634 = vadd.f32 %v4632, %v4633
      %v4635 = vrot.slane %v4634, 1
      %v4636 = vadd.f32 %v4634, %v4635
      %v4637 = vadd.f32 %v3677, %v3695
      %v4638 = vrot.slane %v4637, 4
      %v4639 = vadd.f32 %v4637, %v4638
      %v4640 = vrot.slane %v4639, 2
      %v4641 = vadd.f32 %v4639, %v4640
      %v4642 = vrot.slane %v4641, 1
      %v4643 = vadd.f32 %v4641, %v4642
      %v4644 = vadd.f32 %v3678, %v3696
      %v4645 = vrot.slane %v4644, 4
      %v4646 = vadd.f32 %v4644, %v4645
      %v4647 = vrot.slane %v4646, 2
      %v4648 = vadd.f32 %v4646, %v4647
      %v4649 = vrot.slane %v4648, 1
      %v4650 = vadd.f32 %v4648, %v4649
      %v4651 = vadd.f32 %v3679, %v3697
      %v4652 = vrot.slane %v4651, 4
      %v4653 = vadd.f32 %v4651, %v4652
      %v4654 = vrot.slane %v4653, 2
      %v4655 = vadd.f32 %v4653, %v4654
      %v4656 = vrot.slane %v4655, 1
      %v4657 = vadd.f32 %v4655, %v4656
      %v4658 = vadd.f32 %v3680, %v3698
      %v4659 = vrot.slane %v4658, 4
      %v4660 = vadd.f32 %v4658, %v4659
      %v4661 = vrot.slane %v4660, 2
      %v4662 = vadd.f32 %v4660, %v4661
      %v4663 = vrot.slane %v4662, 1
      %v4664 = vadd.f32 %v4662, %v4663
      %v4665 = vadd.f32 %v3681, %v3699
      %v4666 = vrot.slane %v4665, 4
      %v4667 = vadd.f32 %v4665, %v4666
      %v4668 = vrot.slane %v4667, 2
      %v4669 = vadd.f32 %v4667, %v4668
      %v4670 = vrot.slane %v4669, 1
      %v4671 = vadd.f32 %v4669, %v4670
      %v4672 = vadd.f32 %v3682, %v3700
      %v4673 = vrot.slane %v4672, 4
      %v4674 = vadd.f32 %v4672, %v4673
      %v4675 = vrot.slane %v4674, 2
      %v4676 = vadd.f32 %v4674, %v4675
      %v4677 = vrot.slane %v4676, 1
      %v4678 = vadd.f32 %v4676, %v4677
      %v4679 = vadd.f32 %v3683, %v3701
      %v4680 = vrot.slane %v4679, 4
      %v4681 = vadd.f32 %v4679, %v4680
      %v4682 = vrot.slane %v4681, 2
      %v4683 = vadd.f32 %v4681, %v4682
      %v4684 = vrot.slane %v4683, 1
      %v4685 = vadd.f32 %v4683, %v4684
      %v4686 = vadd.f32 %v3684, %v3702
      %v4687 = vrot.slane %v4686, 4
      %v4688 = vadd.f32 %v4686, %v4687
      %v4689 = vrot.slane %v4688, 2
      %v4690 = vadd.f32 %v4688, %v4689
      %v4691 = vrot.slane %v4690, 1
      %v4692 = vadd.f32 %v4690, %v4691
      %v4693 = vadd.f32 %v3685, %v3703
      %v4694 = vrot.slane %v4693, 4
      %v4695 = vadd.f32 %v4693, %v4694
      %v4696 = vrot.slane %v4695, 2
      %v4697 = vadd.f32 %v4695, %v4696
      %v4698 = vrot.slane %v4697, 1
      %v4699 = vadd.f32 %v4697, %v4698
      %v4700 = vadd.f32 %v3686, %v3704
      %v4701 = vrot.slane %v4700, 4
      %v4702 = vadd.f32 %v4700, %v4701
      %v4703 = vrot.slane %v4702, 2
      %v4704 = vadd.f32 %v4702, %v4703
      %v4705 = vrot.slane %v4704, 1
      %v4706 = vadd.f32 %v4704, %v4705
      %v4707 = vadd.f32 %v3687, %v3705
      %v4708 = vrot.slane %v4707, 4
      %v4709 = vadd.f32 %v4707, %v4708
      %v4710 = vrot.slane %v4709, 2
      %v4711 = vadd.f32 %v4709, %v4710
      %v4712 = vrot.slane %v4711, 1
      %v4713 = vadd.f32 %v4711, %v4712
      %vm4730 = vcmask 1041409
      %v4731 = vsel %vm4730, %v3838, %v3712
      %vm4732 = vcmask 1042434
      %v4733 = vsel %vm4732, %v3964, %v4731
      %vm4734 = vcmask 1043459
      %v4735 = vsel %vm4734, %v4090, %v4733
      %vm4736 = vcmask 1044484
      %v4737 = vsel %vm4736, %v4216, %v4735
      %vm4738 = vcmask 1045509
      %v4739 = vsel %vm4738, %v4342, %v4737
      %vm4740 = vcmask 1046534
      %v4741 = vsel %vm4740, %v4468, %v4739
      %vm4742 = vcmask 1047559
      %v4743 = vsel %vm4742, %v4594, %v4741
      %v4744 = vsel %vm4730, %v3845, %v3719
      %v4745 = vsel %vm4732, %v3971, %v4744
      %v4746 = vsel %vm4734, %v4097, %v4745
      %v4747 = vsel %vm4736, %v4223, %v4746
      %v4748 = vsel %vm4738, %v4349, %v4747
      %v4749 = vsel %vm4740, %v4475, %v4748
      %v4750 = vsel %vm4742, %v4601, %v4749
      %v4769 = vsel %vm4730, %v3852, %v3726
      %v4770 = vsel %vm4732, %v3978, %v4769
      %v4771 = vsel %vm4734, %v4104, %v4770
      %v4772 = vsel %vm4736, %v4230, %v4771
      %v4773 = vsel %vm4738, %v4356, %v4772
      %v4774 = vsel %vm4740, %v4482, %v4773
      %v4775 = vsel %vm4742, %v4608, %v4774
      %v4776 = vsel %vm4730, %v3859, %v3733
      %v4777 = vsel %vm4732, %v3985, %v4776
      %v4778 = vsel %vm4734, %v4111, %v4777
      %v4779 = vsel %vm4736, %v4237, %v4778
      %v4780 = vsel %vm4738, %v4363, %v4779
      %v4781 = vsel %vm4740, %v4489, %v4780
      %v4782 = vsel %vm4742, %v4615, %v4781
      %v4801 = vsel %vm4730, %v3866, %v3740
      %v4802 = vsel %vm4732, %v3992, %v4801
      %v4803 = vsel %vm4734, %v4118, %v4802
      %v4804 = vsel %vm4736, %v4244, %v4803
      %v4805 = vsel %vm4738, %v4370, %v4804
      %v4806 = vsel %vm4740, %v4496, %v4805
      %v4807 = vsel %vm4742, %v4622, %v4806
      %v4808 = vsel %vm4730, %v3873, %v3747
      %v4809 = vsel %vm4732, %v3999, %v4808
      %v4810 = vsel %vm4734, %v4125, %v4809
      %v4811 = vsel %vm4736, %v4251, %v4810
      %v4812 = vsel %vm4738, %v4377, %v4811
      %v4813 = vsel %vm4740, %v4503, %v4812
      %v4814 = vsel %vm4742, %v4629, %v4813
      %v4833 = vsel %vm4730, %v3880, %v3754
      %v4834 = vsel %vm4732, %v4006, %v4833
      %v4835 = vsel %vm4734, %v4132, %v4834
      %v4836 = vsel %vm4736, %v4258, %v4835
      %v4837 = vsel %vm4738, %v4384, %v4836
      %v4838 = vsel %vm4740, %v4510, %v4837
      %v4839 = vsel %vm4742, %v4636, %v4838
      %v4840 = vsel %vm4730, %v3887, %v3761
      %v4841 = vsel %vm4732, %v4013, %v4840
      %v4842 = vsel %vm4734, %v4139, %v4841
      %v4843 = vsel %vm4736, %v4265, %v4842
      %v4844 = vsel %vm4738, %v4391, %v4843
      %v4845 = vsel %vm4740, %v4517, %v4844
      %v4846 = vsel %vm4742, %v4643, %v4845
      %v4865 = vsel %vm4730, %v3894, %v3768
      %v4866 = vsel %vm4732, %v4020, %v4865
      %v4867 = vsel %vm4734, %v4146, %v4866
      %v4868 = vsel %vm4736, %v4272, %v4867
      %v4869 = vsel %vm4738, %v4398, %v4868
      %v4870 = vsel %vm4740, %v4524, %v4869
      %v4871 = vsel %vm4742, %v4650, %v4870
      %v4872 = vsel %vm4730, %v3901, %v3775
      %v4873 = vsel %vm4732, %v4027, %v4872
      %v4874 = vsel %vm4734, %v4153, %v4873
      %v4875 = vsel %vm4736, %v4279, %v4874
      %v4876 = vsel %vm4738, %v4405, %v4875
      %v4877 = vsel %vm4740, %v4531, %v4876
      %v4878 = vsel %vm4742, %v4657, %v4877
      %v4897 = vsel %vm4730, %v3908, %v3782
      %v4898 = vsel %vm4732, %v4034, %v4897
      %v4899 = vsel %vm4734, %v4160, %v4898
      %v4900 = vsel %vm4736, %v4286, %v4899
      %v4901 = vsel %vm4738, %v4412, %v4900
      %v4902 = vsel %vm4740, %v4538, %v4901
      %v4903 = vsel %vm4742, %v4664, %v4902
      %v4904 = vsel %vm4730, %v3915, %v3789
      %v4905 = vsel %vm4732, %v4041, %v4904
      %v4906 = vsel %vm4734, %v4167, %v4905
      %v4907 = vsel %vm4736, %v4293, %v4906
      %v4908 = vsel %vm4738, %v4419, %v4907
      %v4909 = vsel %vm4740, %v4545, %v4908
      %v4910 = vsel %vm4742, %v4671, %v4909
      %v4929 = vsel %vm4730, %v3922, %v3796
      %v4930 = vsel %vm4732, %v4048, %v4929
      %v4931 = vsel %vm4734, %v4174, %v4930
      %v4932 = vsel %vm4736, %v4300, %v4931
      %v4933 = vsel %vm4738, %v4426, %v4932
      %v4934 = vsel %vm4740, %v4552, %v4933
      %v4935 = vsel %vm4742, %v4678, %v4934
      %v4936 = vsel %vm4730, %v3929, %v3803
      %v4937 = vsel %vm4732, %v4055, %v4936
      %v4938 = vsel %vm4734, %v4181, %v4937
      %v4939 = vsel %vm4736, %v4307, %v4938
      %v4940 = vsel %vm4738, %v4433, %v4939
      %v4941 = vsel %vm4740, %v4559, %v4940
      %v4942 = vsel %vm4742, %v4685, %v4941
      %v4961 = vsel %vm4730, %v3936, %v3810
      %v4962 = vsel %vm4732, %v4062, %v4961
      %v4963 = vsel %vm4734, %v4188, %v4962
      %v4964 = vsel %vm4736, %v4314, %v4963
      %v4965 = vsel %vm4738, %v4440, %v4964
      %v4966 = vsel %vm4740, %v4566, %v4965
      %v4967 = vsel %vm4742, %v4692, %v4966
      %v4968 = vsel %vm4730, %v3943, %v3817
      %v4969 = vsel %vm4732, %v4069, %v4968
      %v4970 = vsel %vm4734, %v4195, %v4969
      %v4971 = vsel %vm4736, %v4321, %v4970
      %v4972 = vsel %vm4738, %v4447, %v4971
      %v4973 = vsel %vm4740, %v4573, %v4972
      %v4974 = vsel %vm4742, %v4699, %v4973
      %v4993 = vsel %vm4730, %v3950, %v3824
      %v4994 = vsel %vm4732, %v4076, %v4993
      %v4995 = vsel %vm4734, %v4202, %v4994
      %v4996 = vsel %vm4736, %v4328, %v4995
      %v4997 = vsel %vm4738, %v4454, %v4996
      %v4998 = vsel %vm4740, %v4580, %v4997
      %v4999 = vsel %vm4742, %v4706, %v4998
      %v5000 = vsel %vm4730, %v3957, %v3831
      %v5001 = vsel %vm4732, %v4083, %v5000
      %v5002 = vsel %vm4734, %v4209, %v5001
      %v5003 = vsel %vm4736, %v4335, %v5002
      %v5004 = vsel %vm4738, %v4461, %v5003
      %v5005 = vsel %vm4740, %v4587, %v5004
      %v5006 = vsel %vm4742, %v4713, %v5005
      %vm5009 = vcmask 588800
      %v5011 = vsel %vm5009, %v194, 0
      %5013 = vmatprep.subr.mxu0 %v4750
      %5014 = vmatpush1.msra.mxu0 %v4743
      %5015 = vmatprep.subr.mxu0 %v4782
      %5016 = vmatpush1.msra.mxu0 %v4775
      %5017 = vmatprep.subr.mxu0 %v4814
      %5018 = vmatpush1.msra.mxu0 %v4807
      %5019 = vmatprep.subr.mxu0 %v4846
      %5020 = vmatpush1.msra.mxu0 %v4839
      %5021 = vmatprep.subr.mxu0 %v4878
      %5022 = vmatpush1.msra.mxu0 %v4871
      %5023 = vmatprep.subr.mxu0 %v4910
      %5024 = vmatpush1.msra.mxu0 %v4903
      %5025 = vmatprep.subr.mxu0 %v4942
      %5026 = vmatpush1.msra.mxu0 %v4935
      %5027 = vmatprep.subr.mxu0 %v4974
      %5028 = vmatpush1.msra.mxu0 %v4967
      %5029 = vmatprep.subr.mxu0 %v5006
      %5030 = vmatpush1.msra.mxu0 %v4999
      %5031 = vmatprep.subr.mxu0 0.0
      %5032 = vmatpush1.msra.mxu0 0.0
      %5033 = vmatprep.subr.mxu0 0.0
      %5034 = vmatpush1.msra.mxu0 0.0
      %5035 = vmatprep.subr.mxu0 0.0
      %5036 = vmatpush1.msra.mxu0 0.0
      %5037 = vmatprep.subr.mxu0 0.0
      %5038 = vmatpush1.msra.mxu0 0.0
      %5039 = vmatprep.subr.mxu0 0.0
      %5040 = vmatpush1.msra.mxu0 0.0
      %5041 = vmatprep.subr.mxu0 0.0
      %5042 = vmatpush1.msra.mxu0 0.0
      %5043 = vmatprep.subr.mxu0 0.0
      %5044 = vmatpush1.msra.mxu0 0.0
      %5045 = vmatprep.subr.mxu0 0.0
      %5046 = vmatpush1.msra.mxu0 0.0
      %5047 = vmatprep.subr.mxu0 0.0
      %5048 = vmatpush1.msra.mxu0 0.0
      %5049 = vmatprep.subr.mxu0 0.0
      %5050 = vmatpush1.msra.mxu0 0.0
      %5051 = vmatprep.subr.mxu0 0.0
      %5052 = vmatpush1.msra.mxu0 0.0
      %5053 = vmatprep.subr.mxu0 0.0
      %5054 = vmatpush1.msra.mxu0 0.0
      %5055 = vmatprep.subr.mxu0 0.0
      %5056 = vmatpush1.msra.mxu0 0.0
      %5057 = vmatprep.subr.mxu0 0.0
      %5058 = vmatpush1.msra.mxu0 0.0
      %5059 = vmatprep.subr.mxu0 0.0
      %5060 = vmatpush1.msra.mxu0 0.0
      %5061 = vmatprep.subr.mxu0 0.0
      %5062 = vmatpush1.msra.mxu0 0.0
      %5063 = vmatprep.subr.mxu0 0.0
      %5064 = vmatpush1.msra.mxu0 0.0
      %5065 = vmatprep.subr.mxu0 0.0
      %5066 = vmatpush1.msra.mxu0 0.0
      %5067 = vmatprep.subr.mxu0 0.0
      %5068 = vmatpush1.msra.mxu0 0.0
      %5069 = vmatprep.subr.mxu0 0.0
      %5070 = vmatpush1.msra.mxu0 0.0
      %5071 = vmatprep.subr.mxu0 0.0
      %5072 = vmatpush1.msra.mxu0 0.0
      %5073 = vmatprep.subr.mxu0 0.0
      %5074 = vmatpush1.msra.mxu0 0.0
      %5075 = vmatprep.subr.mxu0 0.0
      %5076 = vmatpush1.msra.mxu0 0.0
      %5077 = vmatprep.mubr.f32.mxu0 0.0
      %5078 = vmatmul.mubr.f32.gmra.mrb[0].mxu0 %v5011
      %v5079 = vpop.f32.mrb[0].mxu0
      %v5080 = vadd.f32 0.0, %v5079
      %v5081 = vpop.f32.mrb[0].mxu0
      %v5082 = vadd.f32 0.0, %v5081
      %5083 = vdwg.mxu0
      %5084 = vst [vmem:[%s190] sm:$0xff] %v5080
      %5085 = vst [vmem:[%s190 + $0x8] sm:$0xff] %v5082
      %p5086 = scmp.lt.s32.totalorder %s14, 1
      %s5087 = scalar_select %p5086, %s14, 1
      %s5088 = smul.addr %s5087, 2
      %s5089 = smul.addr %s5088, 8
      %s5090 = scalar_lea.vmem %s3, %s5089
      // Predicated region
      $region33: #{deform_conv.1} parent=31 // pred_check
        %p5091 = pneg %p105
      $region34: #{deform_conv.1} parent=31 // pred_check_branch
        %5093 = sbr.rel (%p5091) target = $region36
      $region35: #{deform_conv.1} parent=31 // pred_region
        _
      $region36: #{deform_conv.1} parent=31 // pred_fallthru
        _
    $region32: #{deform_conv.1} parent=5 // pred_fallthru
      _
    %p5094 = scmp.le.s32.totalorder 2, %s9
    // Predicated region
    $region37: #{deform_conv.1} parent=5 // pred_check
      %p5095 = pneg %p5094
    $region38: #{deform_conv.1} parent=5 // pred_check_branch
      %5097 = sbr.rel (%p5095) target = $region40
    $region39: #{deform_conv.1} parent=5 // pred_region
      %s5098 = ssub.s32 %s9, 2
      // Predicated region
      $region41: #{deform_conv.1} parent=39 // pred_check
        %p5099 = pneg %p111
      $region42: #{deform_conv.1} parent=39 // pred_check_branch
        %5101 = sbr.rel (%p5099) target = $region44
      $region43: #{deform_conv.1} parent=39 // pred_region
        %p5102 = scmp.lt.s32.totalorder %s15, 1
        %s5103 = scalar_select %p5102, %s15, 1
        %s5104 = smul.addr %s5103, 2
        %s5105 = smul.addr %s5104, 8
        %s5106 = scalar_lea.vmem %s3, %s5105
      $region44: #{deform_conv.1} parent=39 // pred_fallthru
        _
    $region40: #{deform_conv.1} parent=5 // pred_fallthru
      _
  $region6: #{deform_conv.1} parent=0 // loop_footer
    %s13 = sadd.s32 1, %s9
  $region7: #{deform_conv.1} parent=0 // loop_footer_branch
    %8 = sbr.rel target = $region3
  $region8: #{deform_conv.1} parent=0 // loop_exit
    _

</llo_original>
